<compile_context>
chip_gen: v7x
topology: tpu7x:2x2x1
jax: 0.10.0
libtpu: 0.0.40
codegen_flags: <defaults>
</compile_context>

<pallas_src>
import functools
import math

import jax
import jax.numpy as jnp
from jax.experimental import pallas as pl
from jax.experimental.pallas import tpu as pltpu

NUM_HEADS = 2  # per-channel encoder uses 2 attention heads

# Packed small-parameter row layout inside the (C, 8, P) "vec" array.
_ROW_BQKV, _ROW_BO, _ROW_LN1G, _ROW_LN1B = 0, 1, 2, 3
_ROW_B1, _ROW_B2, _ROW_LN2G, _ROW_LN2B = 4, 5, 6, 7


def _round_up(n, m):
    return ((n + m - 1) // m) * m


# ----------------------------------------------------------------------------
# Pallas kernel: one (channel, batch-block) tile per grid step.
# ----------------------------------------------------------------------------
def _vit_channel_encoder_kernel(
    x_ref, pe_ref, wqkv_ref, wo_ref, w1_ref, w2_ref, vec_ref, o_ref,
    *, matmul_dtype,
):
    Bt, _, S, D = x_ref.shape
    F = w1_ref.shape[-1]
    hd = D // NUM_HEADS
    rows = Bt * S
    scale = 1.0 / math.sqrt(hd)

    def mm(a, b):
        # bf16 MXU passes with f32 accumulation; elementwise math stays f32.
        return jnp.dot(a.astype(matmul_dtype), b.astype(matmul_dtype),
                       preferred_element_type=jnp.float32)

    def bmm(spec, a, b):
        return jnp.einsum(spec, a.astype(matmul_dtype), b.astype(matmul_dtype),
                          preferred_element_type=jnp.float32)

    # Packed per-channel vectors (biases / LN params), one tiny f32 tile.
    vecs = vec_ref[0]                                   # (8, P)
    bqkv = vecs[_ROW_BQKV:_ROW_BQKV + 1, :3 * D]
    bo = vecs[_ROW_BO:_ROW_BO + 1, :D]
    ln1g = vecs[_ROW_LN1G:_ROW_LN1G + 1, :D]
    ln1b = vecs[_ROW_LN1B:_ROW_LN1B + 1, :D]
    b1 = vecs[_ROW_B1:_ROW_B1 + 1, :F]
    b2 = vecs[_ROW_B2:_ROW_B2 + 1, :D]
    ln2g = vecs[_ROW_LN2G:_ROW_LN2G + 1, :D]
    ln2b = vecs[_ROW_LN2B:_ROW_LN2B + 1, :D]

    # Tokens + positional encoding, flattened to (rows, D).  Leading-dim
    # reshapes only (last dim untouched) -> layout preserving.
    x3 = x_ref[...].reshape(Bt, S, D).astype(jnp.float32) + pe_ref[...]
    x2d = x3.reshape(rows, D)

    # Fused QKV projection: one (rows, D) @ (D, 3D) matmul.
    qkv = mm(x2d, wqkv_ref[0]) + bqkv                   # (rows, 3D) f32

    heads = []
    for h in range(NUM_HEADS):                          # static unroll
        lo, hi = h * hd, (h + 1) * hd
        qh = qkv[:, lo:hi].reshape(Bt, S, hd)
        kh = qkv[:, D + lo:D + hi].reshape(Bt, S, hd)
        vh = qkv[:, 2 * D + lo:2 * D + hi].reshape(Bt, S, hd)

        s = bmm("bqd,bkd->bqk", qh, kh) * scale
        s = s - jnp.max(s, axis=-1, keepdims=True)      # stable softmax
        # TODO(synk): for large S on v6e/v7x the exp of the (Bt,S,S) scores is
        # EUP-bound; compute it in bf16 there (keep f32 on v5e).
        p = jnp.exp(s)
        denom = jnp.sum(p, axis=-1, keepdims=True)
        inv = pl.reciprocal(denom, approx=True)         # EUP; denom >= 1 here
        inv = inv * (2.0 - denom * inv)                 # one Newton step
        p = p * inv

        ctx = bmm("bqk,bkd->bqd", p, vh)                # (Bt, S, hd) f32
        heads.append(ctx.reshape(rows, hd))

    # Single K=D output projection (== concat(heads) @ W_o), avoiding two
    # underfilled K=hd MXU passes.
    attn2d = mm(jnp.concatenate(heads, axis=-1), wo_ref[0]) + bo

    def layernorm(y, g, b):
        mu = jnp.mean(y, axis=-1, keepdims=True)
        var = jnp.mean((y - mu) ** 2, axis=-1, keepdims=True)
        return (y - mu) * jax.lax.rsqrt(var + 1e-5) * g + b

    x1 = layernorm(x2d + attn2d, ln1g, ln1b)            # post-norm (torch default)
    h1 = jnp.maximum(mm(x1, w1_ref[0]) + b1, 0.0)       # ReLU FF
    ff = mm(h1, w2_ref[0]) + b2
    x2 = layernorm(x1 + ff, ln2g, ln2b)

    o_ref[...] = x2.reshape(Bt, 1, S, D).astype(o_ref.dtype)


# ----------------------------------------------------------------------------
# Wrapper: native NCHW blocking, grid over (channels, batch blocks).
# ----------------------------------------------------------------------------
def multichannel_vit_encoder(x_nchw, params, *, matmul_dtype=jnp.bfloat16,
                             batch_block=None, weight_buffers=1):
    B, C, H, W = x_nchw.shape
    S, D = H, W
    F = params["w1"].shape[-1]
    P = params["vec"].shape[-1]

    # Row tiling: bound VMEM-resident intermediates while keeping each matmul
    # tall enough to feed the MXU (target >= 256 rows per step when possible).
    if batch_block is None:
        batch_block = min(B, max(1, -(-256 // S)))
        while B % batch_block:
            batch_block -= 1
    if B % batch_block != 0:
        raise ValueError("batch_block must divide the batch size")
    n_row_blocks = B // batch_block
    rows = batch_block * S

    xb = lambda c, b: (b, c, 0, 0)    # (Bt, 1, S, D) activation tile
    cb = lambda c, b: (c, 0, 0)       # per-channel parameter tile (ignores b
                                      #  -> weights revisited, no re-DMA)
    shared = lambda c, b: (0, 0)      # positional encoding (shared)

    # VMEM budget estimate (weights + pipelined I/O + in-kernel temporaries),
    # clamped to v7x's 64 MiB physical VMEM.
    w_bytes = (params["wqkv"].nbytes + params["wo"].nbytes
               + params["w1"].nbytes + params["w2"].nbytes) // C
    interm = 4 * rows * (6 * D + 2 * F) + 4 * NUM_HEADS * rows * S
    io = 2 * 2 * rows * D * x_nchw.dtype.itemsize
    small = 2 * (S * D * 4 + 8 * P * 4)

    kernel = functools.partial(_vit_channel_encoder_kernel,
                               matmul_dtype=matmul_dtype)

    def call(wbufs):
        if wbufs is None:
            wspec = lambda shape: pl.BlockSpec(shape, cb)
            n_wbuf = 2
        else:
            wspec = lambda shape: pl.BlockSpec(shape, cb,
                                               pipeline_mode=pl.Buffered(wbufs))
            n_wbuf = wbufs
        vmem_limit = int(max(32 << 20,
                             min(64 << 20,
                                 n_wbuf * w_bytes + io + small
                                 + 2 * interm + (4 << 20))))
        return pl.pallas_call(
            kernel,
            out_shape=jax.ShapeDtypeStruct((B, C, S, D), x_nchw.dtype),
            grid=(C, n_row_blocks),
            in_specs=[
                pl.BlockSpec((batch_block, 1, S, D), xb),  # x (native NCHW)
                pl.BlockSpec((S, D), shared),              # positional encoding
                wspec((1, D, 3 * D)),                      # fused Wqkv (bf16)
                wspec((1, D, D)),                          # Wo (bf16)
                wspec((1, D, F)),                          # W1 (bf16)
                wspec((1, F, D)),                          # W2 (bf16)
                pl.BlockSpec((1, 8, P), cb),               # packed small params
            ],
            out_specs=pl.BlockSpec((batch_block, 1, S, D), xb),
            compiler_params=pltpu.CompilerParams(
                dimension_semantics=("parallel", "parallel"),
                vmem_limit_bytes=vmem_limit),
        )(x_nchw, params["pe"], params["wqkv"], params["wo"],
          params["w1"], params["w2"], params["vec"])

    try:
        return call(weight_buffers)
    except Exception:
        if weight_buffers is None:
            raise
        # pl.Buffered(...) not supported by this jax build / config: fall back
        # to the default double-buffered weight pipeline (still correct).
        return call(None)


# ----------------------------------------------------------------------------
# Deterministic parameter construction
# ----------------------------------------------------------------------------
def _sinusoidal_pe(S, D):
    # TODO(synk): MyVisionPositionalEncoding's exact normalization-flag handling
    # is unavailable; standard sinusoidal positional encoding is used (D even).
    pos = jnp.arange(S, dtype=jnp.float32)[:, None]
    i = jnp.arange(D // 2, dtype=jnp.float32)[None, :]
    ang = pos / jnp.power(10000.0, 2.0 * i / D)
    pe = jnp.zeros((S, D), jnp.float32)
    pe = pe.at[:, 0::2].set(jnp.sin(ang))
    pe = pe.at[:, 1::2].set(jnp.cos(ang))
    return pe


def make_params(key, C, S, D, F, *, weight_dtype=jnp.bfloat16):
    ks = jax.random.split(key, 8)
    w, b = 0.05, 0.02
    P = _round_up(max(3 * D, F), 128)
    vec = jnp.zeros((C, 8, P), jnp.float32)
    vec = vec.at[:, _ROW_BQKV, :3 * D].set(b * jax.random.normal(ks[1], (C, 3 * D)))
    vec = vec.at[:, _ROW_BO, :D].set(b * jax.random.normal(ks[3], (C, D)))
    vec = vec.at[:, _ROW_LN1G, :D].set(1.0)     # ln1 gamma (beta stays 0)
    vec = vec.at[:, _ROW_B1, :F].set(b * jax.random.normal(ks[5], (C, F)))
    vec = vec.at[:, _ROW_B2, :D].set(b * jax.random.normal(ks[7], (C, D)))
    vec = vec.at[:, _ROW_LN2G, :D].set(1.0)     # ln2 gamma (beta stays 0)
    return {
        "pe": _sinusoidal_pe(S, D),
        # Matmul weights live in bf16 in HBM: halves weight DMA + VMEM buffers.
        "wqkv": (w * jax.random.normal(ks[0], (C, D, 3 * D))).astype(weight_dtype),
        "wo": (w * jax.random.normal(ks[2], (C, D, D))).astype(weight_dtype),
        "w1": (w * jax.random.normal(ks[4], (C, D, F))).astype(weight_dtype),
        "w2": (w * jax.random.normal(ks[6], (C, F, D))).astype(weight_dtype),
        "vec": vec,
    }


# ----------------------------------------------------------------------------
# Pure-JAX reference (same math, f32) for correctness checks
# ----------------------------------------------------------------------------
def reference(x_nchw, params):
    B, C, H, W = x_nchw.shape
    D = W
    hd = D // NUM_HEADS
    F = params["w1"].shape[-1]
    vec = params["vec"]

    def ln(y, g, b):
        mu = jnp.mean(y, axis=-1, keepdims=True)
        var = jnp.mean((y - mu) ** 2, axis=-1, keepdims=True)
        return (y - mu) * jax.lax.rsqrt(var + 1e-5) * g + b

    outs = []
    for c in range(C):
        wqkv = params["wqkv"][c].astype(jnp.float32)
        wo = params["wo"][c].astype(jnp.float32)
        w1 = params["w1"][c].astype(jnp.float32)
        w2 = params["w2"][c].astype(jnp.float32)
        bqkv = vec[c, _ROW_BQKV, :3 * D]
        bo = vec[c, _ROW_BO, :D]
        ln1g, ln1b = vec[c, _ROW_LN1G, :D], vec[c, _ROW_LN1B, :D]
        b1 = vec[c, _ROW_B1, :F]
        b2 = vec[c, _ROW_B2, :D]
        ln2g, ln2b = vec[c, _ROW_LN2G, :D], vec[c, _ROW_LN2B, :D]

        x = x_nchw[:, c].astype(jnp.float32) + params["pe"][None]   # (B, S, D)
        qkv = x @ wqkv + bqkv
        q, k, v = qkv[..., :D], qkv[..., D:2 * D], qkv[..., 2 * D:]
        heads = []
        for h in range(NUM_HEADS):
            sl = slice(h * hd, (h + 1) * hd)
            s = jnp.einsum("bqd,bkd->bqk", q[..., sl], k[..., sl]) / math.sqrt(hd)
            p = jax.nn.softmax(s, axis=-1)
            heads.append(jnp.einsum("bqk,bkd->bqd", p, v[..., sl]))
        attn = jnp.concatenate(heads, axis=-1) @ wo + bo
        x1 = ln(x + attn, ln1g, ln1b)
        ffo = jnp.maximum(x1 @ w1 + b1, 0.0) @ w2 + b2
        x2 = ln(x1 + ffo, ln2g, ln2b)
        outs.append(x2[:, None])
    return jnp.concatenate(outs, axis=1).astype(x_nchw.dtype)


if __name__ == "__main__":
    B, C, H, W = 2, 4, 16, 128   # seq_len = H = 16, d_model = W = 128 (lane-dense)
    F = 256                      # feed-forward hidden dim

    key = jax.random.PRNGKey(0)
    kx, kp = jax.random.split(key)
    x = jax.random.normal(kx, (B, C, H, W), jnp.float32)
    params = make_params(kp, C, H, W, F)

    ref = reference(x, params)

    # 1) f32-matmul path (same bf16-valued weights upcast in-kernel) with an
    #    explicit row-block of 1 to exercise the (channel, row) grid: tight tol.
    out_f32 = jax.block_until_ready(
        multichannel_vit_encoder(x, params, matmul_dtype=jnp.float32,
                                 batch_block=1))
    assert out_f32.shape == (B, C, H, W), out_f32.shape
    err_f32 = float(jnp.max(jnp.abs(out_f32 - ref)))
    assert err_f32 < 2e-3, err_f32

    # 2) default path: bf16 MXU matmuls with f32 accumulation -> looser abs tol.
    out = jax.block_until_ready(multichannel_vit_encoder(x, params))
    assert out.shape == (B, C, H, W), out.shape
    err_bf16 = float(jnp.max(jnp.abs(out - ref)))
    assert err_bf16 < 1e-1, err_bf16

    print("KERNEL_OK")
</pallas_src>

<mosaic_0001>
module attributes {stable_mosaic.version = 11 : i64} {
  func.func @_vit_channel_encoder_kernel(%arg0: i32, %arg1: i32, %arg2: memref<1x1x16x128xf32, #tpu.memory_space<vmem>>, %arg3: memref<16x128xf32, #tpu.memory_space<vmem>>, %arg4: memref<1x128x384xbf16, #tpu.memory_space<vmem>>, %arg5: memref<1x128x128xbf16, #tpu.memory_space<vmem>>, %arg6: memref<1x128x256xbf16, #tpu.memory_space<vmem>>, %arg7: memref<1x256x128xbf16, #tpu.memory_space<vmem>>, %arg8: memref<1x8x384xf32, #tpu.memory_space<vmem>>, %arg9: memref<1x1x16x128xf32, #tpu.memory_space<vmem>>) attributes {dimension_semantics = [#tpu.dimension_semantics<parallel>, #tpu.dimension_semantics<parallel>], iteration_bounds = array<i64: 4, 2>, scalar_prefetch = 0 : i64, scratch_operands = 0 : i64, tpu.core_type = #tpu.core_type<tc>, window_params = [{transform_indices = @transform_0, window_bounds = array<i64: 1, 1, 16, 128>}, {pipeline_mode = #tpu.pipeline_mode<synchronous>, transform_indices = @transform_1, window_bounds = array<i64: 16, 128>}, {pipeline_mode = #tpu.pipeline_mode<synchronous>, transform_indices = @transform_2, window_bounds = array<i64: 1, 128, 384>}, {pipeline_mode = #tpu.pipeline_mode<synchronous>, transform_indices = @transform_3, window_bounds = array<i64: 1, 128, 128>}, {pipeline_mode = #tpu.pipeline_mode<synchronous>, transform_indices = @transform_4, window_bounds = array<i64: 1, 128, 256>}, {pipeline_mode = #tpu.pipeline_mode<synchronous>, transform_indices = @transform_5, window_bounds = array<i64: 1, 256, 128>}, {transform_indices = @transform_6, window_bounds = array<i64: 1, 8, 384>}, {transform_indices = @transform_7, window_bounds = array<i64: 1, 1, 16, 128>}]} {
    %c0 = arith.constant 0 : index
    %c0_0 = arith.constant 0 : index
    %c0_1 = arith.constant 0 : index
    %0 = vector.load %arg8[%c0, %c0_0, %c0_1] : memref<1x8x384xf32, #tpu.memory_space<vmem>>, vector<1x8x384xf32>
    %1 = vector.shape_cast %0 : vector<1x8x384xf32> to vector<8x384xf32>
    %2 = vector.extract_strided_slice %1 {offsets = [0, 0], sizes = [1, 384], strides = [1, 1]} : vector<8x384xf32> to vector<1x384xf32>
    %3 = vector.extract_strided_slice %1 {offsets = [1, 0], sizes = [1, 128], strides = [1, 1]} : vector<8x384xf32> to vector<1x128xf32>
    %4 = vector.extract_strided_slice %1 {offsets = [2, 0], sizes = [1, 128], strides = [1, 1]} : vector<8x384xf32> to vector<1x128xf32>
    %5 = vector.extract_strided_slice %1 {offsets = [3, 0], sizes = [1, 128], strides = [1, 1]} : vector<8x384xf32> to vector<1x128xf32>
    %6 = vector.extract_strided_slice %1 {offsets = [4, 0], sizes = [1, 256], strides = [1, 1]} : vector<8x384xf32> to vector<1x256xf32>
    %7 = vector.extract_strided_slice %1 {offsets = [5, 0], sizes = [1, 128], strides = [1, 1]} : vector<8x384xf32> to vector<1x128xf32>
    %8 = vector.extract_strided_slice %1 {offsets = [6, 0], sizes = [1, 128], strides = [1, 1]} : vector<8x384xf32> to vector<1x128xf32>
    %9 = vector.extract_strided_slice %1 {offsets = [7, 0], sizes = [1, 128], strides = [1, 1]} : vector<8x384xf32> to vector<1x128xf32>
    %c0_2 = arith.constant 0 : index
    %c0_3 = arith.constant 0 : index
    %c0_4 = arith.constant 0 : index
    %c0_5 = arith.constant 0 : index
    %10 = vector.load %arg2[%c0_2, %c0_3, %c0_4, %c0_5] : memref<1x1x16x128xf32, #tpu.memory_space<vmem>>, vector<1x1x16x128xf32>
    %11 = vector.shape_cast %10 : vector<1x1x16x128xf32> to vector<1x16x128xf32>
    %c0_6 = arith.constant 0 : index
    %c0_7 = arith.constant 0 : index
    %12 = vector.load %arg3[%c0_6, %c0_7] : memref<16x128xf32, #tpu.memory_space<vmem>>, vector<16x128xf32>
    %13 = vector.shape_cast %12 : vector<16x128xf32> to vector<1x16x128xf32>
    %14 = arith.addf %11, %13 : vector<1x16x128xf32>
    %15 = vector.shape_cast %14 : vector<1x16x128xf32> to vector<16x128xf32>
    %c0_8 = arith.constant 0 : index
    %c0_9 = arith.constant 0 : index
    %c0_10 = arith.constant 0 : index
    %16 = vector.load %arg4[%c0_8, %c0_9, %c0_10] : memref<1x128x384xbf16, #tpu.memory_space<vmem>>, vector<1x128x384xbf16>
    %17 = vector.shape_cast %16 : vector<1x128x384xbf16> to vector<128x384xbf16>
    %18 = arith.extf %17 : vector<128x384xbf16> to vector<128x384xf32>
    %cst = arith.constant dense<0.000000e+00> : vector<16x384xf32>
    %19 = tpu.matmul %15, %18, %cst {dimension_numbers = #tpu.dot_dimension_numbers<[1], [0], [0], [1], [0, 0, 1, 1], [], []>} : vector<16x128xf32>, vector<128x384xf32>, vector<16x384xf32> -> vector<16x384xf32>
    %20 = vector.broadcast %2 : vector<1x384xf32> to vector<16x384xf32>
    %21 = arith.addf %19, %20 : vector<16x384xf32>
    %22 = vector.extract_strided_slice %21 {offsets = [0, 0], sizes = [16, 64], strides = [1, 1]} : vector<16x384xf32> to vector<16x64xf32>
    %23 = vector.shape_cast %22 : vector<16x64xf32> to vector<1x16x64xf32>
    %24 = vector.extract_strided_slice %21 {offsets = [0, 128], sizes = [16, 64], strides = [1, 1]} : vector<16x384xf32> to vector<16x64xf32>
    %25 = vector.shape_cast %24 : vector<16x64xf32> to vector<1x16x64xf32>
    %26 = vector.extract_strided_slice %21 {offsets = [0, 256], sizes = [16, 64], strides = [1, 1]} : vector<16x384xf32> to vector<16x64xf32>
    %27 = vector.shape_cast %26 : vector<16x64xf32> to vector<1x16x64xf32>
    "tpu.trace_start"() <{level = 10 : i32, message = "bqd,bkd->bqk"}> : () -> ()
    %cst_11 = arith.constant dense<0.000000e+00> : vector<1x16x16xf32>
    %28 = tpu.matmul %23, %25, %cst_11 {dimension_numbers = #tpu.dot_dimension_numbers<[2], [2], [1], [1], [0, 0, 0, 1, 1, 1], [0], [0]>} : vector<1x16x64xf32>, vector<1x16x64xf32>, vector<1x16x16xf32> -> vector<1x16x16xf32>
    "tpu.trace_stop"() : () -> ()
    %cst_12 = arith.constant 1.250000e-01 : f32
    %29 = vector.broadcast %cst_12 : f32 to vector<1x16x16xf32>
    %30 = arith.mulf %28, %29 : vector<1x16x16xf32>
    %cst_13 = arith.constant dense<0xFF800000> : vector<1x16xf32>
    %31 = vector.multi_reduction <maximumf>, %30, %cst_13 [2] : vector<1x16x16xf32> to vector<1x16xf32>
    %32 = vector.shape_cast %31 : vector<1x16xf32> to vector<1x16x1xf32>
    %33 = vector.broadcast %32 : vector<1x16x1xf32> to vector<1x16x16xf32>
    %34 = arith.subf %30, %33 : vector<1x16x16xf32>
    %35 = math.exp %34 : vector<1x16x16xf32>
    %cst_14 = arith.constant dense<0.000000e+00> : vector<1x16xf32>
    %36 = vector.multi_reduction <add>, %35, %cst_14 [2] : vector<1x16x16xf32> to vector<1x16xf32>
    %37 = vector.shape_cast %36 : vector<1x16xf32> to vector<1x16x1xf32>
    %38 = tpu.reciprocal %37 {approx = true} : vector<1x16x1xf32> -> vector<1x16x1xf32>
    %39 = arith.mulf %37, %38 : vector<1x16x1xf32>
    %cst_15 = arith.constant 2.000000e+00 : f32
    %40 = vector.broadcast %cst_15 : f32 to vector<1x16x1xf32>
    %41 = arith.subf %40, %39 : vector<1x16x1xf32>
    %42 = arith.mulf %38, %41 : vector<1x16x1xf32>
    %43 = vector.broadcast %42 : vector<1x16x1xf32> to vector<1x16x16xf32>
    %44 = arith.mulf %35, %43 : vector<1x16x16xf32>
    "tpu.trace_start"() <{level = 10 : i32, message = "bqk,bkd->bqd"}> : () -> ()
    %cst_16 = arith.constant dense<0.000000e+00> : vector<1x16x64xf32>
    %45 = tpu.matmul %44, %27, %cst_16 {dimension_numbers = #tpu.dot_dimension_numbers<[2], [1], [1], [2], [0, 0, 0, 1, 1, 2], [0], [0]>} : vector<1x16x16xf32>, vector<1x16x64xf32>, vector<1x16x64xf32> -> vector<1x16x64xf32>
    "tpu.trace_stop"() : () -> ()
    %46 = vector.shape_cast %45 : vector<1x16x64xf32> to vector<16x64xf32>
    %47 = vector.extract_strided_slice %21 {offsets = [0, 64], sizes = [16, 64], strides = [1, 1]} : vector<16x384xf32> to vector<16x64xf32>
    %48 = vector.shape_cast %47 : vector<16x64xf32> to vector<1x16x64xf32>
    %49 = vector.extract_strided_slice %21 {offsets = [0, 192], sizes = [16, 64], strides = [1, 1]} : vector<16x384xf32> to vector<16x64xf32>
    %50 = vector.shape_cast %49 : vector<16x64xf32> to vector<1x16x64xf32>
    %51 = vector.extract_strided_slice %21 {offsets = [0, 320], sizes = [16, 64], strides = [1, 1]} : vector<16x384xf32> to vector<16x64xf32>
    %52 = vector.shape_cast %51 : vector<16x64xf32> to vector<1x16x64xf32>
    "tpu.trace_start"() <{level = 10 : i32, message = "bqd,bkd->bqk"}> : () -> ()
    %cst_17 = arith.constant dense<0.000000e+00> : vector<1x16x16xf32>
    %53 = tpu.matmul %48, %50, %cst_17 {dimension_numbers = #tpu.dot_dimension_numbers<[2], [2], [1], [1], [0, 0, 0, 1, 1, 1], [0], [0]>} : vector<1x16x64xf32>, vector<1x16x64xf32>, vector<1x16x16xf32> -> vector<1x16x16xf32>
    "tpu.trace_stop"() : () -> ()
    %cst_18 = arith.constant 1.250000e-01 : f32
    %54 = vector.broadcast %cst_18 : f32 to vector<1x16x16xf32>
    %55 = arith.mulf %53, %54 : vector<1x16x16xf32>
    %cst_19 = arith.constant dense<0xFF800000> : vector<1x16xf32>
    %56 = vector.multi_reduction <maximumf>, %55, %cst_19 [2] : vector<1x16x16xf32> to vector<1x16xf32>
    %57 = vector.shape_cast %56 : vector<1x16xf32> to vector<1x16x1xf32>
    %58 = vector.broadcast %57 : vector<1x16x1xf32> to vector<1x16x16xf32>
    %59 = arith.subf %55, %58 : vector<1x16x16xf32>
    %60 = math.exp %59 : vector<1x16x16xf32>
    %cst_20 = arith.constant dense<0.000000e+00> : vector<1x16xf32>
    %61 = vector.multi_reduction <add>, %60, %cst_20 [2] : vector<1x16x16xf32> to vector<1x16xf32>
    %62 = vector.shape_cast %61 : vector<1x16xf32> to vector<1x16x1xf32>
    %63 = tpu.reciprocal %62 {approx = true} : vector<1x16x1xf32> -> vector<1x16x1xf32>
    %64 = arith.mulf %62, %63 : vector<1x16x1xf32>
    %cst_21 = arith.constant 2.000000e+00 : f32
    %65 = vector.broadcast %cst_21 : f32 to vector<1x16x1xf32>
    %66 = arith.subf %65, %64 : vector<1x16x1xf32>
    %67 = arith.mulf %63, %66 : vector<1x16x1xf32>
    %68 = vector.broadcast %67 : vector<1x16x1xf32> to vector<1x16x16xf32>
    %69 = arith.mulf %60, %68 : vector<1x16x16xf32>
    "tpu.trace_start"() <{level = 10 : i32, message = "bqk,bkd->bqd"}> : () -> ()
    %cst_22 = arith.constant dense<0.000000e+00> : vector<1x16x64xf32>
    %70 = tpu.matmul %69, %52, %cst_22 {dimension_numbers = #tpu.dot_dimension_numbers<[2], [1], [1], [2], [0, 0, 0, 1, 1, 2], [0], [0]>} : vector<1x16x16xf32>, vector<1x16x64xf32>, vector<1x16x64xf32> -> vector<1x16x64xf32>
    "tpu.trace_stop"() : () -> ()
    %71 = vector.shape_cast %70 : vector<1x16x64xf32> to vector<16x64xf32>
    %72 = tpu.concatenate %46, %71 in 1 : vector<16x64xf32>, vector<16x64xf32> -> vector<16x128xf32>
    %c0_23 = arith.constant 0 : index
    %c0_24 = arith.constant 0 : index
    %c0_25 = arith.constant 0 : index
    %73 = vector.load %arg5[%c0_23, %c0_24, %c0_25] : memref<1x128x128xbf16, #tpu.memory_space<vmem>>, vector<1x128x128xbf16>
    %74 = vector.shape_cast %73 : vector<1x128x128xbf16> to vector<128x128xbf16>
    %75 = arith.extf %74 : vector<128x128xbf16> to vector<128x128xf32>
    %cst_26 = arith.constant dense<0.000000e+00> : vector<16x128xf32>
    %76 = tpu.matmul %72, %75, %cst_26 {dimension_numbers = #tpu.dot_dimension_numbers<[1], [0], [0], [1], [0, 0, 1, 1], [], []>} : vector<16x128xf32>, vector<128x128xf32>, vector<16x128xf32> -> vector<16x128xf32>
    %77 = vector.broadcast %3 : vector<1x128xf32> to vector<16x128xf32>
    %78 = arith.addf %76, %77 : vector<16x128xf32>
    %79 = arith.addf %15, %78 : vector<16x128xf32>
    %cst_27 = arith.constant dense<0.000000e+00> : vector<16xf32>
    %80 = vector.multi_reduction <add>, %79, %cst_27 [1] : vector<16x128xf32> to vector<16xf32>
    %81 = vector.shape_cast %80 : vector<16xf32> to vector<16x1xf32>
    %cst_28 = arith.constant 1.280000e+02 : f32
    %82 = vector.broadcast %cst_28 : f32 to vector<16x1xf32>
    %83 = arith.divf %81, %82 : vector<16x1xf32>
    %84 = vector.broadcast %83 : vector<16x1xf32> to vector<16x128xf32>
    %85 = arith.subf %79, %84 : vector<16x128xf32>
    %86 = arith.mulf %85, %85 : vector<16x128xf32>
    %cst_29 = arith.constant dense<0.000000e+00> : vector<16xf32>
    %87 = vector.multi_reduction <add>, %86, %cst_29 [1] : vector<16x128xf32> to vector<16xf32>
    %88 = vector.shape_cast %87 : vector<16xf32> to vector<16x1xf32>
    %cst_30 = arith.constant 1.280000e+02 : f32
    %89 = vector.broadcast %cst_30 : f32 to vector<16x1xf32>
    %90 = arith.divf %88, %89 : vector<16x1xf32>
    %91 = vector.broadcast %83 : vector<16x1xf32> to vector<16x128xf32>
    %92 = arith.subf %79, %91 : vector<16x128xf32>
    %cst_31 = arith.constant 9.99999974E-6 : f32
    %93 = vector.broadcast %cst_31 : f32 to vector<16x1xf32>
    %94 = arith.addf %90, %93 : vector<16x1xf32>
    %95 = math.rsqrt %94 : vector<16x1xf32>
    %96 = vector.broadcast %95 : vector<16x1xf32> to vector<16x128xf32>
    %97 = arith.mulf %92, %96 : vector<16x128xf32>
    %98 = vector.broadcast %4 : vector<1x128xf32> to vector<16x128xf32>
    %99 = arith.mulf %97, %98 : vector<16x128xf32>
    %100 = vector.broadcast %5 : vector<1x128xf32> to vector<16x128xf32>
    %101 = arith.addf %99, %100 : vector<16x128xf32>
    %c0_32 = arith.constant 0 : index
    %c0_33 = arith.constant 0 : index
    %c0_34 = arith.constant 0 : index
    %102 = vector.load %arg6[%c0_32, %c0_33, %c0_34] : memref<1x128x256xbf16, #tpu.memory_space<vmem>>, vector<1x128x256xbf16>
    %103 = vector.shape_cast %102 : vector<1x128x256xbf16> to vector<128x256xbf16>
    %104 = arith.extf %103 : vector<128x256xbf16> to vector<128x256xf32>
    %cst_35 = arith.constant dense<0.000000e+00> : vector<16x256xf32>
    %105 = tpu.matmul %101, %104, %cst_35 {dimension_numbers = #tpu.dot_dimension_numbers<[1], [0], [0], [1], [0, 0, 1, 1], [], []>} : vector<16x128xf32>, vector<128x256xf32>, vector<16x256xf32> -> vector<16x256xf32>
    %106 = vector.broadcast %6 : vector<1x256xf32> to vector<16x256xf32>
    %107 = arith.addf %105, %106 : vector<16x256xf32>
    %cst_36 = arith.constant 0.000000e+00 : f32
    %108 = vector.broadcast %cst_36 : f32 to vector<16x256xf32>
    %109 = arith.maximumf %107, %108 : vector<16x256xf32>
    %c0_37 = arith.constant 0 : index
    %c0_38 = arith.constant 0 : index
    %c0_39 = arith.constant 0 : index
    %110 = vector.load %arg7[%c0_37, %c0_38, %c0_39] : memref<1x256x128xbf16, #tpu.memory_space<vmem>>, vector<1x256x128xbf16>
    %111 = vector.shape_cast %110 : vector<1x256x128xbf16> to vector<256x128xbf16>
    %112 = arith.extf %111 : vector<256x128xbf16> to vector<256x128xf32>
    %cst_40 = arith.constant dense<0.000000e+00> : vector<16x128xf32>
    %113 = tpu.matmul %109, %112, %cst_40 {dimension_numbers = #tpu.dot_dimension_numbers<[1], [0], [0], [1], [0, 0, 1, 1], [], []>} : vector<16x256xf32>, vector<256x128xf32>, vector<16x128xf32> -> vector<16x128xf32>
    %114 = vector.broadcast %7 : vector<1x128xf32> to vector<16x128xf32>
    %115 = arith.addf %113, %114 : vector<16x128xf32>
    %116 = arith.addf %101, %115 : vector<16x128xf32>
    %cst_41 = arith.constant dense<0.000000e+00> : vector<16xf32>
    %117 = vector.multi_reduction <add>, %116, %cst_41 [1] : vector<16x128xf32> to vector<16xf32>
    %118 = vector.shape_cast %117 : vector<16xf32> to vector<16x1xf32>
    %cst_42 = arith.constant 1.280000e+02 : f32
    %119 = vector.broadcast %cst_42 : f32 to vector<16x1xf32>
    %120 = arith.divf %118, %119 : vector<16x1xf32>
    %121 = vector.broadcast %120 : vector<16x1xf32> to vector<16x128xf32>
    %122 = arith.subf %116, %121 : vector<16x128xf32>
    %123 = arith.mulf %122, %122 : vector<16x128xf32>
    %cst_43 = arith.constant dense<0.000000e+00> : vector<16xf32>
    %124 = vector.multi_reduction <add>, %123, %cst_43 [1] : vector<16x128xf32> to vector<16xf32>
    %125 = vector.shape_cast %124 : vector<16xf32> to vector<16x1xf32>
    %cst_44 = arith.constant 1.280000e+02 : f32
    %126 = vector.broadcast %cst_44 : f32 to vector<16x1xf32>
    %127 = arith.divf %125, %126 : vector<16x1xf32>
    %128 = vector.broadcast %120 : vector<16x1xf32> to vector<16x128xf32>
    %129 = arith.subf %116, %128 : vector<16x128xf32>
    %cst_45 = arith.constant 9.99999974E-6 : f32
    %130 = vector.broadcast %cst_45 : f32 to vector<16x1xf32>
    %131 = arith.addf %127, %130 : vector<16x1xf32>
    %132 = math.rsqrt %131 : vector<16x1xf32>
    %133 = vector.broadcast %132 : vector<16x1xf32> to vector<16x128xf32>
    %134 = arith.mulf %129, %133 : vector<16x128xf32>
    %135 = vector.broadcast %8 : vector<1x128xf32> to vector<16x128xf32>
    %136 = arith.mulf %134, %135 : vector<16x128xf32>
    %137 = vector.broadcast %9 : vector<1x128xf32> to vector<16x128xf32>
    %138 = arith.addf %136, %137 : vector<16x128xf32>
    %139 = vector.shape_cast %138 : vector<16x128xf32> to vector<1x1x16x128xf32>
    %c0_46 = arith.constant 0 : index
    %c0_47 = arith.constant 0 : index
    %c0_48 = arith.constant 0 : index
    %c0_49 = arith.constant 0 : index
    %140 = vector.load %arg9[%c0_46, %c0_47, %c0_48, %c0_49] : memref<1x1x16x128xf32, #tpu.memory_space<vmem>>, vector<1x1x16x128xf32>
    tpu.vector_store %arg9[%c0_46, %c0_47, %c0_48, %c0_49], %139 {strides = array<i32>} : memref<1x1x16x128xf32, #tpu.memory_space<vmem>>, vector<1x1x16x128xf32>,
    return
  }
  func.func @transform_0(%arg0: i32, %arg1: i32) -> (i32, i32, i32, i32) {
    %c0_i32 = arith.constant 0 : i32
    %c0_i32_0 = arith.constant 0 : i32
    %c0_i32_1 = arith.constant 0 : i32
    return %arg1, %arg0, %c0_i32, %c0_i32_0 : i32, i32, i32, i32
  }
  func.func @transform_1(%arg0: i32, %arg1: i32) -> (i32, i32) {
    %c0_i32 = arith.constant 0 : i32
    %c0_i32_0 = arith.constant 0 : i32
    %c0_i32_1 = arith.constant 0 : i32
    return %c0_i32, %c0_i32_0 : i32, i32
  }
  func.func @transform_2(%arg0: i32, %arg1: i32) -> (i32, i32, i32) {
    %c0_i32 = arith.constant 0 : i32
    %c0_i32_0 = arith.constant 0 : i32
    %c0_i32_1 = arith.constant 0 : i32
    return %arg0, %c0_i32, %c0_i32_0 : i32, i32, i32
  }
  func.func @transform_3(%arg0: i32, %arg1: i32) -> (i32, i32, i32) {
    %c0_i32 = arith.constant 0 : i32
    %c0_i32_0 = arith.constant 0 : i32
    %c0_i32_1 = arith.constant 0 : i32
    return %arg0, %c0_i32, %c0_i32_0 : i32, i32, i32
  }
  func.func @transform_4(%arg0: i32, %arg1: i32) -> (i32, i32, i32) {
    %c0_i32 = arith.constant 0 : i32
    %c0_i32_0 = arith.constant 0 : i32
    %c0_i32_1 = arith.constant 0 : i32
    return %arg0, %c0_i32, %c0_i32_0 : i32, i32, i32
  }
  func.func @transform_5(%arg0: i32, %arg1: i32) -> (i32, i32, i32) {
    %c0_i32 = arith.constant 0 : i32
    %c0_i32_0 = arith.constant 0 : i32
    %c0_i32_1 = arith.constant 0 : i32
    return %arg0, %c0_i32, %c0_i32_0 : i32, i32, i32
  }
  func.func @transform_6(%arg0: i32, %arg1: i32) -> (i32, i32, i32) {
    %c0_i32 = arith.constant 0 : i32
    %c0_i32_0 = arith.constant 0 : i32
    %c0_i32_1 = arith.constant 0 : i32
    return %arg0, %c0_i32, %c0_i32_0 : i32, i32, i32
  }
  func.func @transform_7(%arg0: i32, %arg1: i32) -> (i32, i32, i32, i32) {
    %c0_i32 = arith.constant 0 : i32
    %c0_i32_0 = arith.constant 0 : i32
    %c0_i32_1 = arith.constant 0 : i32
    return %arg1, %arg0, %c0_i32, %c0_i32_0 : i32, i32, i32, i32
  }
}

module attributes {stable_mosaic.version = 11 : i64} {
  func.func @_vit_channel_encoder_kernel(%arg0: i32, %arg1: i32, %arg2: memref<1x1x16x128xf32, #tpu.memory_space<vmem>>, %arg3: memref<16x128xf32, #tpu.memory_space<vmem>>, %arg4: memref<1x128x384xbf16, #tpu.memory_space<vmem>>, %arg5: memref<1x128x128xbf16, #tpu.memory_space<vmem>>, %arg6: memref<1x128x256xbf16, #tpu.memory_space<vmem>>, %arg7: memref<1x256x128xbf16, #tpu.memory_space<vmem>>, %arg8: memref<1x8x384xf32, #tpu.memory_space<vmem>>, %arg9: memref<1x1x16x128xf32, #tpu.memory_space<vmem>>) attributes {dimension_semantics = [#tpu.dimension_semantics<parallel>, #tpu.dimension_semantics<parallel>], iteration_bounds = array<i64: 4, 2>, scalar_prefetch = 0 : i64, scratch_operands = 0 : i64, tpu.core_type = #tpu.core_type<tc>, window_params = [{transform_indices = @transform_0, window_bounds = array<i64: 1, 1, 16, 128>}, {pipeline_mode = #tpu.pipeline_mode<synchronous>, transform_indices = @transform_1, window_bounds = array<i64: 16, 128>}, {transform_indices = @transform_2, window_bounds = array<i64: 1, 128, 384>}, {transform_indices = @transform_3, window_bounds = array<i64: 1, 128, 128>}, {transform_indices = @transform_4, window_bounds = array<i64: 1, 128, 256>}, {transform_indices = @transform_5, window_bounds = array<i64: 1, 256, 128>}, {transform_indices = @transform_6, window_bounds = array<i64: 1, 8, 384>}, {transform_indices = @transform_7, window_bounds = array<i64: 1, 1, 16, 128>}]} {
    %c0 = arith.constant 0 : index
    %c0_0 = arith.constant 0 : index
    %c0_1 = arith.constant 0 : index
    %0 = vector.load %arg8[%c0, %c0_0, %c0_1] : memref<1x8x384xf32, #tpu.memory_space<vmem>>, vector<1x8x384xf32>
    %1 = vector.shape_cast %0 : vector<1x8x384xf32> to vector<8x384xf32>
    %2 = vector.extract_strided_slice %1 {offsets = [0, 0], sizes = [1, 384], strides = [1, 1]} : vector<8x384xf32> to vector<1x384xf32>
    %3 = vector.extract_strided_slice %1 {offsets = [1, 0], sizes = [1, 128], strides = [1, 1]} : vector<8x384xf32> to vector<1x128xf32>
    %4 = vector.extract_strided_slice %1 {offsets = [2, 0], sizes = [1, 128], strides = [1, 1]} : vector<8x384xf32> to vector<1x128xf32>
    %5 = vector.extract_strided_slice %1 {offsets = [3, 0], sizes = [1, 128], strides = [1, 1]} : vector<8x384xf32> to vector<1x128xf32>
    %6 = vector.extract_strided_slice %1 {offsets = [4, 0], sizes = [1, 256], strides = [1, 1]} : vector<8x384xf32> to vector<1x256xf32>
    %7 = vector.extract_strided_slice %1 {offsets = [5, 0], sizes = [1, 128], strides = [1, 1]} : vector<8x384xf32> to vector<1x128xf32>
    %8 = vector.extract_strided_slice %1 {offsets = [6, 0], sizes = [1, 128], strides = [1, 1]} : vector<8x384xf32> to vector<1x128xf32>
    %9 = vector.extract_strided_slice %1 {offsets = [7, 0], sizes = [1, 128], strides = [1, 1]} : vector<8x384xf32> to vector<1x128xf32>
    %c0_2 = arith.constant 0 : index
    %c0_3 = arith.constant 0 : index
    %c0_4 = arith.constant 0 : index
    %c0_5 = arith.constant 0 : index
    %10 = vector.load %arg2[%c0_2, %c0_3, %c0_4, %c0_5] : memref<1x1x16x128xf32, #tpu.memory_space<vmem>>, vector<1x1x16x128xf32>
    %11 = vector.shape_cast %10 : vector<1x1x16x128xf32> to vector<1x16x128xf32>
    %c0_6 = arith.constant 0 : index
    %c0_7 = arith.constant 0 : index
    %12 = vector.load %arg3[%c0_6, %c0_7] : memref<16x128xf32, #tpu.memory_space<vmem>>, vector<16x128xf32>
    %13 = vector.shape_cast %12 : vector<16x128xf32> to vector<1x16x128xf32>
    %14 = arith.addf %11, %13 : vector<1x16x128xf32>
    %15 = vector.shape_cast %14 : vector<1x16x128xf32> to vector<16x128xf32>
    %c0_8 = arith.constant 0 : index
    %c0_9 = arith.constant 0 : index
    %c0_10 = arith.constant 0 : index
    %16 = vector.load %arg4[%c0_8, %c0_9, %c0_10] : memref<1x128x384xbf16, #tpu.memory_space<vmem>>, vector<1x128x384xbf16>
    %17 = vector.shape_cast %16 : vector<1x128x384xbf16> to vector<128x384xbf16>
    %18 = arith.extf %17 : vector<128x384xbf16> to vector<128x384xf32>
    %cst = arith.constant dense<0.000000e+00> : vector<16x384xf32>
    %19 = tpu.matmul %15, %18, %cst {dimension_numbers = #tpu.dot_dimension_numbers<[1], [0], [0], [1], [0, 0, 1, 1], [], []>} : vector<16x128xf32>, vector<128x384xf32>, vector<16x384xf32> -> vector<16x384xf32>
    %20 = vector.broadcast %2 : vector<1x384xf32> to vector<16x384xf32>
    %21 = arith.addf %19, %20 : vector<16x384xf32>
    %22 = vector.extract_strided_slice %21 {offsets = [0, 0], sizes = [16, 64], strides = [1, 1]} : vector<16x384xf32> to vector<16x64xf32>
    %23 = vector.shape_cast %22 : vector<16x64xf32> to vector<1x16x64xf32>
    %24 = vector.extract_strided_slice %21 {offsets = [0, 128], sizes = [16, 64], strides = [1, 1]} : vector<16x384xf32> to vector<16x64xf32>
    %25 = vector.shape_cast %24 : vector<16x64xf32> to vector<1x16x64xf32>
    %26 = vector.extract_strided_slice %21 {offsets = [0, 256], sizes = [16, 64], strides = [1, 1]} : vector<16x384xf32> to vector<16x64xf32>
    %27 = vector.shape_cast %26 : vector<16x64xf32> to vector<1x16x64xf32>
    "tpu.trace_start"() <{level = 10 : i32, message = "bqd,bkd->bqk"}> : () -> ()
    %cst_11 = arith.constant dense<0.000000e+00> : vector<1x16x16xf32>
    %28 = tpu.matmul %23, %25, %cst_11 {dimension_numbers = #tpu.dot_dimension_numbers<[2], [2], [1], [1], [0, 0, 0, 1, 1, 1], [0], [0]>} : vector<1x16x64xf32>, vector<1x16x64xf32>, vector<1x16x16xf32> -> vector<1x16x16xf32>
    "tpu.trace_stop"() : () -> ()
    %cst_12 = arith.constant 1.250000e-01 : f32
    %29 = vector.broadcast %cst_12 : f32 to vector<1x16x16xf32>
    %30 = arith.mulf %28, %29 : vector<1x16x16xf32>
    %cst_13 = arith.constant dense<0xFF800000> : vector<1x16xf32>
    %31 = vector.multi_reduction <maximumf>, %30, %cst_13 [2] : vector<1x16x16xf32> to vector<1x16xf32>
    %32 = vector.shape_cast %31 : vector<1x16xf32> to vector<1x16x1xf32>
    %33 = vector.broadcast %32 : vector<1x16x1xf32> to vector<1x16x16xf32>
    %34 = arith.subf %30, %33 : vector<1x16x16xf32>
    %35 = math.exp %34 : vector<1x16x16xf32>
    %cst_14 = arith.constant dense<0.000000e+00> : vector<1x16xf32>
    %36 = vector.multi_reduction <add>, %35, %cst_14 [2] : vector<1x16x16xf32> to vector<1x16xf32>
    %37 = vector.shape_cast %36 : vector<1x16xf32> to vector<1x16x1xf32>
    %38 = tpu.reciprocal %37 {approx = true} : vector<1x16x1xf32> -> vector<1x16x1xf32>
    %39 = arith.mulf %37, %38 : vector<1x16x1xf32>
    %cst_15 = arith.constant 2.000000e+00 : f32
    %40 = vector.broadcast %cst_15 : f32 to vector<1x16x1xf32>
    %41 = arith.subf %40, %39 : vector<1x16x1xf32>
    %42 = arith.mulf %38, %41 : vector<1x16x1xf32>
    %43 = vector.broadcast %42 : vector<1x16x1xf32> to vector<1x16x16xf32>
    %44 = arith.mulf %35, %43 : vector<1x16x16xf32>
    "tpu.trace_start"() <{level = 10 : i32, message = "bqk,bkd->bqd"}> : () -> ()
    %cst_16 = arith.constant dense<0.000000e+00> : vector<1x16x64xf32>
    %45 = tpu.matmul %44, %27, %cst_16 {dimension_numbers = #tpu.dot_dimension_numbers<[2], [1], [1], [2], [0, 0, 0, 1, 1, 2], [0], [0]>} : vector<1x16x16xf32>, vector<1x16x64xf32>, vector<1x16x64xf32> -> vector<1x16x64xf32>
    "tpu.trace_stop"() : () -> ()
    %46 = vector.shape_cast %45 : vector<1x16x64xf32> to vector<16x64xf32>
    %47 = vector.extract_strided_slice %21 {offsets = [0, 64], sizes = [16, 64], strides = [1, 1]} : vector<16x384xf32> to vector<16x64xf32>
    %48 = vector.shape_cast %47 : vector<16x64xf32> to vector<1x16x64xf32>
    %49 = vector.extract_strided_slice %21 {offsets = [0, 192], sizes = [16, 64], strides = [1, 1]} : vector<16x384xf32> to vector<16x64xf32>
    %50 = vector.shape_cast %49 : vector<16x64xf32> to vector<1x16x64xf32>
    %51 = vector.extract_strided_slice %21 {offsets = [0, 320], sizes = [16, 64], strides = [1, 1]} : vector<16x384xf32> to vector<16x64xf32>
    %52 = vector.shape_cast %51 : vector<16x64xf32> to vector<1x16x64xf32>
    "tpu.trace_start"() <{level = 10 : i32, message = "bqd,bkd->bqk"}> : () -> ()
    %cst_17 = arith.constant dense<0.000000e+00> : vector<1x16x16xf32>
    %53 = tpu.matmul %48, %50, %cst_17 {dimension_numbers = #tpu.dot_dimension_numbers<[2], [2], [1], [1], [0, 0, 0, 1, 1, 1], [0], [0]>} : vector<1x16x64xf32>, vector<1x16x64xf32>, vector<1x16x16xf32> -> vector<1x16x16xf32>
    "tpu.trace_stop"() : () -> ()
    %cst_18 = arith.constant 1.250000e-01 : f32
    %54 = vector.broadcast %cst_18 : f32 to vector<1x16x16xf32>
    %55 = arith.mulf %53, %54 : vector<1x16x16xf32>
    %cst_19 = arith.constant dense<0xFF800000> : vector<1x16xf32>
    %56 = vector.multi_reduction <maximumf>, %55, %cst_19 [2] : vector<1x16x16xf32> to vector<1x16xf32>
    %57 = vector.shape_cast %56 : vector<1x16xf32> to vector<1x16x1xf32>
    %58 = vector.broadcast %57 : vector<1x16x1xf32> to vector<1x16x16xf32>
    %59 = arith.subf %55, %58 : vector<1x16x16xf32>
    %60 = math.exp %59 : vector<1x16x16xf32>
    %cst_20 = arith.constant dense<0.000000e+00> : vector<1x16xf32>
    %61 = vector.multi_reduction <add>, %60, %cst_20 [2] : vector<1x16x16xf32> to vector<1x16xf32>
    %62 = vector.shape_cast %61 : vector<1x16xf32> to vector<1x16x1xf32>
    %63 = tpu.reciprocal %62 {approx = true} : vector<1x16x1xf32> -> vector<1x16x1xf32>
    %64 = arith.mulf %62, %63 : vector<1x16x1xf32>
    %cst_21 = arith.constant 2.000000e+00 : f32
    %65 = vector.broadcast %cst_21 : f32 to vector<1x16x1xf32>
    %66 = arith.subf %65, %64 : vector<1x16x1xf32>
    %67 = arith.mulf %63, %66 : vector<1x16x1xf32>
    %68 = vector.broadcast %67 : vector<1x16x1xf32> to vector<1x16x16xf32>
    %69 = arith.mulf %60, %68 : vector<1x16x16xf32>
    "tpu.trace_start"() <{level = 10 : i32, message = "bqk,bkd->bqd"}> : () -> ()
    %cst_22 = arith.constant dense<0.000000e+00> : vector<1x16x64xf32>
    %70 = tpu.matmul %69, %52, %cst_22 {dimension_numbers = #tpu.dot_dimension_numbers<[2], [1], [1], [2], [0, 0, 0, 1, 1, 2], [0], [0]>} : vector<1x16x16xf32>, vector<1x16x64xf32>, vector<1x16x64xf32> -> vector<1x16x64xf32>
    "tpu.trace_stop"() : () -> ()
    %71 = vector.shape_cast %70 : vector<1x16x64xf32> to vector<16x64xf32>
    %72 = tpu.concatenate %46, %71 in 1 : vector<16x64xf32>, vector<16x64xf32> -> vector<16x128xf32>
    %c0_23 = arith.constant 0 : index
    %c0_24 = arith.constant 0 : index
    %c0_25 = arith.constant 0 : index
    %73 = vector.load %arg5[%c0_23, %c0_24, %c0_25] : memref<1x128x128xbf16, #tpu.memory_space<vmem>>, vector<1x128x128xbf16>
    %74 = vector.shape_cast %73 : vector<1x128x128xbf16> to vector<128x128xbf16>
    %75 = arith.extf %74 : vector<128x128xbf16> to vector<128x128xf32>
    %cst_26 = arith.constant dense<0.000000e+00> : vector<16x128xf32>
    %76 = tpu.matmul %72, %75, %cst_26 {dimension_numbers = #tpu.dot_dimension_numbers<[1], [0], [0], [1], [0, 0, 1, 1], [], []>} : vector<16x128xf32>, vector<128x128xf32>, vector<16x128xf32> -> vector<16x128xf32>
    %77 = vector.broadcast %3 : vector<1x128xf32> to vector<16x128xf32>
    %78 = arith.addf %76, %77 : vector<16x128xf32>
    %79 = arith.addf %15, %78 : vector<16x128xf32>
    %cst_27 = arith.constant dense<0.000000e+00> : vector<16xf32>
    %80 = vector.multi_reduction <add>, %79, %cst_27 [1] : vector<16x128xf32> to vector<16xf32>
    %81 = vector.shape_cast %80 : vector<16xf32> to vector<16x1xf32>
    %cst_28 = arith.constant 1.280000e+02 : f32
    %82 = vector.broadcast %cst_28 : f32 to vector<16x1xf32>
    %83 = arith.divf %81, %82 : vector<16x1xf32>
    %84 = vector.broadcast %83 : vector<16x1xf32> to vector<16x128xf32>
    %85 = arith.subf %79, %84 : vector<16x128xf32>
    %86 = arith.mulf %85, %85 : vector<16x128xf32>
    %cst_29 = arith.constant dense<0.000000e+00> : vector<16xf32>
    %87 = vector.multi_reduction <add>, %86, %cst_29 [1] : vector<16x128xf32> to vector<16xf32>
    %88 = vector.shape_cast %87 : vector<16xf32> to vector<16x1xf32>
    %cst_30 = arith.constant 1.280000e+02 : f32
    %89 = vector.broadcast %cst_30 : f32 to vector<16x1xf32>
    %90 = arith.divf %88, %89 : vector<16x1xf32>
    %91 = vector.broadcast %83 : vector<16x1xf32> to vector<16x128xf32>
    %92 = arith.subf %79, %91 : vector<16x128xf32>
    %cst_31 = arith.constant 9.99999974E-6 : f32
    %93 = vector.broadcast %cst_31 : f32 to vector<16x1xf32>
    %94 = arith.addf %90, %93 : vector<16x1xf32>
    %95 = math.rsqrt %94 : vector<16x1xf32>
    %96 = vector.broadcast %95 : vector<16x1xf32> to vector<16x128xf32>
    %97 = arith.mulf %92, %96 : vector<16x128xf32>
    %98 = vector.broadcast %4 : vector<1x128xf32> to vector<16x128xf32>
    %99 = arith.mulf %97, %98 : vector<16x128xf32>
    %100 = vector.broadcast %5 : vector<1x128xf32> to vector<16x128xf32>
    %101 = arith.addf %99, %100 : vector<16x128xf32>
    %c0_32 = arith.constant 0 : index
    %c0_33 = arith.constant 0 : index
    %c0_34 = arith.constant 0 : index
    %102 = vector.load %arg6[%c0_32, %c0_33, %c0_34] : memref<1x128x256xbf16, #tpu.memory_space<vmem>>, vector<1x128x256xbf16>
    %103 = vector.shape_cast %102 : vector<1x128x256xbf16> to vector<128x256xbf16>
    %104 = arith.extf %103 : vector<128x256xbf16> to vector<128x256xf32>
    %cst_35 = arith.constant dense<0.000000e+00> : vector<16x256xf32>
    %105 = tpu.matmul %101, %104, %cst_35 {dimension_numbers = #tpu.dot_dimension_numbers<[1], [0], [0], [1], [0, 0, 1, 1], [], []>} : vector<16x128xf32>, vector<128x256xf32>, vector<16x256xf32> -> vector<16x256xf32>
    %106 = vector.broadcast %6 : vector<1x256xf32> to vector<16x256xf32>
    %107 = arith.addf %105, %106 : vector<16x256xf32>
    %cst_36 = arith.constant 0.000000e+00 : f32
    %108 = vector.broadcast %cst_36 : f32 to vector<16x256xf32>
    %109 = arith.maximumf %107, %108 : vector<16x256xf32>
    %c0_37 = arith.constant 0 : index
    %c0_38 = arith.constant 0 : index
    %c0_39 = arith.constant 0 : index
    %110 = vector.load %arg7[%c0_37, %c0_38, %c0_39] : memref<1x256x128xbf16, #tpu.memory_space<vmem>>, vector<1x256x128xbf16>
    %111 = vector.shape_cast %110 : vector<1x256x128xbf16> to vector<256x128xbf16>
    %112 = arith.extf %111 : vector<256x128xbf16> to vector<256x128xf32>
    %cst_40 = arith.constant dense<0.000000e+00> : vector<16x128xf32>
    %113 = tpu.matmul %109, %112, %cst_40 {dimension_numbers = #tpu.dot_dimension_numbers<[1], [0], [0], [1], [0, 0, 1, 1], [], []>} : vector<16x256xf32>, vector<256x128xf32>, vector<16x128xf32> -> vector<16x128xf32>
    %114 = vector.broadcast %7 : vector<1x128xf32> to vector<16x128xf32>
    %115 = arith.addf %113, %114 : vector<16x128xf32>
    %116 = arith.addf %101, %115 : vector<16x128xf32>
    %cst_41 = arith.constant dense<0.000000e+00> : vector<16xf32>
    %117 = vector.multi_reduction <add>, %116, %cst_41 [1] : vector<16x128xf32> to vector<16xf32>
    %118 = vector.shape_cast %117 : vector<16xf32> to vector<16x1xf32>
    %cst_42 = arith.constant 1.280000e+02 : f32
    %119 = vector.broadcast %cst_42 : f32 to vector<16x1xf32>
    %120 = arith.divf %118, %119 : vector<16x1xf32>
    %121 = vector.broadcast %120 : vector<16x1xf32> to vector<16x128xf32>
    %122 = arith.subf %116, %121 : vector<16x128xf32>
    %123 = arith.mulf %122, %122 : vector<16x128xf32>
    %cst_43 = arith.constant dense<0.000000e+00> : vector<16xf32>
    %124 = vector.multi_reduction <add>, %123, %cst_43 [1] : vector<16x128xf32> to vector<16xf32>
    %125 = vector.shape_cast %124 : vector<16xf32> to vector<16x1xf32>
    %cst_44 = arith.constant 1.280000e+02 : f32
    %126 = vector.broadcast %cst_44 : f32 to vector<16x1xf32>
    %127 = arith.divf %125, %126 : vector<16x1xf32>
    %128 = vector.broadcast %120 : vector<16x1xf32> to vector<16x128xf32>
    %129 = arith.subf %116, %128 : vector<16x128xf32>
    %cst_45 = arith.constant 9.99999974E-6 : f32
    %130 = vector.broadcast %cst_45 : f32 to vector<16x1xf32>
    %131 = arith.addf %127, %130 : vector<16x1xf32>
    %132 = math.rsqrt %131 : vector<16x1xf32>
    %133 = vector.broadcast %132 : vector<16x1xf32> to vector<16x128xf32>
    %134 = arith.mulf %129, %133 : vector<16x128xf32>
    %135 = vector.broadcast %8 : vector<1x128xf32> to vector<16x128xf32>
    %136 = arith.mulf %134, %135 : vector<16x128xf32>
    %137 = vector.broadcast %9 : vector<1x128xf32> to vector<16x128xf32>
    %138 = arith.addf %136, %137 : vector<16x128xf32>
    %139 = vector.shape_cast %138 : vector<16x128xf32> to vector<1x1x16x128xf32>
    %c0_46 = arith.constant 0 : index
    %c0_47 = arith.constant 0 : index
    %c0_48 = arith.constant 0 : index
    %c0_49 = arith.constant 0 : index
    %140 = vector.load %arg9[%c0_46, %c0_47, %c0_48, %c0_49] : memref<1x1x16x128xf32, #tpu.memory_space<vmem>>, vector<1x1x16x128xf32>
    tpu.vector_store %arg9[%c0_46, %c0_47, %c0_48, %c0_49], %139 {strides = array<i32>} : memref<1x1x16x128xf32, #tpu.memory_space<vmem>>, vector<1x1x16x128xf32>,
    return
  }
  func.func @transform_0(%arg0: i32, %arg1: i32) -> (i32, i32, i32, i32) {
    %c0_i32 = arith.constant 0 : i32
    %c0_i32_0 = arith.constant 0 : i32
    %c0_i32_1 = arith.constant 0 : i32
    return %arg1, %arg0, %c0_i32, %c0_i32_0 : i32, i32, i32, i32
  }
  func.func @transform_1(%arg0: i32, %arg1: i32) -> (i32, i32) {
    %c0_i32 = arith.constant 0 : i32
    %c0_i32_0 = arith.constant 0 : i32
    %c0_i32_1 = arith.constant 0 : i32
    return %c0_i32, %c0_i32_0 : i32, i32
  }
  func.func @transform_2(%arg0: i32, %arg1: i32) -> (i32, i32, i32) {
    %c0_i32 = arith.constant 0 : i32
    %c0_i32_0 = arith.constant 0 : i32
    %c0_i32_1 = arith.constant 0 : i32
    return %arg0, %c0_i32, %c0_i32_0 : i32, i32, i32
  }
  func.func @transform_3(%arg0: i32, %arg1: i32) -> (i32, i32, i32) {
    %c0_i32 = arith.constant 0 : i32
    %c0_i32_0 = arith.constant 0 : i32
    %c0_i32_1 = arith.constant 0 : i32
    return %arg0, %c0_i32, %c0_i32_0 : i32, i32, i32
  }
  func.func @transform_4(%arg0: i32, %arg1: i32) -> (i32, i32, i32) {
    %c0_i32 = arith.constant 0 : i32
    %c0_i32_0 = arith.constant 0 : i32
    %c0_i32_1 = arith.constant 0 : i32
    return %arg0, %c0_i32, %c0_i32_0 : i32, i32, i32
  }
  func.func @transform_5(%arg0: i32, %arg1: i32) -> (i32, i32, i32) {
    %c0_i32 = arith.constant 0 : i32
    %c0_i32_0 = arith.constant 0 : i32
    %c0_i32_1 = arith.constant 0 : i32
    return %arg0, %c0_i32, %c0_i32_0 : i32, i32, i32
  }
  func.func @transform_6(%arg0: i32, %arg1: i32) -> (i32, i32, i32) {
    %c0_i32 = arith.constant 0 : i32
    %c0_i32_0 = arith.constant 0 : i32
    %c0_i32_1 = arith.constant 0 : i32
    return %arg0, %c0_i32, %c0_i32_0 : i32, i32, i32
  }
  func.func @transform_7(%arg0: i32, %arg1: i32) -> (i32, i32, i32, i32) {
    %c0_i32 = arith.constant 0 : i32
    %c0_i32_0 = arith.constant 0 : i32
    %c0_i32_1 = arith.constant 0 : i32
    return %arg1, %arg0, %c0_i32, %c0_i32_0 : i32, i32, i32, i32
  }
}

</mosaic_0001>

<llo_original>
// kernel: tpu_custom_call.1
$region0: #{tpu_custom_call.1}
  #allocation0 [shape = 'u32[]', space=smem, size = 0x4, offset = 0x4, fixed_abs, tag = 'smem constant byte address 0x4 - core index']
  #allocation1 [shape = 'u32[144,128]{1,0:T(1,128)}', space=vmem, size = 0x12000, scoped, tag = 'internal scratch']
  %s0 = inlined_call_operand.hbm [shape: f32[2,4,16,128], index: 0, kind: input, shape index: {}]
  %s1 = inlined_call_operand.hbm [shape: f32[16,128], index: 1, kind: input, shape index: {}]
  %s2 = inlined_call_operand.hbm [shape: bf16[4,128,384], index: 2, kind: input, shape index: {}]
  %s3 = inlined_call_operand.hbm [shape: bf16[4,128,128], index: 3, kind: input, shape index: {}]
  %s4 = inlined_call_operand.hbm [shape: bf16[4,128,256], index: 4, kind: input, shape index: {}]
  %s5 = inlined_call_operand.hbm [shape: bf16[4,256,128], index: 5, kind: input, shape index: {}]
  %s6 = inlined_call_operand.hbm [shape: f32[4,8,384], index: 6, kind: input, shape index: {}]
  %s7 = inlined_call_operand.hbm [shape: f32[2,4,16,128], index: 7, kind: output, shape index: {}]
  %s8 = sld [smem:[#allocation0]]
  $region89: #{tpu_custom_call.1} parent=0
    _
  %s10 = ssub.s32 1, %s8
  %s11 = scalar_select 0, %s10, %s8
  $region1: #{tpu_custom_call.1} parent=0
    #allocation2 [shape = 'u8[16384]{0}', space=vmem, size = 0x4000, scoped, tag = 'input window, operand 0']
    #allocation3 [shape = 's32[2]{0}', space=sflag, size = 0x8, scoped, tag = 'scoped memory for tpu_custom_call.1']
    #allocation4 [shape = 's32[2]{0}', space=sflag, size = 0x8, scoped, tag = 'scoped memory for tpu_custom_call.1']
    #allocation5 [shape = 'u8[8192]{0}', space=vmem, size = 0x2000, scoped, tag = 'input window, operand 1, single buffered']
    #allocation6 [shape = 's32[1]{0}', space=sflag, size = 0x4, scoped, tag = 'scoped memory for tpu_custom_call.1']
    #allocation7 [shape = 'u8[98304]{0}', space=vmem, size = 0x18000, scoped, tag = 'input window, operand 2, single buffered']
    #allocation8 [shape = 'u8[32768]{0}', space=vmem, size = 0x8000, scoped, tag = 'input window, operand 3, single buffered']
    #allocation9 [shape = 's32[1]{0}', space=sflag, size = 0x4, scoped, tag = 'scoped memory for tpu_custom_call.1']
    #allocation10 [shape = 'u8[65536]{0}', space=vmem, size = 0x10000, scoped, tag = 'input window, operand 4, single buffered']
    #allocation11 [shape = 'u8[65536]{0}', space=vmem, size = 0x10000, scoped, tag = 'input window, operand 5, single buffered']
    #allocation12 [shape = 's32[1]{0}', space=sflag, size = 0x4, scoped, tag = 'scoped memory for tpu_custom_call.1']
    #allocation13 [shape = 'u8[24576]{0}', space=vmem, size = 0x6000, scoped, tag = 'input window, operand 6']
    #allocation14 [shape = 'u8[16384]{0}', space=vmem, size = 0x4000, scoped, tag = 'output window, operand 0']
    %12 = vsyncpa [#allocation3], 0
    %s13 = scalar_lea.sflag [#allocation3], 1
    %14 = vsyncpa %s13, 0
    %15 = vsyncpa [#allocation6], 0
    %16 = vsyncpa [#allocation9], 0
    %17 = vsyncpa [#allocation12], 0
    %18 = vsyncpa [#allocation4], 0
    %s19 = scalar_lea.sflag [#allocation4], 1
    %20 = vsyncpa %s19, 0
    loop: start=0, step=1, limit=10
    $region2: #{tpu_custom_call.1} parent=1 // loop_pre_header
      _
    $region3: #{tpu_custom_call.1} parent=1 // loop_header
      %s22 = sphi 0, %s26
      %p23 = scmp.ge.s32.totalorder %s22, 10
      %s29 = sphi 0, %s41
      %s30 = sphi 0, %s37
      %s31 = sphi 0, %s29
      %s32 = sphi 0, %s30
      %s33 = sphi 0, %s31
      %s34 = sphi 0, %s32
      %s46 = sphi 0, %s48
      %s49 = sphi 0, %s46
      %s50 = sphi 0, %s49
      %s66 = sphi 0, %s50
      %s70 = sphi 0, %s70
      %s72 = sphi 0, %s70
      %s73 = sphi 0, %s72
      %s87 = sphi 0, %s73
      %s93 = sphi 0, %s95
      %s96 = sphi 0, %s93
      %s97 = sphi 0, %s96
      %s113 = sphi 0, %s97
      %s119 = sphi 0, %s121
      %s122 = sphi 0, %s119
      %s123 = sphi 0, %s122
      %s139 = sphi 0, %s123
      %s145 = sphi 0, %s147
      %s148 = sphi 0, %s145
      %s149 = sphi 0, %s148
      %s165 = sphi 0, %s149
      %s171 = sphi 0, %s173
      %s174 = sphi 0, %s171
      %s175 = sphi 0, %s174
      %s191 = sphi 0, %s175
      %s197 = sphi 0, %s199
      %s200 = sphi 0, %s197
      %s201 = sphi 0, %s200
      %s217 = sphi 0, %s201
      %s225 = sphi 0, %s227
      %s228 = sphi 0, %s225
      %s229 = sphi 0, %s228
      %s245 = sphi 0, %s229
    $region4: #{tpu_custom_call.1} parent=1 // loop_header_branch
      %25 = sbr.rel (%p23) target = $region8
    $region5: #{tpu_custom_call.1} parent=1 // loop_body
      %s27 = ssub.s32 %s22, 1
      %s28 = ssub.s32 %s22, 2
      %s35 = sadd.s32 1, %s30
      %p36 = scmp.ge.s32.totalorder %s35, 2
      %s37 = scalar_select %p36, 0, %s35
      %s38 = sadd.s32 1, %s29
      %s39 = scalar_select %p36, %s38, %s29
      %p40 = scmp.ge.s32.totalorder %s39, 4
      %s41 = scalar_select %p40, 0, %s39
      %s42 = ssub.s32 %s30, %s37
      %s43 = ssub.s32 %s29, %s41
      %s44 = sor.u32 %s42, %s43
      %p45 = scmp.eq.s32.totalorder %s44, 0
      %s47 = sadd.s32 %s46, 1
      %s48 = scalar_select %p45, %s46, %s47
      %p51 = pneg %p45
      %p52 = scmp.eq.s32.totalorder %s22, 7
      %p53 = por %p51, %p52
      %p54 = scmp.ne.s32.totalorder %s46, %s49
      %p55 = scmp.eq.s32.totalorder %s22, 0
      %p56 = por %p54, %p55
      %p57 = scmp.ne.s32.totalorder %s46, %s49
      %p58 = scmp.eq.s32.totalorder %s27, 7
      %p59 = por %p57, %p58
      %p60 = scmp.ne.s32.totalorder %s49, %s50
      %p61 = scmp.eq.s32.totalorder %s27, 0
      %p62 = por %p60, %p61
      %p63 = scmp.ne.s32.totalorder %s49, %s50
      %p64 = scmp.eq.s32.totalorder %s28, 7
      %p65 = por %p63, %p64
      %p67 = scmp.ne.s32.totalorder %s50, %s66
      %p68 = scmp.eq.s32.totalorder %s28, 0
      %p69 = por %p67, %p68
      %s71 = sadd.s32 %s70, 1
      %p74 = scmp.eq.s32.totalorder %s22, 7
      %p75 = scmp.ne.s32.totalorder %s70, %s72
      %p76 = scmp.eq.s32.totalorder %s22, 0
      %p77 = por %p75, %p76
      %p78 = scmp.ne.s32.totalorder %s70, %s72
      %p79 = scmp.eq.s32.totalorder %s27, 7
      %p80 = por %p78, %p79
      %p81 = scmp.ne.s32.totalorder %s72, %s73
      %p82 = scmp.eq.s32.totalorder %s27, 0
      %p83 = por %p81, %p82
      %p84 = scmp.ne.s32.totalorder %s72, %s73
      %p85 = scmp.eq.s32.totalorder %s28, 7
      %p86 = por %p84, %p85
      %p88 = scmp.ne.s32.totalorder %s73, %s87
      %p89 = scmp.eq.s32.totalorder %s28, 0
      %p90 = por %p88, %p89
      %s91 = ssub.s32 %s29, %s41
      %p92 = scmp.eq.s32.totalorder %s91, 0
      %s94 = sadd.s32 %s93, 1
      %s95 = scalar_select %p92, %s93, %s94
      %p98 = pneg %p92
      %p99 = scmp.eq.s32.totalorder %s22, 7
      %p100 = por %p98, %p99
      %p101 = scmp.ne.s32.totalorder %s93, %s96
      %p102 = scmp.eq.s32.totalorder %s22, 0
      %p103 = por %p101, %p102
      %p104 = scmp.ne.s32.totalorder %s93, %s96
      %p105 = scmp.eq.s32.totalorder %s27, 7
      %p106 = por %p104, %p105
      %p107 = scmp.ne.s32.totalorder %s96, %s97
      %p108 = scmp.eq.s32.totalorder %s27, 0
      %p109 = por %p107, %p108
      %p110 = scmp.ne.s32.totalorder %s96, %s97
      %p111 = scmp.eq.s32.totalorder %s28, 7
      %p112 = por %p110, %p111
      %p114 = scmp.ne.s32.totalorder %s97, %s113
      %p115 = scmp.eq.s32.totalorder %s28, 0
      %p116 = por %p114, %p115
      %s117 = ssub.s32 %s29, %s41
      %p118 = scmp.eq.s32.totalorder %s117, 0
      %s120 = sadd.s32 %s119, 1
      %s121 = scalar_select %p118, %s119, %s120
      %p124 = pneg %p118
      %p125 = scmp.eq.s32.totalorder %s22, 7
      %p126 = por %p124, %p125
      %p127 = scmp.ne.s32.totalorder %s119, %s122
      %p128 = scmp.eq.s32.totalorder %s22, 0
      %p129 = por %p127, %p128
      %p130 = scmp.ne.s32.totalorder %s119, %s122
      %p131 = scmp.eq.s32.totalorder %s27, 7
      %p132 = por %p130, %p131
      %p133 = scmp.ne.s32.totalorder %s122, %s123
      %p134 = scmp.eq.s32.totalorder %s27, 0
      %p135 = por %p133, %p134
      %p136 = scmp.ne.s32.totalorder %s122, %s123
      %p137 = scmp.eq.s32.totalorder %s28, 7
      %p138 = por %p136, %p137
      %p140 = scmp.ne.s32.totalorder %s123, %s139
      %p141 = scmp.eq.s32.totalorder %s28, 0
      %p142 = por %p140, %p141
      %s143 = ssub.s32 %s29, %s41
      %p144 = scmp.eq.s32.totalorder %s143, 0
      %s146 = sadd.s32 %s145, 1
      %s147 = scalar_select %p144, %s145, %s146
      %p150 = pneg %p144
      %p151 = scmp.eq.s32.totalorder %s22, 7
      %p152 = por %p150, %p151
      %p153 = scmp.ne.s32.totalorder %s145, %s148
      %p154 = scmp.eq.s32.totalorder %s22, 0
      %p155 = por %p153, %p154
      %p156 = scmp.ne.s32.totalorder %s145, %s148
      %p157 = scmp.eq.s32.totalorder %s27, 7
      %p158 = por %p156, %p157
      %p159 = scmp.ne.s32.totalorder %s148, %s149
      %p160 = scmp.eq.s32.totalorder %s27, 0
      %p161 = por %p159, %p160
      %p162 = scmp.ne.s32.totalorder %s148, %s149
      %p163 = scmp.eq.s32.totalorder %s28, 7
      %p164 = por %p162, %p163
      %p166 = scmp.ne.s32.totalorder %s149, %s165
      %p167 = scmp.eq.s32.totalorder %s28, 0
      %p168 = por %p166, %p167
      %s169 = ssub.s32 %s29, %s41
      %p170 = scmp.eq.s32.totalorder %s169, 0
      %s172 = sadd.s32 %s171, 1
      %s173 = scalar_select %p170, %s171, %s172
      %p176 = pneg %p170
      %p177 = scmp.eq.s32.totalorder %s22, 7
      %p178 = por %p176, %p177
      %p179 = scmp.ne.s32.totalorder %s171, %s174
      %p180 = scmp.eq.s32.totalorder %s22, 0
      %p181 = por %p179, %p180
      %p182 = scmp.ne.s32.totalorder %s171, %s174
      %p183 = scmp.eq.s32.totalorder %s27, 7
      %p184 = por %p182, %p183
      %p185 = scmp.ne.s32.totalorder %s174, %s175
      %p186 = scmp.eq.s32.totalorder %s27, 0
      %p187 = por %p185, %p186
      %p188 = scmp.ne.s32.totalorder %s174, %s175
      %p189 = scmp.eq.s32.totalorder %s28, 7
      %p190 = por %p188, %p189
      %p192 = scmp.ne.s32.totalorder %s175, %s191
      %p193 = scmp.eq.s32.totalorder %s28, 0
      %p194 = por %p192, %p193
      %s195 = ssub.s32 %s29, %s41
      %p196 = scmp.eq.s32.totalorder %s195, 0
      %s198 = sadd.s32 %s197, 1
      %s199 = scalar_select %p196, %s197, %s198
      %p202 = pneg %p196
      %p203 = scmp.eq.s32.totalorder %s22, 7
      %p204 = por %p202, %p203
      %p205 = scmp.ne.s32.totalorder %s197, %s200
      %p206 = scmp.eq.s32.totalorder %s22, 0
      %p207 = por %p205, %p206
      %p208 = scmp.ne.s32.totalorder %s197, %s200
      %p209 = scmp.eq.s32.totalorder %s27, 7
      %p210 = por %p208, %p209
      %p211 = scmp.ne.s32.totalorder %s200, %s201
      %p212 = scmp.eq.s32.totalorder %s27, 0
      %p213 = por %p211, %p212
      %p214 = scmp.ne.s32.totalorder %s200, %s201
      %p215 = scmp.eq.s32.totalorder %s28, 7
      %p216 = por %p214, %p215
      %p218 = scmp.ne.s32.totalorder %s201, %s217
      %p219 = scmp.eq.s32.totalorder %s28, 0
      %p220 = por %p218, %p219
      %s221 = ssub.s32 %s30, %s37
      %s222 = ssub.s32 %s29, %s41
      %s223 = sor.u32 %s221, %s222
      %p224 = scmp.eq.s32.totalorder %s223, 0
      %s226 = sadd.s32 %s225, 1
      %s227 = scalar_select %p224, %s225, %s226
      %p230 = pneg %p224
      %p231 = scmp.eq.s32.totalorder %s22, 7
      %p232 = por %p230, %p231
      %p233 = scmp.ne.s32.totalorder %s225, %s228
      %p234 = scmp.eq.s32.totalorder %s22, 0
      %p235 = por %p233, %p234
      %p236 = scmp.ne.s32.totalorder %s225, %s228
      %p237 = scmp.eq.s32.totalorder %s27, 7
      %p238 = por %p236, %p237
      %p239 = scmp.ne.s32.totalorder %s228, %s229
      %p240 = scmp.eq.s32.totalorder %s27, 0
      %p241 = por %p239, %p240
      %p242 = scmp.ne.s32.totalorder %s228, %s229
      %p243 = scmp.eq.s32.totalorder %s28, 7
      %p244 = por %p242, %p243
      %p246 = scmp.ne.s32.totalorder %s229, %s245
      %p247 = scmp.eq.s32.totalorder %s28, 0
      %p248 = por %p246, %p247
      %p249 = scmp.le.s32.totalorder 1, %s22
      %p250 = scmp.lt.s32.totalorder %s22, 9
      %p251 = pnand %p249, %p250
      %p252 = pneg %p251
      // Predicated region
      $region9: #{tpu_custom_call.1} parent=5 // pred_check
        _
      $region10: #{tpu_custom_call.1} parent=5 // pred_check_branch
        %254 = sbr.rel (%p251) target = $region12
      $region11: #{tpu_custom_call.1} parent=5 // pred_region
        %s255 = ssub.s32 %s22, 1
        // Predicated region
        $region13: #{tpu_custom_call.1} parent=11 // pred_check
          %p256 = pneg %p83
        $region14: #{tpu_custom_call.1} parent=11 // pred_check_branch
          %258 = sbr.rel (%p256) target = $region16
        $region15: #{tpu_custom_call.1} parent=11 // pred_region
          %s260 = ssub.s32 256, 256
          %261 = vsyncadd [#allocation6], %s260
          %s262 = sshll.u32 [#allocation5], 4
          %s263 = int_to_ptr.vmem [resolvable:$true] %s262
          %268 = dma.hbm_to_vmem [thread:$0]  %s1, 256, %s263, [#allocation6], 128, 128, 8
        $region16: #{tpu_custom_call.1} parent=11 // pred_fallthru
          _
        // Predicated region
        $region17: #{tpu_custom_call.1} parent=11 // pred_check
          %p269 = pneg %p109
        $region18: #{tpu_custom_call.1} parent=11 // pred_check_branch
          %271 = sbr.rel (%p269) target = $region20
        $region19: #{tpu_custom_call.1} parent=11 // pred_region
          %s273 = ssub.s32 3072, 3072
          %274 = vsyncadd [#allocation6], %s273
          %s275 = smul.addr %s31, 48
          %s276 = smul.addr %s275, 64
          %s277 = scalar_lea.hbm %s2, %s276
          %s278 = sshll.u32 [#allocation7], 4
          %s279 = int_to_ptr.vmem [resolvable:$true] %s278
          %284 = dma.hbm_to_vmem [thread:$0]  %s277, 3072, %s279, [#allocation6], 192, 192, 12
        $region20: #{tpu_custom_call.1} parent=11 // pred_fallthru
          _
        // Predicated region
        $region21: #{tpu_custom_call.1} parent=11 // pred_check
          %p285 = pneg %p135
        $region22: #{tpu_custom_call.1} parent=11 // pred_check_branch
          %287 = sbr.rel (%p285) target = $region24
        $region23: #{tpu_custom_call.1} parent=11 // pred_region
          %s289 = ssub.s32 1024, 1024
          %290 = vsyncadd [#allocation9], %s289
          %s291 = smul.addr %s31, 16
          %s292 = smul.addr %s291, 64
          %s293 = scalar_lea.hbm %s3, %s292
          %s294 = sshll.u32 [#allocation8], 4
          %s295 = int_to_ptr.vmem [resolvable:$true] %s294
          %300 = dma.hbm_to_vmem [thread:$0]  %s293, 1024, %s295, [#allocation9], 64, 64, 4
        $region24: #{tpu_custom_call.1} parent=11 // pred_fallthru
          _
        // Predicated region
        $region25: #{tpu_custom_call.1} parent=11 // pred_check
          %p301 = pneg %p161
        $region26: #{tpu_custom_call.1} parent=11 // pred_check_branch
          %303 = sbr.rel (%p301) target = $region28
        $region27: #{tpu_custom_call.1} parent=11 // pred_region
          %s305 = ssub.s32 2048, 2048
          %306 = vsyncadd [#allocation9], %s305
          %s307 = smul.addr %s31, 32
          %s308 = smul.addr %s307, 64
          %s309 = scalar_lea.hbm %s4, %s308
          %s310 = sshll.u32 [#allocation10], 4
          %s311 = int_to_ptr.vmem [resolvable:$true] %s310
          %316 = dma.hbm_to_vmem [thread:$0]  %s309, 2048, %s311, [#allocation9], 128, 128, 8
        $region28: #{tpu_custom_call.1} parent=11 // pred_fallthru
          _
        // Predicated region
        $region29: #{tpu_custom_call.1} parent=11 // pred_check
          %p317 = pneg %p187
        $region30: #{tpu_custom_call.1} parent=11 // pred_check_branch
          %319 = sbr.rel (%p317) target = $region32
        $region31: #{tpu_custom_call.1} parent=11 // pred_region
          %s321 = ssub.s32 2048, 2048
          %322 = vsyncadd [#allocation12], %s321
          %s323 = smul.addr %s31, 32
          %s324 = smul.addr %s323, 64
          %s325 = scalar_lea.hbm %s5, %s324
          %s326 = sshll.u32 [#allocation11], 4
          %s327 = int_to_ptr.vmem [resolvable:$true] %s326
          %332 = dma.hbm_to_vmem [thread:$0]  %s325, 2048, %s327, [#allocation12], 64, 64, 4
        $region32: #{tpu_custom_call.1} parent=11 // pred_fallthru
          _
      $region12: #{tpu_custom_call.1} parent=5 // pred_fallthru
        _
      %p333 = scmp.lt.s32.totalorder %s22, 8
      // Predicated region
      $region33: #{tpu_custom_call.1} parent=5 // pred_check
        %p334 = pneg %p333
      $region34: #{tpu_custom_call.1} parent=5 // pred_check_branch
        %336 = sbr.rel (%p334) target = $region36
      $region35: #{tpu_custom_call.1} parent=5 // pred_region
        // Predicated region
        $region37: #{tpu_custom_call.1} parent=35 // pred_check
          %p337 = pneg %p56
        $region38: #{tpu_custom_call.1} parent=35 // pred_check_branch
          %339 = sbr.rel (%p337) target = $region40
        $region39: #{tpu_custom_call.1} parent=35 // pred_region
          %s340 = sand.u32 %s22, 1
          %s341 = scalar_lea.sflag [#allocation3], %s340
          %s342 = sand.u32 %s46, 1
          %s343 = smul.addr %s342, 16
          %s344 = scalar_lea.vmem [#allocation2], %s343
          %s346 = ssub.s32 256, 256
          %347 = vsyncadd %s341, %s346
          %s348 = smul.addr %s29, 2
          %s349 = smul.addr %s30, 8
          %s350 = sadd.s32 %s348, %s349
          %s351 = smul.addr %s350, 128
          %s352 = scalar_lea.hbm %s0, %s351
          %s353 = sshll.u32 %s344, 4
          %s354 = int_to_ptr.vmem [resolvable:$true] %s353
          %359 = dma.hbm_to_vmem [thread:$0]  %s352, 256, %s354, %s341, 128, 128, 8
        $region40: #{tpu_custom_call.1} parent=35 // pred_fallthru
          _
        // Predicated region
        $region41: #{tpu_custom_call.1} parent=35 // pred_check
          %p360 = pneg %p207
        $region42: #{tpu_custom_call.1} parent=35 // pred_check_branch
          %362 = sbr.rel (%p360) target = $region44
        $region43: #{tpu_custom_call.1} parent=35 // pred_region
          %s363 = sand.u32 %s22, 1
          %s364 = scalar_lea.sflag [#allocation3], %s363
          %s365 = sand.u32 %s197, 1
          %s366 = smul.addr %s365, 24
          %s367 = scalar_lea.vmem [#allocation13], %s366
          %s369 = ssub.s32 384, 384
          %370 = vsyncadd %s364, %s369
          %s371 = smul.addr %s29, 3
          %s372 = smul.addr %s371, 128
          %s373 = scalar_lea.hbm %s6, %s372
          %s375 = sshll.u32 %s367, 4
          %s376 = int_to_ptr.vmem [resolvable:$true] %s375
          %378 = dma.hbm_to_vmem [thread:$0]  %s373, 384, %s376, %s364
        $region44: #{tpu_custom_call.1} parent=35 // pred_fallthru
          _
      $region36: #{tpu_custom_call.1} parent=5 // pred_fallthru
        _
      %p379 = scmp.le.s32.totalorder 1, %s22
      %p380 = scmp.lt.s32.totalorder %s22, 9
      %p381 = pnand %p379, %p380
      %p382 = pneg %p381
      // Predicated region
      $region45: #{tpu_custom_call.1} parent=5 // pred_check
        _
      $region46: #{tpu_custom_call.1} parent=5 // pred_check_branch
        %384 = sbr.rel (%p381) target = $region48
      $region47: #{tpu_custom_call.1} parent=5 // pred_region
        %s385 = ssub.s32 %s22, 1
        %s386 = sand.u32 %s27, 1
        %s387 = scalar_lea.sflag [#allocation3], %s386
        %s388 = sand.u32 %s49, 1
        %s389 = smul.addr %s388, 16
        %s390 = scalar_lea.vmem [#allocation2], %s389
        // Predicated region
        $region49: #{tpu_custom_call.1} parent=47 // pred_check
          %p391 = pneg %p62
        $region50: #{tpu_custom_call.1} parent=47 // pred_check_branch
          %393 = sbr.rel (%p391) target = $region52
        $region51: #{tpu_custom_call.1} parent=47 // pred_region
          %394 = dma.done %s387, 256
        $region52: #{tpu_custom_call.1} parent=47 // pred_fallthru
          _
        // Predicated region
        $region53: #{tpu_custom_call.1} parent=47 // pred_check
          %p395 = pneg %p83
        $region54: #{tpu_custom_call.1} parent=47 // pred_check_branch
          %397 = sbr.rel (%p395) target = $region56
        $region55: #{tpu_custom_call.1} parent=47 // pred_region
          %398 = dma.done [#allocation6], 256
        $region56: #{tpu_custom_call.1} parent=47 // pred_fallthru
          _
        // Predicated region
        $region57: #{tpu_custom_call.1} parent=47 // pred_check
          %p399 = pneg %p109
        $region58: #{tpu_custom_call.1} parent=47 // pred_check_branch
          %401 = sbr.rel (%p399) target = $region60
        $region59: #{tpu_custom_call.1} parent=47 // pred_region
          %402 = dma.done [#allocation6], 3072
        $region60: #{tpu_custom_call.1} parent=47 // pred_fallthru
          _
        // Predicated region
        $region61: #{tpu_custom_call.1} parent=47 // pred_check
          %p403 = pneg %p135
        $region62: #{tpu_custom_call.1} parent=47 // pred_check_branch
          %405 = sbr.rel (%p403) target = $region64
        $region63: #{tpu_custom_call.1} parent=47 // pred_region
          %406 = dma.done [#allocation9], 1024
        $region64: #{tpu_custom_call.1} parent=47 // pred_fallthru
          _
        // Predicated region
        $region65: #{tpu_custom_call.1} parent=47 // pred_check
          %p407 = pneg %p161
        $region66: #{tpu_custom_call.1} parent=47 // pred_check_branch
          %409 = sbr.rel (%p407) target = $region68
        $region67: #{tpu_custom_call.1} parent=47 // pred_region
          %410 = dma.done [#allocation9], 2048
        $region68: #{tpu_custom_call.1} parent=47 // pred_fallthru
          _
        // Predicated region
        $region69: #{tpu_custom_call.1} parent=47 // pred_check
          %p411 = pneg %p187
        $region70: #{tpu_custom_call.1} parent=47 // pred_check_branch
          %413 = sbr.rel (%p411) target = $region72
        $region71: #{tpu_custom_call.1} parent=47 // pred_region
          %414 = dma.done [#allocation12], 2048
        $region72: #{tpu_custom_call.1} parent=47 // pred_fallthru
          _
        %s415 = sand.u32 %s27, 1
        %s416 = scalar_lea.sflag [#allocation3], %s415
        %s417 = sand.u32 %s200, 1
        %s418 = smul.addr %s417, 24
        %s419 = scalar_lea.vmem [#allocation13], %s418
        // Predicated region
        $region73: #{tpu_custom_call.1} parent=47 // pred_check
          %p420 = pneg %p213
        $region74: #{tpu_custom_call.1} parent=47 // pred_check_branch
          %422 = sbr.rel (%p420) target = $region76
        $region75: #{tpu_custom_call.1} parent=47 // pred_region
          %423 = dma.done %s416, 384
        $region76: #{tpu_custom_call.1} parent=47 // pred_fallthru
          _
        %s424 = sand.u32 %s27, 1
        %s425 = scalar_lea.sflag [#allocation3], %s424
        %s426 = sand.u32 %s49, 1
        %s427 = smul.addr %s426, 16
        %s428 = scalar_lea.vmem [#allocation2], %s427
        %p429 = pneg %p62
        %p430 = pneg %p59
        %p431 = pneg %p83
        %p432 = pneg %p80
        %p433 = pneg %p109
        %p434 = pneg %p106
        %p435 = pneg %p135
        %p436 = pneg %p132
        %p437 = pneg %p161
        %p438 = pneg %p158
        %p439 = pneg %p187
        %p440 = pneg %p184
        %s441 = sand.u32 %s27, 1
        %s442 = scalar_lea.sflag [#allocation3], %s441
        %s443 = sand.u32 %s200, 1
        %s444 = smul.addr %s443, 24
        %s445 = scalar_lea.vmem [#allocation13], %s444
        %p446 = pneg %p213
        %p447 = pneg %p210
        %p448 = pneg %p241
        %p449 = pneg %p238
        %s450 = sand.u32 %s228, 1
        %s451 = scalar_lea.sflag [#allocation4], %s450
        %s452 = sand.u32 %s228, 1
        %s453 = smul.addr %s452, 16
        %s454 = scalar_lea.vmem [#allocation14], %s453
        %v455 = vld [vmem:[%s419] sm:$0xff]
        %v456 = vld [vmem:[%s419 + $0x8] sm:$0xff]
        %v457 = vld [vmem:[%s419 + $0x10] sm:$0xff]
        %v458 = vld [vmem:[%s390] sm:$0xff]
        %v459 = vld [vmem:[%s390 + $0x8] sm:$0xff]
        %v460 = vld [vmem:[#allocation5] sm:$0xff]
        %v461 = vld [vmem:[#allocation5 + $0x8] sm:$0xff]
        %v462 = vadd.f32 %v458, %v460
        %v463 = vadd.f32 %v459, %v461
        %v464 = vld [vmem:[#allocation7] sm:$0xff]
        %v465 = vld [vmem:[#allocation7 + $0x8] sm:$0xf]
        %v466 = vld [vmem:[#allocation7 + $0xc] sm:$0xff]
        %v467 = vld [vmem:[#allocation7 + $0x14] sm:$0xf]
        %v468 = vld [vmem:[#allocation7 + $0x18] sm:$0xff]
        %v469 = vld [vmem:[#allocation7 + $0x20] sm:$0xf]
        %v470 = vld [vmem:[#allocation7 + $0x24] sm:$0xff]
        %v471 = vld [vmem:[#allocation7 + $0x2c] sm:$0xf]
        %v472 = vld [vmem:[#allocation7 + $0x30] sm:$0xff]
        %v473 = vld [vmem:[#allocation7 + $0x38] sm:$0xf]
        %v474 = vld [vmem:[#allocation7 + $0x3c] sm:$0xff]
        %v475 = vld [vmem:[#allocation7 + $0x44] sm:$0xf]
        %v476 = vld [vmem:[#allocation7 + $0x48] sm:$0xff]
        %v477 = vld [vmem:[#allocation7 + $0x50] sm:$0xf]
        %v478 = vld [vmem:[#allocation7 + $0x54] sm:$0xff]
        %v479 = vld [vmem:[#allocation7 + $0x5c] sm:$0xf]
        %v480 = vld [vmem:[#allocation7 + $0x60] sm:$0xff]
        %v481 = vld [vmem:[#allocation7 + $0x68] sm:$0xf]
        %v482 = vld [vmem:[#allocation7 + $0x6c] sm:$0xff]
        %v483 = vld [vmem:[#allocation7 + $0x74] sm:$0xf]
        %v484 = vld [vmem:[#allocation7 + $0x78] sm:$0xff]
        %v485 = vld [vmem:[#allocation7 + $0x80] sm:$0xf]
        %v486 = vld [vmem:[#allocation7 + $0x84] sm:$0xff]
        %v487 = vld [vmem:[#allocation7 + $0x8c] sm:$0xf]
        %v488 = vld [vmem:[#allocation7 + $0x90] sm:$0xff]
        %v489 = vld [vmem:[#allocation7 + $0x98] sm:$0xf]
        %v490 = vld [vmem:[#allocation7 + $0x9c] sm:$0xff]
        %v491 = vld [vmem:[#allocation7 + $0xa4] sm:$0xf]
        %v492 = vld [vmem:[#allocation7 + $0xa8] sm:$0xff]
        %v493 = vld [vmem:[#allocation7 + $0xb0] sm:$0xf]
        %v494 = vld [vmem:[#allocation7 + $0xb4] sm:$0xff]
        %v495 = vld [vmem:[#allocation7 + $0xbc] sm:$0xf]
        %v496 = vunpack.c.l.bf16 %v464
        %v497 = vunpack.c.h.bf16 %v464
        %v498 = vunpack.c.l.bf16 %v465
        %v499 = vunpack.c.l.bf16 %v466
        %v500 = vunpack.c.h.bf16 %v466
        %v501 = vunpack.c.l.bf16 %v467
        %v502 = vunpack.c.l.bf16 %v468
        %v503 = vunpack.c.h.bf16 %v468
        %v504 = vunpack.c.l.bf16 %v469
        %v505 = vunpack.c.l.bf16 %v470
        %v506 = vunpack.c.h.bf16 %v470
        %v507 = vunpack.c.l.bf16 %v471
        %v508 = vunpack.c.l.bf16 %v472
        %v509 = vunpack.c.h.bf16 %v472
        %v510 = vunpack.c.l.bf16 %v473
        %v511 = vunpack.c.l.bf16 %v474
        %v512 = vunpack.c.h.bf16 %v474
        %v513 = vunpack.c.l.bf16 %v475
        %v514 = vunpack.c.l.bf16 %v476
        %v515 = vunpack.c.h.bf16 %v476
        %v516 = vunpack.c.l.bf16 %v477
        %v517 = vunpack.c.l.bf16 %v478
        %v518 = vunpack.c.h.bf16 %v478
        %v519 = vunpack.c.l.bf16 %v479
        %v520 = vunpack.c.l.bf16 %v480
        %v521 = vunpack.c.h.bf16 %v480
        %v522 = vunpack.c.l.bf16 %v481
        %v523 = vunpack.c.l.bf16 %v482
        %v524 = vunpack.c.h.bf16 %v482
        %v525 = vunpack.c.l.bf16 %v483
        %v526 = vunpack.c.l.bf16 %v484
        %v527 = vunpack.c.h.bf16 %v484
        %v528 = vunpack.c.l.bf16 %v485
        %v529 = vunpack.c.l.bf16 %v486
        %v530 = vunpack.c.h.bf16 %v486
        %v531 = vunpack.c.l.bf16 %v487
        %v532 = vunpack.c.l.bf16 %v488
        %v533 = vunpack.c.h.bf16 %v488
        %v534 = vunpack.c.l.bf16 %v489
        %v535 = vunpack.c.l.bf16 %v490
        %v536 = vunpack.c.h.bf16 %v490
        %v537 = vunpack.c.l.bf16 %v491
        %v538 = vunpack.c.l.bf16 %v492
        %v539 = vunpack.c.h.bf16 %v492
        %v540 = vunpack.c.l.bf16 %v493
        %v541 = vunpack.c.l.bf16 %v494
        %v542 = vunpack.c.h.bf16 %v494
        %v543 = vunpack.c.l.bf16 %v495
        %v544 = vlaneseq
        %v545 = vshrl.u32 %v544, 7
        %v546 = vsub.s32 0, %v545
        %v547 = vrot.slane %v455, %v546
        %v548 = vlaneseq
        %v549 = vshrl.u32 %v548, 7
        %v550 = vsub.s32 0, %v549
        %v551 = vrot.slane %v456, %v550
        %v552 = vlaneseq
        %v553 = vshrl.u32 %v552, 7
        %v554 = vsub.s32 0, %v553
        %v555 = vrot.slane %v457, %v554
        %556 = vmatprep.subr.mxu0 %v497
        %557 = vmatpush1.msra.mxu0 %v496
        %558 = vmatprep.subr.mxu0 %v500
        %559 = vmatpush1.msra.mxu0 %v499
        %560 = vmatprep.subr.mxu0 %v503
        %561 = vmatpush1.msra.mxu0 %v502
        %562 = vmatprep.subr.mxu0 %v506
        %563 = vmatpush1.msra.mxu0 %v505
        %564 = vmatprep.subr.mxu0 %v509
        %565 = vmatpush1.msra.mxu0 %v508
        %566 = vmatprep.subr.mxu0 %v512
        %567 = vmatpush1.msra.mxu0 %v511
        %568 = vmatprep.subr.mxu0 %v515
        %569 = vmatpush1.msra.mxu0 %v514
        %570 = vmatprep.subr.mxu0 %v518
        %571 = vmatpush1.msra.mxu0 %v517
        %572 = vmatprep.subr.mxu0 %v521
        %573 = vmatpush1.msra.mxu0 %v520
        %574 = vmatprep.subr.mxu0 %v524
        %575 = vmatpush1.msra.mxu0 %v523
        %576 = vmatprep.subr.mxu0 %v527
        %577 = vmatpush1.msra.mxu0 %v526
        %578 = vmatprep.subr.mxu0 %v530
        %579 = vmatpush1.msra.mxu0 %v529
        %580 = vmatprep.subr.mxu0 %v533
        %581 = vmatpush1.msra.mxu0 %v532
        %582 = vmatprep.subr.mxu0 %v536
        %583 = vmatpush1.msra.mxu0 %v535
        %584 = vmatprep.subr.mxu0 %v539
        %585 = vmatpush1.msra.mxu0 %v538
        %586 = vmatprep.subr.mxu0 %v542
        %587 = vmatpush1.msra.mxu0 %v541
        %588 = vmatprep.subr.mxu0 0.0
        %589 = vmatpush1.msra.mxu0 0.0
        %590 = vmatprep.subr.mxu0 0.0
        %591 = vmatpush1.msra.mxu0 0.0
        %592 = vmatprep.subr.mxu0 0.0
        %593 = vmatpush1.msra.mxu0 0.0
        %594 = vmatprep.subr.mxu0 0.0
        %595 = vmatpush1.msra.mxu0 0.0
        %596 = vmatprep.subr.mxu0 0.0
        %597 = vmatpush1.msra.mxu0 0.0
        %598 = vmatprep.subr.mxu0 0.0
        %599 = vmatpush1.msra.mxu0 0.0
        %600 = vmatprep.subr.mxu0 0.0
        %601 = vmatpush1.msra.mxu0 0.0
        %602 = vmatprep.subr.mxu0 0.0
        %603 = vmatpush1.msra.mxu0 0.0
        %604 = vmatprep.subr.mxu0 0.0
        %605 = vmatpush1.msra.mxu0 0.0
        %606 = vmatprep.subr.mxu0 0.0
        %607 = vmatpush1.msra.mxu0 0.0
        %608 = vmatprep.subr.mxu0 0.0
        %609 = vmatpush1.msra.mxu0 0.0
        %610 = vmatprep.subr.mxu0 0.0
        %611 = vmatpush1.msra.mxu0 0.0
        %612 = vmatprep.subr.mxu0 0.0
        %613 = vmatpush1.msra.mxu0 0.0
        %614 = vmatprep.subr.mxu0 0.0
        %615 = vmatpush1.msra.mxu0 0.0
        %616 = vmatprep.subr.mxu0 0.0
        %617 = vmatpush1.msra.mxu0 0.0
        %618 = vmatprep.subr.mxu0 0.0
        %619 = vmatpush1.msra.mxu0 0.0
        %620 = vmatprep.mubr.f32.mxu0 0.0
        %621 = vmatmul.mubr.f32.gmra.mrb[0].mxu0 %v462
        %v622 = vpop.f32.mrb[0].mxu0
        %v623 = vadd.f32 %v547, %v622
        %v624 = vpop.f32.mrb[0].mxu0
        %v625 = vadd.f32 %v551, %v624
        %626 = vmatprep.mubr.f32.mxu0 0.0
        %627 = vmatmul.mubr.f32.gmra.mrb[0].mxu0 %v463
        %v628 = vpop.f32.mrb[0].mxu0
        %v629 = vadd.f32 %v547, %v628
        %v630 = vpop.f32.mrb[0].mxu0
        %v631 = vadd.f32 %v551, %v630
        %632 = vdwg.mxu0
        %633 = vmatprep.subr.mxu0 0.0
        %634 = vmatpush1.msra.mxu0 %v498
        %635 = vmatprep.subr.mxu0 0.0
        %636 = vmatpush1.msra.mxu0 %v501
        %637 = vmatprep.subr.mxu0 0.0
        %638 = vmatpush1.msra.mxu0 %v504
        %639 = vmatprep.subr.mxu0 0.0
        %640 = vmatpush1.msra.mxu0 %v507
        %641 = vmatprep.subr.mxu0 0.0
        %642 = vmatpush1.msra.mxu0 %v510
        %643 = vmatprep.subr.mxu0 0.0
        %644 = vmatpush1.msra.mxu0 %v513
        %645 = vmatprep.subr.mxu0 0.0
        %646 = vmatpush1.msra.mxu0 %v516
        %647 = vmatprep.subr.mxu0 0.0
        %648 = vmatpush1.msra.mxu0 %v519
        %649 = vmatprep.subr.mxu0 0.0
        %650 = vmatpush1.msra.mxu0 %v522
        %651 = vmatprep.subr.mxu0 0.0
        %652 = vmatpush1.msra.mxu0 %v525
        %653 = vmatprep.subr.mxu0 0.0
        %654 = vmatpush1.msra.mxu0 %v528
        %655 = vmatprep.subr.mxu0 0.0
        %656 = vmatpush1.msra.mxu0 %v531
        %657 = vmatprep.subr.mxu0 0.0
        %658 = vmatpush1.msra.mxu0 %v534
        %659 = vmatprep.subr.mxu0 0.0
        %660 = vmatpush1.msra.mxu0 %v537
        %661 = vmatprep.subr.mxu0 0.0
        %662 = vmatpush1.msra.mxu0 %v540
        %663 = vmatprep.subr.mxu0 0.0
        %664 = vmatpush1.msra.mxu0 %v543
        %665 = vmatprep.subr.mxu0 0.0
        %666 = vmatpush1.msra.mxu0 0.0
        %667 = vmatprep.subr.mxu0 0.0
        %668 = vmatpush1.msra.mxu0 0.0
        %669 = vmatprep.subr.mxu0 0.0
        %670 = vmatpush1.msra.mxu0 0.0
        %671 = vmatprep.subr.mxu0 0.0
        %672 = vmatpush1.msra.mxu0 0.0
        %673 = vmatprep.subr.mxu0 0.0
        %674 = vmatpush1.msra.mxu0 0.0
        %675 = vmatprep.subr.mxu0 0.0
        %676 = vmatpush1.msra.mxu0 0.0
        %677 = vmatprep.subr.mxu0 0.0
        %678 = vmatpush1.msra.mxu0 0.0
        %679 = vmatprep.subr.mxu0 0.0
        %680 = vmatpush1.msra.mxu0 0.0
        %681 = vmatprep.subr.mxu0 0.0
        %682 = vmatpush1.msra.mxu0 0.0
        %683 = vmatprep.subr.mxu0 0.0
        %684 = vmatpush1.msra.mxu0 0.0
        %685 = vmatprep.subr.mxu0 0.0
        %686 = vmatpush1.msra.mxu0 0.0
        %687 = vmatprep.subr.mxu0 0.0
        %688 = vmatpush1.msra.mxu0 0.0
        %689 = vmatprep.subr.mxu0 0.0
        %690 = vmatpush1.msra.mxu0 0.0
        %691 = vmatprep.subr.mxu0 0.0
        %692 = vmatpush1.msra.mxu0 0.0
        %693 = vmatprep.subr.mxu0 0.0
        %694 = vmatpush1.msra.mxu0 0.0
        %695 = vmatprep.subr.mxu0 0.0
        %696 = vmatpush1.msra.mxu0 0.0
        %697 = vmatprep.mubr.f32.mxu0 0.0
        %698 = vmatmul.mubr.f32.gmra.mrb[0].mxu0 %v462
        %v699 = vpop.f32.mrb[0].mxu0
        %v700 = vadd.f32 %v555, %v699
        %v701 = vpop.f32.mrb[0].mxu0
        %702 = vmatprep.mubr.f32.mxu0 0.0
        %703 = vmatmul.mubr.f32.gmra.mrb[0].mxu0 %v463
        %v704 = vpop.f32.mrb[0].mxu0
        %v705 = vadd.f32 %v555, %v704
        %v706 = vpop.f32.mrb[0].mxu0
        %707 = vdwg.mxu0
        %vm708 = vcmask 523264
        %v710 = vsel %vm708, %v623, 0
        %v713 = vsel %vm708, %v629, 0
        %v716 = vsel %vm708, %v625, 0
        %v719 = vsel %vm708, %v631, 0
        %721 = vmatprep.subr.mxu0 0.0
        %722 = vmatpush1.xpose.msra.mxu0 %v716
        %723 = vmatprep.subr.mxu0 0.0
        %724 = vmatpush1.xpose.msra.mxu0 %v719
        %725 = vmatprep.subr.mxu0 0.0
        %726 = vmatpush1.xpose.msra.mxu0 0.0
        %727 = vmatprep.subr.mxu0 0.0
        %728 = vmatpush1.xpose.msra.mxu0 0.0
        %729 = vmatprep.subr.mxu0 0.0
        %730 = vmatpush1.xpose.msra.mxu0 0.0
        %731 = vmatprep.subr.mxu0 0.0
        %732 = vmatpush1.xpose.msra.mxu0 0.0
        %733 = vmatprep.subr.mxu0 0.0
        %734 = vmatpush1.xpose.msra.mxu0 0.0
        %735 = vmatprep.subr.mxu0 0.0
        %736 = vmatpush1.xpose.msra.mxu0 0.0
        %737 = vmatprep.subr.mxu0 0.0
        %738 = vmatpush1.xpose.msra.mxu0 0.0
        %739 = vmatprep.subr.mxu0 0.0
        %740 = vmatpush1.xpose.msra.mxu0 0.0
        %741 = vmatprep.subr.mxu0 0.0
        %742 = vmatpush1.xpose.msra.mxu0 0.0
        %743 = vmatprep.subr.mxu0 0.0
        %744 = vmatpush1.xpose.msra.mxu0 0.0
        %745 = vmatprep.subr.mxu0 0.0
        %746 = vmatpush1.xpose.msra.mxu0 0.0
        %747 = vmatprep.subr.mxu0 0.0
        %748 = vmatpush1.xpose.msra.mxu0 0.0
        %749 = vmatprep.subr.mxu0 0.0
        %750 = vmatpush1.xpose.msra.mxu0 0.0
        %751 = vmatprep.subr.mxu0 0.0
        %752 = vmatpush1.xpose.msra.mxu0 0.0
        %753 = vmatprep.subr.mxu0 0.0
        %754 = vmatpush1.xpose.msra.mxu0 0.0
        %755 = vmatprep.subr.mxu0 0.0
        %756 = vmatpush1.xpose.msra.mxu0 0.0
        %757 = vmatprep.subr.mxu0 0.0
        %758 = vmatpush1.xpose.msra.mxu0 0.0
        %759 = vmatprep.subr.mxu0 0.0
        %760 = vmatpush1.xpose.msra.mxu0 0.0
        %761 = vmatprep.subr.mxu0 0.0
        %762 = vmatpush1.xpose.msra.mxu0 0.0
        %763 = vmatprep.subr.mxu0 0.0
        %764 = vmatpush1.xpose.msra.mxu0 0.0
        %765 = vmatprep.subr.mxu0 0.0
        %766 = vmatpush1.xpose.msra.mxu0 0.0
        %767 = vmatprep.subr.mxu0 0.0
        %768 = vmatpush1.xpose.msra.mxu0 0.0
        %769 = vmatprep.subr.mxu0 0.0
        %770 = vmatpush1.xpose.msra.mxu0 0.0
        %771 = vmatprep.subr.mxu0 0.0
        %772 = vmatpush1.xpose.msra.mxu0 0.0
        %773 = vmatprep.subr.mxu0 0.0
        %774 = vmatpush1.xpose.msra.mxu0 0.0
        %775 = vmatprep.subr.mxu0 0.0
        %776 = vmatpush1.xpose.msra.mxu0 0.0
        %777 = vmatprep.subr.mxu0 0.0
        %778 = vmatpush1.xpose.msra.mxu0 0.0
        %779 = vmatprep.subr.mxu0 0.0
        %780 = vmatpush1.xpose.msra.mxu0 0.0
        %781 = vmatprep.subr.mxu0 0.0
        %782 = vmatpush1.xpose.msra.mxu0 0.0
        %783 = vmatprep.subr.mxu0 0.0
        %784 = vmatpush1.xpose.msra.mxu0 0.0
        %785 = vmatprep.mubr.f32.mxu0 0.0
        %786 = vmatmul.mubr.f32.gmra.mrb[0].mxu0 %v710
        %v787 = vpop.f32.mrb[0].mxu0
        %v788 = vadd.f32 0.0, %v787
        %v789 = vpop.f32.mrb[0].mxu0
        %790 = vmatprep.mubr.f32.mxu0 0.0
        %791 = vmatmul.mubr.f32.gmra.mrb[0].mxu0 %v713
        %v792 = vpop.f32.mrb[0].mxu0
        %v793 = vadd.f32 0.0, %v792
        %v794 = vpop.f32.mrb[0].mxu0
        %795 = vdwg.mxu0
        %v796 = vmul.f32 %v788, 0.125
        %v797 = vmul.f32 %v793, 0.125
        %vm798 = vcmask 130048
        %v799 = vsel %vm798, %v796, -inf
        %800 = vmax.xlane.f32.xlu0 %v799
        %v801 = vpop.xlane.xlu0 %800
        %v802 = vsel %vm798, %v797, -inf
        %803 = vmax.xlane.f32.xlu0 %v802
        %v804 = vpop.xlane.xlu0 %803
        %v805 = vsub.f32 %v796, %v801
        %v806 = vsub.f32 %v797, %v804
        %v807 = vmul.f32 %v805, 1.442695
        %v808 = vpow.pop %v807
        %v809 = vmul.f32 %v806, 1.442695
        %v810 = vpow.pop %v809
        %v811 = vsel %vm798, %v808, 0.0
        %812 = vadd.xlane.f32.xlu0 %v811
        %v813 = vpop.xlane.xlu0 %812
        %v814 = vsel %vm798, %v810, 0.0
        %815 = vadd.xlane.f32.xlu0 %v814
        %v816 = vpop.xlane.xlu0 %815
        %v817 = vrcp.pop %v813
        %v818 = vrcp.pop %v816
        %v819 = vmul.f32 %v813, %v817
        %v820 = vmul.f32 %v816, %v818
        %v821 = vsub.f32 2.0, %v819
        %v822 = vsub.f32 2.0, %v820
        %v823 = vmul.f32 %v817, %v821
        %v824 = vmul.f32 %v818, %v822
        %v825 = vmul.f32 %v808, %v823
        %v826 = vmul.f32 %v810, %v824
        %v828 = vsel %vm798, %v825, 0
        %v831 = vsel %vm798, %v826, 0
        %833 = vmatprep.subr.mxu0 0.0
        %834 = vmatpush1.msra.mxu0 %v700
        %835 = vmatprep.subr.mxu0 0.0
        %836 = vmatpush1.msra.mxu0 %v705
        %837 = vmatprep.subr.mxu0 0.0
        %838 = vmatpush1.msra.mxu0 0.0
        %839 = vmatprep.subr.mxu0 0.0
        %840 = vmatpush1.msra.mxu0 0.0
        %841 = vmatprep.subr.mxu0 0.0
        %842 = vmatpush1.msra.mxu0 0.0
        %843 = vmatprep.subr.mxu0 0.0
        %844 = vmatpush1.msra.mxu0 0.0
        %845 = vmatprep.subr.mxu0 0.0
        %846 = vmatpush1.msra.mxu0 0.0
        %847 = vmatprep.subr.mxu0 0.0
        %848 = vmatpush1.msra.mxu0 0.0
        %849 = vmatprep.subr.mxu0 0.0
        %850 = vmatpush1.msra.mxu0 0.0
        %851 = vmatprep.subr.mxu0 0.0
        %852 = vmatpush1.msra.mxu0 0.0
        %853 = vmatprep.subr.mxu0 0.0
        %854 = vmatpush1.msra.mxu0 0.0
        %855 = vmatprep.subr.mxu0 0.0
        %856 = vmatpush1.msra.mxu0 0.0
        %857 = vmatprep.subr.mxu0 0.0
        %858 = vmatpush1.msra.mxu0 0.0
        %859 = vmatprep.subr.mxu0 0.0
        %860 = vmatpush1.msra.mxu0 0.0
        %861 = vmatprep.subr.mxu0 0.0
        %862 = vmatpush1.msra.mxu0 0.0
        %863 = vmatprep.subr.mxu0 0.0
        %864 = vmatpush1.msra.mxu0 0.0
        %865 = vmatprep.subr.mxu0 0.0
        %866 = vmatpush1.msra.mxu0 0.0
        %867 = vmatprep.subr.mxu0 0.0
        %868 = vmatpush1.msra.mxu0 0.0
        %869 = vmatprep.subr.mxu0 0.0
        %870 = vmatpush1.msra.mxu0 0.0
        %871 = vmatprep.subr.mxu0 0.0
        %872 = vmatpush1.msra.mxu0 0.0
        %873 = vmatprep.subr.mxu0 0.0
        %874 = vmatpush1.msra.mxu0 0.0
        %875 = vmatprep.subr.mxu0 0.0
        %876 = vmatpush1.msra.mxu0 0.0
        %877 = vmatprep.subr.mxu0 0.0
        %878 = vmatpush1.msra.mxu0 0.0
        %879 = vmatprep.subr.mxu0 0.0
        %880 = vmatpush1.msra.mxu0 0.0
        %881 = vmatprep.subr.mxu0 0.0
        %882 = vmatpush1.msra.mxu0 0.0
        %883 = vmatprep.subr.mxu0 0.0
        %884 = vmatpush1.msra.mxu0 0.0
        %885 = vmatprep.subr.mxu0 0.0
        %886 = vmatpush1.msra.mxu0 0.0
        %887 = vmatprep.subr.mxu0 0.0
        %888 = vmatpush1.msra.mxu0 0.0
        %889 = vmatprep.subr.mxu0 0.0
        %890 = vmatpush1.msra.mxu0 0.0
        %891 = vmatprep.subr.mxu0 0.0
        %892 = vmatpush1.msra.mxu0 0.0
        %893 = vmatprep.subr.mxu0 0.0
        %894 = vmatpush1.msra.mxu0 0.0
        %895 = vmatprep.subr.mxu0 0.0
        %896 = vmatpush1.msra.mxu0 0.0
        %897 = vmatprep.mubr.f32.mxu0 0.0
        %898 = vmatmul.mubr.f32.gmra.mrb[0].mxu0 %v828
        %v899 = vpop.f32.mrb[0].mxu0
        %v900 = vadd.f32 0.0, %v899
        %v901 = vpop.f32.mrb[0].mxu0
        %902 = vmatprep.mubr.f32.mxu0 0.0
        %903 = vmatmul.mubr.f32.gmra.mrb[0].mxu0 %v831
        %v904 = vpop.f32.mrb[0].mxu0
        %v905 = vadd.f32 0.0, %v904
        %v906 = vpop.f32.mrb[0].mxu0
        %907 = vdwg.mxu0
        %908 = vrot.lane.b32.xlu0 %v623, 64
        %v909 = vpop.permute.xlu0 %908
        %910 = vrot.lane.b32.xlu0 %v629, 64
        %v911 = vpop.permute.xlu0 %910
        %912 = vrot.lane.b32.xlu0 %v625, 64
        %v913 = vpop.permute.xlu0 %912
        %914 = vrot.lane.b32.xlu0 %v631, 64
        %v915 = vpop.permute.xlu0 %914
        %v916 = vsel %vm708, %v909, 0
        %v918 = vsel %vm708, %v911, 0
        %v920 = vsel %vm708, %v913, 0
        %v922 = vsel %vm708, %v915, 0
        %924 = vmatprep.subr.mxu0 0.0
        %925 = vmatpush1.xpose.msra.mxu0 %v920
        %926 = vmatprep.subr.mxu0 0.0
        %927 = vmatpush1.xpose.msra.mxu0 %v922
        %928 = vmatprep.subr.mxu0 0.0
        %929 = vmatpush1.xpose.msra.mxu0 0.0
        %930 = vmatprep.subr.mxu0 0.0
        %931 = vmatpush1.xpose.msra.mxu0 0.0
        %932 = vmatprep.subr.mxu0 0.0
        %933 = vmatpush1.xpose.msra.mxu0 0.0
        %934 = vmatprep.subr.mxu0 0.0
        %935 = vmatpush1.xpose.msra.mxu0 0.0
        %936 = vmatprep.subr.mxu0 0.0
        %937 = vmatpush1.xpose.msra.mxu0 0.0
        %938 = vmatprep.subr.mxu0 0.0
        %939 = vmatpush1.xpose.msra.mxu0 0.0
        %940 = vmatprep.subr.mxu0 0.0
        %941 = vmatpush1.xpose.msra.mxu0 0.0
        %942 = vmatprep.subr.mxu0 0.0
        %943 = vmatpush1.xpose.msra.mxu0 0.0
        %944 = vmatprep.subr.mxu0 0.0
        %945 = vmatpush1.xpose.msra.mxu0 0.0
        %946 = vmatprep.subr.mxu0 0.0
        %947 = vmatpush1.xpose.msra.mxu0 0.0
        %948 = vmatprep.subr.mxu0 0.0
        %949 = vmatpush1.xpose.msra.mxu0 0.0
        %950 = vmatprep.subr.mxu0 0.0
        %951 = vmatpush1.xpose.msra.mxu0 0.0
        %952 = vmatprep.subr.mxu0 0.0
        %953 = vmatpush1.xpose.msra.mxu0 0.0
        %954 = vmatprep.subr.mxu0 0.0
        %955 = vmatpush1.xpose.msra.mxu0 0.0
        %956 = vmatprep.subr.mxu0 0.0
        %957 = vmatpush1.xpose.msra.mxu0 0.0
        %958 = vmatprep.subr.mxu0 0.0
        %959 = vmatpush1.xpose.msra.mxu0 0.0
        %960 = vmatprep.subr.mxu0 0.0
        %961 = vmatpush1.xpose.msra.mxu0 0.0
        %962 = vmatprep.subr.mxu0 0.0
        %963 = vmatpush1.xpose.msra.mxu0 0.0
        %964 = vmatprep.subr.mxu0 0.0
        %965 = vmatpush1.xpose.msra.mxu0 0.0
        %966 = vmatprep.subr.mxu0 0.0
        %967 = vmatpush1.xpose.msra.mxu0 0.0
        %968 = vmatprep.subr.mxu0 0.0
        %969 = vmatpush1.xpose.msra.mxu0 0.0
        %970 = vmatprep.subr.mxu0 0.0
        %971 = vmatpush1.xpose.msra.mxu0 0.0
        %972 = vmatprep.subr.mxu0 0.0
        %973 = vmatpush1.xpose.msra.mxu0 0.0
        %974 = vmatprep.subr.mxu0 0.0
        %975 = vmatpush1.xpose.msra.mxu0 0.0
        %976 = vmatprep.subr.mxu0 0.0
        %977 = vmatpush1.xpose.msra.mxu0 0.0
        %978 = vmatprep.subr.mxu0 0.0
        %979 = vmatpush1.xpose.msra.mxu0 0.0
        %980 = vmatprep.subr.mxu0 0.0
        %981 = vmatpush1.xpose.msra.mxu0 0.0
        %982 = vmatprep.subr.mxu0 0.0
        %983 = vmatpush1.xpose.msra.mxu0 0.0
        %984 = vmatprep.subr.mxu0 0.0
        %985 = vmatpush1.xpose.msra.mxu0 0.0
        %986 = vmatprep.subr.mxu0 0.0
        %987 = vmatpush1.xpose.msra.mxu0 0.0
        %988 = vmatprep.mubr.f32.mxu0 0.0
        %989 = vmatmul.mubr.f32.gmra.mrb[0].mxu0 %v916
        %v990 = vpop.f32.mrb[0].mxu0
        %v991 = vadd.f32 0.0, %v990
        %v992 = vpop.f32.mrb[0].mxu0
        %993 = vmatprep.mubr.f32.mxu0 0.0
        %994 = vmatmul.mubr.f32.gmra.mrb[0].mxu0 %v918
        %v995 = vpop.f32.mrb[0].mxu0
        %v996 = vadd.f32 0.0, %v995
        %v997 = vpop.f32.mrb[0].mxu0
        %998 = vdwg.mxu0
        %v999 = vmul.f32 %v991, 0.125
        %v1000 = vmul.f32 %v996, 0.125
        %v1001 = vsel %vm798, %v999, -inf
        %1002 = vmax.xlane.f32.xlu0 %v1001
        %v1003 = vpop.xlane.xlu0 %1002
        %v1004 = vsel %vm798, %v1000, -inf
        %1005 = vmax.xlane.f32.xlu0 %v1004
        %v1006 = vpop.xlane.xlu0 %1005
        %v1007 = vsub.f32 %v999, %v1003
        %v1008 = vsub.f32 %v1000, %v1006
        %v1009 = vmul.f32 %v1007, 1.442695
        %v1010 = vpow.pop %v1009
        %v1011 = vmul.f32 %v1008, 1.442695
        %v1012 = vpow.pop %v1011
        %v1013 = vsel %vm798, %v1010, 0.0
        %1014 = vadd.xlane.f32.xlu0 %v1013
        %v1015 = vpop.xlane.xlu0 %1014
        %v1016 = vsel %vm798, %v1012, 0.0
        %1017 = vadd.xlane.f32.xlu0 %v1016
        %v1018 = vpop.xlane.xlu0 %1017
        %v1019 = vrcp.pop %v1015
        %v1020 = vrcp.pop %v1018
        %v1021 = vmul.f32 %v1015, %v1019
        %v1022 = vmul.f32 %v1018, %v1020
        %v1023 = vsub.f32 2.0, %v1021
        %v1024 = vsub.f32 2.0, %v1022
        %v1025 = vmul.f32 %v1019, %v1023
        %v1026 = vmul.f32 %v1020, %v1024
        %v1027 = vmul.f32 %v1010, %v1025
        %v1028 = vmul.f32 %v1012, %v1026
        %1031 = vrot.lane.b32.xlu0 %v700, 64
        %v1032 = vpop.permute.xlu0 %1031
        %1033 = vrot.lane.b32.xlu0 %v705, 64
        %v1034 = vpop.permute.xlu0 %1033
        %v1038 = vsel %vm798, %v1027, 0
        %v1041 = vsel %vm798, %v1028, 0
        %1043 = vmatprep.subr.mxu0 0.0
        %1044 = vmatpush1.msra.mxu0 %v1032
        %1045 = vmatprep.subr.mxu0 0.0
        %1046 = vmatpush1.msra.mxu0 %v1034
        %1047 = vmatprep.subr.mxu0 0.0
        %1048 = vmatpush1.msra.mxu0 0.0
        %1049 = vmatprep.subr.mxu0 0.0
        %1050 = vmatpush1.msra.mxu0 0.0
        %1051 = vmatprep.subr.mxu0 0.0
        %1052 = vmatpush1.msra.mxu0 0.0
        %1053 = vmatprep.subr.mxu0 0.0
        %1054 = vmatpush1.msra.mxu0 0.0
        %1055 = vmatprep.subr.mxu0 0.0
        %1056 = vmatpush1.msra.mxu0 0.0
        %1057 = vmatprep.subr.mxu0 0.0
        %1058 = vmatpush1.msra.mxu0 0.0
        %1059 = vmatprep.subr.mxu0 0.0
        %1060 = vmatpush1.msra.mxu0 0.0
        %1061 = vmatprep.subr.mxu0 0.0
        %1062 = vmatpush1.msra.mxu0 0.0
        %1063 = vmatprep.subr.mxu0 0.0
        %1064 = vmatpush1.msra.mxu0 0.0
        %1065 = vmatprep.subr.mxu0 0.0
        %1066 = vmatpush1.msra.mxu0 0.0
        %1067 = vmatprep.subr.mxu0 0.0
        %1068 = vmatpush1.msra.mxu0 0.0
        %1069 = vmatprep.subr.mxu0 0.0
        %1070 = vmatpush1.msra.mxu0 0.0
        %1071 = vmatprep.subr.mxu0 0.0
        %1072 = vmatpush1.msra.mxu0 0.0
        %1073 = vmatprep.subr.mxu0 0.0
        %1074 = vmatpush1.msra.mxu0 0.0
        %1075 = vmatprep.subr.mxu0 0.0
        %1076 = vmatpush1.msra.mxu0 0.0
        %1077 = vmatprep.subr.mxu0 0.0
        %1078 = vmatpush1.msra.mxu0 0.0
        %1079 = vmatprep.subr.mxu0 0.0
        %1080 = vmatpush1.msra.mxu0 0.0
        %1081 = vmatprep.subr.mxu0 0.0
        %1082 = vmatpush1.msra.mxu0 0.0
        %1083 = vmatprep.subr.mxu0 0.0
        %1084 = vmatpush1.msra.mxu0 0.0
        %1085 = vmatprep.subr.mxu0 0.0
        %1086 = vmatpush1.msra.mxu0 0.0
        %1087 = vmatprep.subr.mxu0 0.0
        %1088 = vmatpush1.msra.mxu0 0.0
        %1089 = vmatprep.subr.mxu0 0.0
        %1090 = vmatpush1.msra.mxu0 0.0
        %1091 = vmatprep.subr.mxu0 0.0
        %1092 = vmatpush1.msra.mxu0 0.0
        %1093 = vmatprep.subr.mxu0 0.0
        %1094 = vmatpush1.msra.mxu0 0.0
        %1095 = vmatprep.subr.mxu0 0.0
        %1096 = vmatpush1.msra.mxu0 0.0
        %1097 = vmatprep.subr.mxu0 0.0
        %1098 = vmatpush1.msra.mxu0 0.0
        %1099 = vmatprep.subr.mxu0 0.0
        %1100 = vmatpush1.msra.mxu0 0.0
        %1101 = vmatprep.subr.mxu0 0.0
        %1102 = vmatpush1.msra.mxu0 0.0
        %1103 = vmatprep.subr.mxu0 0.0
        %1104 = vmatpush1.msra.mxu0 0.0
        %1105 = vmatprep.subr.mxu0 0.0
        %1106 = vmatpush1.msra.mxu0 0.0
        %1107 = vmatprep.mubr.f32.mxu0 0.0
        %1108 = vmatmul.mubr.f32.gmra.mrb[0].mxu0 %v1038
        %v1109 = vpop.f32.mrb[0].mxu0
        %v1110 = vadd.f32 0.0, %v1109
        %v1111 = vpop.f32.mrb[0].mxu0
        %1112 = vmatprep.mubr.f32.mxu0 0.0
        %1113 = vmatmul.mubr.f32.gmra.mrb[0].mxu0 %v1041
        %v1114 = vpop.f32.mrb[0].mxu0
        %v1115 = vadd.f32 0.0, %v1114
        %v1116 = vpop.f32.mrb[0].mxu0
        %1117 = vdwg.mxu0
        %1120 = vrot.lane.b32.xlu0 %v1110, 64
        %v1121 = vpop.permute.xlu0 %1120
        %1122 = vrot.lane.b32.xlu0 %v1115, 64
        %v1123 = vpop.permute.xlu0 %1122
        %v1126 = vsel %vm708, %v900, %v1121
        %v1127 = vsel %vm708, %v905, %v1123
        %v1128 = vld [vmem:[#allocation8] sm:$0xf]
        %v1129 = vld [vmem:[#allocation8 + $0x4] sm:$0xf]
        %v1130 = vld [vmem:[#allocation8 + $0x8] sm:$0xf]
        %v1131 = vld [vmem:[#allocation8 + $0xc] sm:$0xf]
        %v1132 = vld [vmem:[#allocation8 + $0x10] sm:$0xf]
        %v1133 = vld [vmem:[#allocation8 + $0x14] sm:$0xf]
        %v1134 = vld [vmem:[#allocation8 + $0x18] sm:$0xf]
        %v1135 = vld [vmem:[#allocation8 + $0x1c] sm:$0xf]
        %v1136 = vld [vmem:[#allocation8 + $0x20] sm:$0xf]
        %v1137 = vld [vmem:[#allocation8 + $0x24] sm:$0xf]
        %v1138 = vld [vmem:[#allocation8 + $0x28] sm:$0xf]
        %v1139 = vld [vmem:[#allocation8 + $0x2c] sm:$0xf]
        %v1140 = vld [vmem:[#allocation8 + $0x30] sm:$0xf]
        %v1141 = vld [vmem:[#allocation8 + $0x34] sm:$0xf]
        %v1142 = vld [vmem:[#allocation8 + $0x38] sm:$0xf]
        %v1143 = vld [vmem:[#allocation8 + $0x3c] sm:$0xf]
        %v1144 = vunpack.c.l.bf16 %v1128
        %v1145 = vunpack.c.l.bf16 %v1129
        %v1146 = vunpack.c.l.bf16 %v1130
        %v1147 = vunpack.c.l.bf16 %v1131
        %v1148 = vunpack.c.l.bf16 %v1132
        %v1149 = vunpack.c.l.bf16 %v1133
        %v1150 = vunpack.c.l.bf16 %v1134
        %v1151 = vunpack.c.l.bf16 %v1135
        %v1152 = vunpack.c.l.bf16 %v1136
        %v1153 = vunpack.c.l.bf16 %v1137
        %v1154 = vunpack.c.l.bf16 %v1138
        %v1155 = vunpack.c.l.bf16 %v1139
        %v1156 = vunpack.c.l.bf16 %v1140
        %v1157 = vunpack.c.l.bf16 %v1141
        %v1158 = vunpack.c.l.bf16 %v1142
        %v1159 = vunpack.c.l.bf16 %v1143
        %v1160 = vlaneseq
        %v1161 = vshrl.u32 %v1160, 7
        %v1162 = vsub.s32 1, %v1161
        %v1163 = vrot.slane %v455, %v1162
        %1164 = vmatprep.subr.mxu0 0.0
        %1165 = vmatpush1.msra.mxu0 %v1144
        %1166 = vmatprep.subr.mxu0 0.0
        %1167 = vmatpush1.msra.mxu0 %v1145
        %1168 = vmatprep.subr.mxu0 0.0
        %1169 = vmatpush1.msra.mxu0 %v1146
        %1170 = vmatprep.subr.mxu0 0.0
        %1171 = vmatpush1.msra.mxu0 %v1147
        %1172 = vmatprep.subr.mxu0 0.0
        %1173 = vmatpush1.msra.mxu0 %v1148
        %1174 = vmatprep.subr.mxu0 0.0
        %1175 = vmatpush1.msra.mxu0 %v1149
        %1176 = vmatprep.subr.mxu0 0.0
        %1177 = vmatpush1.msra.mxu0 %v1150
        %1178 = vmatprep.subr.mxu0 0.0
        %1179 = vmatpush1.msra.mxu0 %v1151
        %1180 = vmatprep.subr.mxu0 0.0
        %1181 = vmatpush1.msra.mxu0 %v1152
        %1182 = vmatprep.subr.mxu0 0.0
        %1183 = vmatpush1.msra.mxu0 %v1153
        %1184 = vmatprep.subr.mxu0 0.0
        %1185 = vmatpush1.msra.mxu0 %v1154
        %1186 = vmatprep.subr.mxu0 0.0
        %1187 = vmatpush1.msra.mxu0 %v1155
        %1188 = vmatprep.subr.mxu0 0.0
        %1189 = vmatpush1.msra.mxu0 %v1156
        %1190 = vmatprep.subr.mxu0 0.0
        %1191 = vmatpush1.msra.mxu0 %v1157
        %1192 = vmatprep.subr.mxu0 0.0
        %1193 = vmatpush1.msra.mxu0 %v1158
        %1194 = vmatprep.subr.mxu0 0.0
        %1195 = vmatpush1.msra.mxu0 %v1159
        %1196 = vmatprep.subr.mxu0 0.0
        %1197 = vmatpush1.msra.mxu0 0.0
        %1198 = vmatprep.subr.mxu0 0.0
        %1199 = vmatpush1.msra.mxu0 0.0
        %1200 = vmatprep.subr.mxu0 0.0
        %1201 = vmatpush1.msra.mxu0 0.0
        %1202 = vmatprep.subr.mxu0 0.0
        %1203 = vmatpush1.msra.mxu0 0.0
        %1204 = vmatprep.subr.mxu0 0.0
        %1205 = vmatpush1.msra.mxu0 0.0
        %1206 = vmatprep.subr.mxu0 0.0
        %1207 = vmatpush1.msra.mxu0 0.0
        %1208 = vmatprep.subr.mxu0 0.0
        %1209 = vmatpush1.msra.mxu0 0.0
        %1210 = vmatprep.subr.mxu0 0.0
        %1211 = vmatpush1.msra.mxu0 0.0
        %1212 = vmatprep.subr.mxu0 0.0
        %1213 = vmatpush1.msra.mxu0 0.0
        %1214 = vmatprep.subr.mxu0 0.0
        %1215 = vmatpush1.msra.mxu0 0.0
        %1216 = vmatprep.subr.mxu0 0.0
        %1217 = vmatpush1.msra.mxu0 0.0
        %1218 = vmatprep.subr.mxu0 0.0
        %1219 = vmatpush1.msra.mxu0 0.0
        %1220 = vmatprep.subr.mxu0 0.0
        %1221 = vmatpush1.msra.mxu0 0.0
        %1222 = vmatprep.subr.mxu0 0.0
        %1223 = vmatpush1.msra.mxu0 0.0
        %1224 = vmatprep.subr.mxu0 0.0
        %1225 = vmatpush1.msra.mxu0 0.0
        %1226 = vmatprep.subr.mxu0 0.0
        %1227 = vmatpush1.msra.mxu0 0.0
        %1228 = vmatprep.mubr.f32.mxu0 0.0
        %1229 = vmatmul.mubr.f32.gmra.mrb[0].mxu0 %v1126
        %v1230 = vpop.f32.mrb[0].mxu0
        %v1231 = vadd.f32 %v1163, %v1230
        %v1232 = vpop.f32.mrb[0].mxu0
        %1233 = vmatprep.mubr.f32.mxu0 0.0
        %1234 = vmatmul.mubr.f32.gmra.mrb[0].mxu0 %v1127
        %v1235 = vpop.f32.mrb[0].mxu0
        %v1236 = vadd.f32 %v1163, %v1235
        %v1237 = vpop.f32.mrb[0].mxu0
        %1238 = vdwg.mxu0
        %v1239 = vadd.f32 %v462, %v1231
        %v1240 = vadd.f32 %v463, %v1236
        %1241 = vadd.xlane.f32.xlu0 %v1239
        %v1242 = vpop.xlane.xlu0 %1241
        %1243 = vadd.xlane.f32.xlu0 %v1240
        %v1244 = vpop.xlane.xlu0 %1243
        %v1245 = vrcp.pop 128.0
        %v1246 = vmul.f32 %v1242, %v1245
        %v1247 = vmul.f32 %v1244, %v1245
        %v1248 = vsub.f32 %v1239, %v1246
        %v1249 = vsub.f32 %v1240, %v1247
        %v1250 = vmul.f32 %v1248, %v1248
        %v1251 = vmul.f32 %v1249, %v1249
        %1252 = vadd.xlane.f32.xlu0 %v1250
        %v1253 = vpop.xlane.xlu0 %1252
        %1254 = vadd.xlane.f32.xlu0 %v1251
        %v1255 = vpop.xlane.xlu0 %1254
        %v1256 = vmul.f32 %v1253, %v1245
        %v1257 = vmul.f32 %v1255, %v1245
        %v1258 = vadd.f32 %v1256, 1e-05
        %v1259 = vadd.f32 %v1257, 1e-05
        %v1260 = vrsqrt.pop %v1258
        %v1261 = vrsqrt.pop %v1259
        %v1262 = vmul.f32 %v1248, %v1260
        %v1263 = vmul.f32 %v1249, %v1261
        %v1264 = vlaneseq
        %v1265 = vshrl.u32 %v1264, 7
        %v1266 = vsub.s32 2, %v1265
        %v1267 = vrot.slane %v455, %v1266
        %v1268 = vmul.f32 %v1262, %v1267
        %v1269 = vmul.f32 %v1263, %v1267
        %v1270 = vlaneseq
        %v1271 = vshrl.u32 %v1270, 7
        %v1272 = vsub.s32 3, %v1271
        %v1273 = vrot.slane %v455, %v1272
        %v1274 = vadd.f32 %v1268, %v1273
        %v1275 = vadd.f32 %v1269, %v1273
        %v1276 = vld [vmem:[#allocation10] sm:$0xff]
        %v1277 = vld [vmem:[#allocation10 + $0x8] sm:$0xff]
        %v1278 = vld [vmem:[#allocation10 + $0x10] sm:$0xff]
        %v1279 = vld [vmem:[#allocation10 + $0x18] sm:$0xff]
        %v1280 = vld [vmem:[#allocation10 + $0x20] sm:$0xff]
        %v1281 = vld [vmem:[#allocation10 + $0x28] sm:$0xff]
        %v1282 = vld [vmem:[#allocation10 + $0x30] sm:$0xff]
        %v1283 = vld [vmem:[#allocation10 + $0x38] sm:$0xff]
        %v1284 = vld [vmem:[#allocation10 + $0x40] sm:$0xff]
        %v1285 = vld [vmem:[#allocation10 + $0x48] sm:$0xff]
        %v1286 = vld [vmem:[#allocation10 + $0x50] sm:$0xff]
        %v1287 = vld [vmem:[#allocation10 + $0x58] sm:$0xff]
        %v1288 = vld [vmem:[#allocation10 + $0x60] sm:$0xff]
        %v1289 = vld [vmem:[#allocation10 + $0x68] sm:$0xff]
        %v1290 = vld [vmem:[#allocation10 + $0x70] sm:$0xff]
        %v1291 = vld [vmem:[#allocation10 + $0x78] sm:$0xff]
        %v1292 = vunpack.c.l.bf16 %v1276
        %v1293 = vunpack.c.h.bf16 %v1276
        %v1294 = vunpack.c.l.bf16 %v1277
        %v1295 = vunpack.c.h.bf16 %v1277
        %v1296 = vunpack.c.l.bf16 %v1278
        %v1297 = vunpack.c.h.bf16 %v1278
        %v1298 = vunpack.c.l.bf16 %v1279
        %v1299 = vunpack.c.h.bf16 %v1279
        %v1300 = vunpack.c.l.bf16 %v1280
        %v1301 = vunpack.c.h.bf16 %v1280
        %v1302 = vunpack.c.l.bf16 %v1281
        %v1303 = vunpack.c.h.bf16 %v1281
        %v1304 = vunpack.c.l.bf16 %v1282
        %v1305 = vunpack.c.h.bf16 %v1282
        %v1306 = vunpack.c.l.bf16 %v1283
        %v1307 = vunpack.c.h.bf16 %v1283
        %v1308 = vunpack.c.l.bf16 %v1284
        %v1309 = vunpack.c.h.bf16 %v1284
        %v1310 = vunpack.c.l.bf16 %v1285
        %v1311 = vunpack.c.h.bf16 %v1285
        %v1312 = vunpack.c.l.bf16 %v1286
        %v1313 = vunpack.c.h.bf16 %v1286
        %v1314 = vunpack.c.l.bf16 %v1287
        %v1315 = vunpack.c.h.bf16 %v1287
        %v1316 = vunpack.c.l.bf16 %v1288
        %v1317 = vunpack.c.h.bf16 %v1288
        %v1318 = vunpack.c.l.bf16 %v1289
        %v1319 = vunpack.c.h.bf16 %v1289
        %v1320 = vunpack.c.l.bf16 %v1290
        %v1321 = vunpack.c.h.bf16 %v1290
        %v1322 = vunpack.c.l.bf16 %v1291
        %v1323 = vunpack.c.h.bf16 %v1291
        %v1324 = vlaneseq
        %v1325 = vshrl.u32 %v1324, 7
        %v1326 = vsub.s32 4, %v1325
        %v1327 = vrot.slane %v455, %v1326
        %v1328 = vlaneseq
        %v1329 = vshrl.u32 %v1328, 7
        %v1330 = vsub.s32 4, %v1329
        %v1331 = vrot.slane %v456, %v1330
        %1332 = vmatprep.subr.mxu0 %v1293
        %1333 = vmatpush1.msra.mxu0 %v1292
        %1334 = vmatprep.subr.mxu0 %v1295
        %1335 = vmatpush1.msra.mxu0 %v1294
        %1336 = vmatprep.subr.mxu0 %v1297
        %1337 = vmatpush1.msra.mxu0 %v1296
        %1338 = vmatprep.subr.mxu0 %v1299
        %1339 = vmatpush1.msra.mxu0 %v1298
        %1340 = vmatprep.subr.mxu0 %v1301
        %1341 = vmatpush1.msra.mxu0 %v1300
        %1342 = vmatprep.subr.mxu0 %v1303
        %1343 = vmatpush1.msra.mxu0 %v1302
        %1344 = vmatprep.subr.mxu0 %v1305
        %1345 = vmatpush1.msra.mxu0 %v1304
        %1346 = vmatprep.subr.mxu0 %v1307
        %1347 = vmatpush1.msra.mxu0 %v1306
        %1348 = vmatprep.subr.mxu0 %v1309
        %1349 = vmatpush1.msra.mxu0 %v1308
        %1350 = vmatprep.subr.mxu0 %v1311
        %1351 = vmatpush1.msra.mxu0 %v1310
        %1352 = vmatprep.subr.mxu0 %v1313
        %1353 = vmatpush1.msra.mxu0 %v1312
        %1354 = vmatprep.subr.mxu0 %v1315
        %1355 = vmatpush1.msra.mxu0 %v1314
        %1356 = vmatprep.subr.mxu0 %v1317
        %1357 = vmatpush1.msra.mxu0 %v1316
        %1358 = vmatprep.subr.mxu0 %v1319
        %1359 = vmatpush1.msra.mxu0 %v1318
        %1360 = vmatprep.subr.mxu0 %v1321
        %1361 = vmatpush1.msra.mxu0 %v1320
        %1362 = vmatprep.subr.mxu0 %v1323
        %1363 = vmatpush1.msra.mxu0 %v1322
        %1364 = vmatprep.subr.mxu0 0.0
        %1365 = vmatpush1.msra.mxu0 0.0
        %1366 = vmatprep.subr.mxu0 0.0
        %1367 = vmatpush1.msra.mxu0 0.0
        %1368 = vmatprep.subr.mxu0 0.0
        %1369 = vmatpush1.msra.mxu0 0.0
        %1370 = vmatprep.subr.mxu0 0.0
        %1371 = vmatpush1.msra.mxu0 0.0
        %1372 = vmatprep.subr.mxu0 0.0
        %1373 = vmatpush1.msra.mxu0 0.0
        %1374 = vmatprep.subr.mxu0 0.0
        %1375 = vmatpush1.msra.mxu0 0.0
        %1376 = vmatprep.subr.mxu0 0.0
        %1377 = vmatpush1.msra.mxu0 0.0
        %1378 = vmatprep.subr.mxu0 0.0
        %1379 = vmatpush1.msra.mxu0 0.0
        %1380 = vmatprep.subr.mxu0 0.0
        %1381 = vmatpush1.msra.mxu0 0.0
        %1382 = vmatprep.subr.mxu0 0.0
        %1383 = vmatpush1.msra.mxu0 0.0
        %1384 = vmatprep.subr.mxu0 0.0
        %1385 = vmatpush1.msra.mxu0 0.0
        %1386 = vmatprep.subr.mxu0 0.0
        %1387 = vmatpush1.msra.mxu0 0.0
        %1388 = vmatprep.subr.mxu0 0.0
        %1389 = vmatpush1.msra.mxu0 0.0
        %1390 = vmatprep.subr.mxu0 0.0
        %1391 = vmatpush1.msra.mxu0 0.0
        %1392 = vmatprep.subr.mxu0 0.0
        %1393 = vmatpush1.msra.mxu0 0.0
        %1394 = vmatprep.subr.mxu0 0.0
        %1395 = vmatpush1.msra.mxu0 0.0
        %1396 = vmatprep.mubr.f32.mxu0 0.0
        %1397 = vmatmul.mubr.f32.gmra.mrb[0].mxu0 %v1274
        %v1398 = vpop.f32.mrb[0].mxu0
        %v1399 = vadd.f32 %v1327, %v1398
        %v1400 = vpop.f32.mrb[0].mxu0
        %v1401 = vadd.f32 %v1331, %v1400
        %1402 = vmatprep.mubr.f32.mxu0 0.0
        %1403 = vmatmul.mubr.f32.gmra.mrb[0].mxu0 %v1275
        %v1404 = vpop.f32.mrb[0].mxu0
        %v1405 = vadd.f32 %v1327, %v1404
        %v1406 = vpop.f32.mrb[0].mxu0
        %v1407 = vadd.f32 %v1331, %v1406
        %1408 = vdwg.mxu0
        %v1409 = vmax.f32 %v1399, 0.0
        %v1410 = vmax.f32 %v1401, 0.0
        %v1411 = vmax.f32 %v1405, 0.0
        %v1412 = vmax.f32 %v1407, 0.0
        %v1413 = vld [vmem:[#allocation11] sm:$0xf]
        %v1414 = vld [vmem:[#allocation11 + $0x4] sm:$0xf]
        %v1415 = vld [vmem:[#allocation11 + $0x8] sm:$0xf]
        %v1416 = vld [vmem:[#allocation11 + $0xc] sm:$0xf]
        %v1417 = vld [vmem:[#allocation11 + $0x10] sm:$0xf]
        %v1418 = vld [vmem:[#allocation11 + $0x14] sm:$0xf]
        %v1419 = vld [vmem:[#allocation11 + $0x18] sm:$0xf]
        %v1420 = vld [vmem:[#allocation11 + $0x1c] sm:$0xf]
        %v1421 = vld [vmem:[#allocation11 + $0x20] sm:$0xf]
        %v1422 = vld [vmem:[#allocation11 + $0x24] sm:$0xf]
        %v1423 = vld [vmem:[#allocation11 + $0x28] sm:$0xf]
        %v1424 = vld [vmem:[#allocation11 + $0x2c] sm:$0xf]
        %v1425 = vld [vmem:[#allocation11 + $0x30] sm:$0xf]
        %v1426 = vld [vmem:[#allocation11 + $0x34] sm:$0xf]
        %v1427 = vld [vmem:[#allocation11 + $0x38] sm:$0xf]
        %v1428 = vld [vmem:[#allocation11 + $0x3c] sm:$0xf]
        %v1429 = vld [vmem:[#allocation11 + $0x40] sm:$0xf]
        %v1430 = vld [vmem:[#allocation11 + $0x44] sm:$0xf]
        %v1431 = vld [vmem:[#allocation11 + $0x48] sm:$0xf]
        %v1432 = vld [vmem:[#allocation11 + $0x4c] sm:$0xf]
        %v1433 = vld [vmem:[#allocation11 + $0x50] sm:$0xf]
        %v1434 = vld [vmem:[#allocation11 + $0x54] sm:$0xf]
        %v1435 = vld [vmem:[#allocation11 + $0x58] sm:$0xf]
        %v1436 = vld [vmem:[#allocation11 + $0x5c] sm:$0xf]
        %v1437 = vld [vmem:[#allocation11 + $0x60] sm:$0xf]
        %v1438 = vld [vmem:[#allocation11 + $0x64] sm:$0xf]
        %v1439 = vld [vmem:[#allocation11 + $0x68] sm:$0xf]
        %v1440 = vld [vmem:[#allocation11 + $0x6c] sm:$0xf]
        %v1441 = vld [vmem:[#allocation11 + $0x70] sm:$0xf]
        %v1442 = vld [vmem:[#allocation11 + $0x74] sm:$0xf]
        %v1443 = vld [vmem:[#allocation11 + $0x78] sm:$0xf]
        %v1444 = vld [vmem:[#allocation11 + $0x7c] sm:$0xf]
        %v1445 = vunpack.c.l.bf16 %v1413
        %v1446 = vunpack.c.l.bf16 %v1414
        %v1447 = vunpack.c.l.bf16 %v1415
        %v1448 = vunpack.c.l.bf16 %v1416
        %v1449 = vunpack.c.l.bf16 %v1417
        %v1450 = vunpack.c.l.bf16 %v1418
        %v1451 = vunpack.c.l.bf16 %v1419
        %v1452 = vunpack.c.l.bf16 %v1420
        %v1453 = vunpack.c.l.bf16 %v1421
        %v1454 = vunpack.c.l.bf16 %v1422
        %v1455 = vunpack.c.l.bf16 %v1423
        %v1456 = vunpack.c.l.bf16 %v1424
        %v1457 = vunpack.c.l.bf16 %v1425
        %v1458 = vunpack.c.l.bf16 %v1426
        %v1459 = vunpack.c.l.bf16 %v1427
        %v1460 = vunpack.c.l.bf16 %v1428
        %v1461 = vunpack.c.l.bf16 %v1429
        %v1462 = vunpack.c.l.bf16 %v1430
        %v1463 = vunpack.c.l.bf16 %v1431
        %v1464 = vunpack.c.l.bf16 %v1432
        %v1465 = vunpack.c.l.bf16 %v1433
        %v1466 = vunpack.c.l.bf16 %v1434
        %v1467 = vunpack.c.l.bf16 %v1435
        %v1468 = vunpack.c.l.bf16 %v1436
        %v1469 = vunpack.c.l.bf16 %v1437
        %v1470 = vunpack.c.l.bf16 %v1438
        %v1471 = vunpack.c.l.bf16 %v1439
        %v1472 = vunpack.c.l.bf16 %v1440
        %v1473 = vunpack.c.l.bf16 %v1441
        %v1474 = vunpack.c.l.bf16 %v1442
        %v1475 = vunpack.c.l.bf16 %v1443
        %v1476 = vunpack.c.l.bf16 %v1444
        %v1477 = vlaneseq
        %v1478 = vshrl.u32 %v1477, 7
        %v1479 = vsub.s32 5, %v1478
        %v1480 = vrot.slane %v455, %v1479
        %1481 = vmatprep.subr.mxu0 0.0
        %1482 = vmatpush1.msra.mxu0 %v1445
        %1483 = vmatprep.subr.mxu0 0.0
        %1484 = vmatpush1.msra.mxu0 %v1446
        %1485 = vmatprep.subr.mxu0 0.0
        %1486 = vmatpush1.msra.mxu0 %v1447
        %1487 = vmatprep.subr.mxu0 0.0
        %1488 = vmatpush1.msra.mxu0 %v1448
        %1489 = vmatprep.subr.mxu0 0.0
        %1490 = vmatpush1.msra.mxu0 %v1449
        %1491 = vmatprep.subr.mxu0 0.0
        %1492 = vmatpush1.msra.mxu0 %v1450
        %1493 = vmatprep.subr.mxu0 0.0
        %1494 = vmatpush1.msra.mxu0 %v1451
        %1495 = vmatprep.subr.mxu0 0.0
        %1496 = vmatpush1.msra.mxu0 %v1452
        %1497 = vmatprep.subr.mxu0 0.0
        %1498 = vmatpush1.msra.mxu0 %v1453
        %1499 = vmatprep.subr.mxu0 0.0
        %1500 = vmatpush1.msra.mxu0 %v1454
        %1501 = vmatprep.subr.mxu0 0.0
        %1502 = vmatpush1.msra.mxu0 %v1455
        %1503 = vmatprep.subr.mxu0 0.0
        %1504 = vmatpush1.msra.mxu0 %v1456
        %1505 = vmatprep.subr.mxu0 0.0
        %1506 = vmatpush1.msra.mxu0 %v1457
        %1507 = vmatprep.subr.mxu0 0.0
        %1508 = vmatpush1.msra.mxu0 %v1458
        %1509 = vmatprep.subr.mxu0 0.0
        %1510 = vmatpush1.msra.mxu0 %v1459
        %1511 = vmatprep.subr.mxu0 0.0
        %1512 = vmatpush1.msra.mxu0 %v1460
        %1513 = vmatprep.subr.mxu0 0.0
        %1514 = vmatpush1.msra.mxu0 %v1461
        %1515 = vmatprep.subr.mxu0 0.0
        %1516 = vmatpush1.msra.mxu0 %v1462
        %1517 = vmatprep.subr.mxu0 0.0
        %1518 = vmatpush1.msra.mxu0 %v1463
        %1519 = vmatprep.subr.mxu0 0.0
        %1520 = vmatpush1.msra.mxu0 %v1464
        %1521 = vmatprep.subr.mxu0 0.0
        %1522 = vmatpush1.msra.mxu0 %v1465
        %1523 = vmatprep.subr.mxu0 0.0
        %1524 = vmatpush1.msra.mxu0 %v1466
        %1525 = vmatprep.subr.mxu0 0.0
        %1526 = vmatpush1.msra.mxu0 %v1467
        %1527 = vmatprep.subr.mxu0 0.0
        %1528 = vmatpush1.msra.mxu0 %v1468
        %1529 = vmatprep.subr.mxu0 0.0
        %1530 = vmatpush1.msra.mxu0 %v1469
        %1531 = vmatprep.subr.mxu0 0.0
        %1532 = vmatpush1.msra.mxu0 %v1470
        %1533 = vmatprep.subr.mxu0 0.0
        %1534 = vmatpush1.msra.mxu0 %v1471
        %1535 = vmatprep.subr.mxu0 0.0
        %1536 = vmatpush1.msra.mxu0 %v1472
        %1537 = vmatprep.subr.mxu0 0.0
        %1538 = vmatpush1.msra.mxu0 %v1473
        %1539 = vmatprep.subr.mxu0 0.0
        %1540 = vmatpush1.msra.mxu0 %v1474
        %1541 = vmatprep.subr.mxu0 0.0
        %1542 = vmatpush1.msra.mxu0 %v1475
        %1543 = vmatprep.subr.mxu0 0.0
        %1544 = vmatpush1.msra.mxu0 %v1476
        %1545 = vmatprep.mubr.f32.mxu0 %v1410
        %1546 = vmatmul.mubr.f32.gmra.mrb[0].mxu0 %v1409
        %v1547 = vpop.f32.mrb[0].mxu0
        %v1548 = vadd.f32 %v1480, %v1547
        %v1549 = vpop.f32.mrb[0].mxu0
        %1550 = vmatprep.mubr.f32.mxu0 %v1412
        %1551 = vmatmul.mubr.f32.gmra.mrb[0].mxu0 %v1411
        %v1552 = vpop.f32.mrb[0].mxu0
        %v1553 = vadd.f32 %v1480, %v1552
        %v1554 = vpop.f32.mrb[0].mxu0
        %1555 = vdwg.mxu0
        %v1556 = vadd.f32 %v1274, %v1548
        %v1557 = vadd.f32 %v1275, %v1553
        %1558 = vadd.xlane.f32.xlu0 %v1556
        %v1559 = vpop.xlane.xlu0 %1558
        %1560 = vadd.xlane.f32.xlu0 %v1557
        %v1561 = vpop.xlane.xlu0 %1560
        %v1562 = vmul.f32 %v1559, %v1245
        %v1563 = vmul.f32 %v1561, %v1245
        %v1564 = vsub.f32 %v1556, %v1562
        %v1565 = vsub.f32 %v1557, %v1563
        %v1566 = vmul.f32 %v1564, %v1564
        %v1567 = vmul.f32 %v1565, %v1565
        %1568 = vadd.xlane.f32.xlu0 %v1566
        %v1569 = vpop.xlane.xlu0 %1568
        %1570 = vadd.xlane.f32.xlu0 %v1567
        %v1571 = vpop.xlane.xlu0 %1570
        %v1572 = vmul.f32 %v1569, %v1245
        %v1573 = vmul.f32 %v1571, %v1245
        %v1574 = vadd.f32 %v1572, 1e-05
        %v1575 = vadd.f32 %v1573, 1e-05
        %v1576 = vrsqrt.pop %v1574
        %v1577 = vrsqrt.pop %v1575
        %v1578 = vmul.f32 %v1564, %v1576
        %v1579 = vmul.f32 %v1565, %v1577
        %v1580 = vlaneseq
        %v1581 = vshrl.u32 %v1580, 7
        %v1582 = vsub.s32 6, %v1581
        %v1583 = vrot.slane %v455, %v1582
        %v1584 = vmul.f32 %v1578, %v1583
        %v1585 = vmul.f32 %v1579, %v1583
        %v1586 = vlaneseq
        %v1587 = vshrl.u32 %v1586, 7
        %v1588 = vsub.s32 7, %v1587
        %v1589 = vrot.slane %v455, %v1588
        %v1590 = vadd.f32 %v1584, %v1589
        %v1591 = vadd.f32 %v1585, %v1589
        %1592 = vst [vmem:[%s454] sm:$0xff] %v1590
        %1593 = vst [vmem:[%s454 + $0x8] sm:$0xff] %v1591
        %s1594 = sand.u32 %s228, 1
        %s1595 = scalar_lea.sflag [#allocation4], %s1594
        %s1596 = sand.u32 %s228, 1
        %s1597 = smul.addr %s1596, 16
        %s1598 = scalar_lea.vmem [#allocation14], %s1597
        // Predicated region
        $region77: #{tpu_custom_call.1} parent=47 // pred_check
          %p1599 = pneg %p238
        $region78: #{tpu_custom_call.1} parent=47 // pred_check_branch
          %1601 = sbr.rel (%p1599) target = $region80
        $region79: #{tpu_custom_call.1} parent=47 // pred_region
          %s1603 = ssub.s32 256, 256
          %1604 = vsyncadd %s1595, %s1603
          %s1605 = smul.addr %s31, 2
          %s1606 = smul.addr %s32, 8
          %s1607 = sadd.s32 %s1605, %s1606
          %s1608 = smul.addr %s1607, 128
          %s1609 = scalar_lea.hbm %s7, %s1608
          %s1610 = sshll.u32 %s1598, 4
          %s1611 = int_to_ptr.vmem [resolvable:$true] %s1610
          %1616 = dma.vmem_to_hbm [thread:$0]  %s1611, 256, %s1609, %s1595, 128, 128, 8
        $region80: #{tpu_custom_call.1} parent=47 // pred_fallthru
          _
      $region48: #{tpu_custom_call.1} parent=5 // pred_fallthru
        _
      %p1617 = scmp.le.s32.totalorder 2, %s22
      // Predicated region
      $region81: #{tpu_custom_call.1} parent=5 // pred_check
        %p1618 = pneg %p1617
      $region82: #{tpu_custom_call.1} parent=5 // pred_check_branch
        %1620 = sbr.rel (%p1618) target = $region84
      $region83: #{tpu_custom_call.1} parent=5 // pred_region
        %s1621 = ssub.s32 %s22, 2
        // Predicated region
        $region85: #{tpu_custom_call.1} parent=83 // pred_check
          %p1622 = pneg %p244
        $region86: #{tpu_custom_call.1} parent=83 // pred_check_branch
          %1624 = sbr.rel (%p1622) target = $region88
        $region87: #{tpu_custom_call.1} parent=83 // pred_region
          %s1625 = sand.u32 %s229, 1
          %s1626 = scalar_lea.sflag [#allocation4], %s1625
          %s1627 = sand.u32 %s229, 1
          %s1628 = smul.addr %s1627, 16
          %s1629 = scalar_lea.vmem [#allocation14], %s1628
          %1630 = dma.done %s1626, 256
        $region88: #{tpu_custom_call.1} parent=83 // pred_fallthru
          _
      $region84: #{tpu_custom_call.1} parent=5 // pred_fallthru
        _
    $region6: #{tpu_custom_call.1} parent=1 // loop_footer
      %s26 = sadd.s32 1, %s22
    $region7: #{tpu_custom_call.1} parent=1 // loop_footer_branch
      %21 = sbr.rel target = $region3
    $region8: #{tpu_custom_call.1} parent=1 // loop_exit
      _
    %1631 = vsyncpa [#allocation3], 1
    %s1632 = scalar_lea.sflag [#allocation3], 1
    %1633 = vsyncpa %s1632, 1
    %1634 = vsyncpa [#allocation6], 1
    %1635 = vsyncpa [#allocation9], 1
    %1636 = vsyncpa [#allocation12], 1
    %1637 = vsyncpa [#allocation4], 1
    %s1638 = scalar_lea.sflag [#allocation4], 1
    %1639 = vsyncpa %s1638, 1

// kernel: tpu_custom_call.1
$region0: #{tpu_custom_call.1}
  #allocation0 [shape = 'u32[]', space=smem, size = 0x4, offset = 0x4, fixed_abs, tag = 'smem constant byte address 0x4 - core index']
  #allocation1 [shape = 'u32[144,128]{1,0:T(1,128)}', space=vmem, size = 0x12000, scoped, tag = 'internal scratch']
  %s0 = inlined_call_operand.hbm [shape: f32[2,4,16,128], index: 0, kind: input, shape index: {}]
  %s1 = inlined_call_operand.hbm [shape: f32[16,128], index: 1, kind: input, shape index: {}]
  %s2 = inlined_call_operand.hbm [shape: bf16[4,128,384], index: 2, kind: input, shape index: {}]
  %s3 = inlined_call_operand.hbm [shape: bf16[4,128,128], index: 3, kind: input, shape index: {}]
  %s4 = inlined_call_operand.hbm [shape: bf16[4,128,256], index: 4, kind: input, shape index: {}]
  %s5 = inlined_call_operand.hbm [shape: bf16[4,256,128], index: 5, kind: input, shape index: {}]
  %s6 = inlined_call_operand.hbm [shape: f32[4,8,384], index: 6, kind: input, shape index: {}]
  %s7 = inlined_call_operand.hbm [shape: f32[2,4,16,128], index: 7, kind: output, shape index: {}]
  %s8 = sld [smem:[#allocation0]]
  $region89: #{tpu_custom_call.1} parent=0
    _
  %s10 = ssub.s32 1, %s8
  %s11 = scalar_select 0, %s10, %s8
  $region1: #{tpu_custom_call.1} parent=0
    #allocation2 [shape = 'u8[16384]{0}', space=vmem, size = 0x4000, scoped, tag = 'input window, operand 0']
    #allocation3 [shape = 's32[2]{0}', space=sflag, size = 0x8, scoped, tag = 'scoped memory for tpu_custom_call.1']
    #allocation4 [shape = 's32[2]{0}', space=sflag, size = 0x8, scoped, tag = 'scoped memory for tpu_custom_call.1']
    #allocation5 [shape = 'u8[8192]{0}', space=vmem, size = 0x2000, scoped, tag = 'input window, operand 1, single buffered']
    #allocation6 [shape = 's32[1]{0}', space=sflag, size = 0x4, scoped, tag = 'scoped memory for tpu_custom_call.1']
    #allocation7 [shape = 'u8[196608]{0}', space=vmem, size = 0x30000, scoped, tag = 'input window, operand 2']
    #allocation8 [shape = 'u8[65536]{0}', space=vmem, size = 0x10000, scoped, tag = 'input window, operand 3']
    #allocation9 [shape = 'u8[131072]{0}', space=vmem, size = 0x20000, scoped, tag = 'input window, operand 4']
    #allocation10 [shape = 'u8[131072]{0}', space=vmem, size = 0x20000, scoped, tag = 'input window, operand 5']
    #allocation11 [shape = 'u8[24576]{0}', space=vmem, size = 0x6000, scoped, tag = 'input window, operand 6']
    #allocation12 [shape = 'u8[16384]{0}', space=vmem, size = 0x4000, scoped, tag = 'output window, operand 0']
    %12 = vsyncpa [#allocation3], 0
    %s13 = scalar_lea.sflag [#allocation3], 1
    %14 = vsyncpa %s13, 0
    %15 = vsyncpa [#allocation6], 0
    %16 = vsyncpa [#allocation4], 0
    %s17 = scalar_lea.sflag [#allocation4], 1
    %18 = vsyncpa %s17, 0
    loop: start=0, step=1, limit=10
    $region2: #{tpu_custom_call.1} parent=1 // loop_pre_header
      _
    $region3: #{tpu_custom_call.1} parent=1 // loop_header
      %s20 = sphi 0, %s24
      %p21 = scmp.ge.s32.totalorder %s20, 10
      %s27 = sphi 0, %s39
      %s28 = sphi 0, %s35
      %s29 = sphi 0, %s27
      %s30 = sphi 0, %s28
      %s31 = sphi 0, %s29
      %s32 = sphi 0, %s30
      %s44 = sphi 0, %s46
      %s47 = sphi 0, %s44
      %s48 = sphi 0, %s47
      %s64 = sphi 0, %s48
      %s68 = sphi 0, %s68
      %s70 = sphi 0, %s68
      %s71 = sphi 0, %s70
      %s85 = sphi 0, %s71
      %s91 = sphi 0, %s93
      %s94 = sphi 0, %s91
      %s95 = sphi 0, %s94
      %s111 = sphi 0, %s95
      %s117 = sphi 0, %s119
      %s120 = sphi 0, %s117
      %s121 = sphi 0, %s120
      %s137 = sphi 0, %s121
      %s143 = sphi 0, %s145
      %s146 = sphi 0, %s143
      %s147 = sphi 0, %s146
      %s163 = sphi 0, %s147
      %s169 = sphi 0, %s171
      %s172 = sphi 0, %s169
      %s173 = sphi 0, %s172
      %s189 = sphi 0, %s173
      %s195 = sphi 0, %s197
      %s198 = sphi 0, %s195
      %s199 = sphi 0, %s198
      %s215 = sphi 0, %s199
      %s223 = sphi 0, %s225
      %s226 = sphi 0, %s223
      %s227 = sphi 0, %s226
      %s243 = sphi 0, %s227
    $region4: #{tpu_custom_call.1} parent=1 // loop_header_branch
      %23 = sbr.rel (%p21) target = $region8
    $region5: #{tpu_custom_call.1} parent=1 // loop_body
      %s25 = ssub.s32 %s20, 1
      %s26 = ssub.s32 %s20, 2
      %s33 = sadd.s32 1, %s28
      %p34 = scmp.ge.s32.totalorder %s33, 2
      %s35 = scalar_select %p34, 0, %s33
      %s36 = sadd.s32 1, %s27
      %s37 = scalar_select %p34, %s36, %s27
      %p38 = scmp.ge.s32.totalorder %s37, 4
      %s39 = scalar_select %p38, 0, %s37
      %s40 = ssub.s32 %s28, %s35
      %s41 = ssub.s32 %s27, %s39
      %s42 = sor.u32 %s40, %s41
      %p43 = scmp.eq.s32.totalorder %s42, 0
      %s45 = sadd.s32 %s44, 1
      %s46 = scalar_select %p43, %s44, %s45
      %p49 = pneg %p43
      %p50 = scmp.eq.s32.totalorder %s20, 7
      %p51 = por %p49, %p50
      %p52 = scmp.ne.s32.totalorder %s44, %s47
      %p53 = scmp.eq.s32.totalorder %s20, 0
      %p54 = por %p52, %p53
      %p55 = scmp.ne.s32.totalorder %s44, %s47
      %p56 = scmp.eq.s32.totalorder %s25, 7
      %p57 = por %p55, %p56
      %p58 = scmp.ne.s32.totalorder %s47, %s48
      %p59 = scmp.eq.s32.totalorder %s25, 0
      %p60 = por %p58, %p59
      %p61 = scmp.ne.s32.totalorder %s47, %s48
      %p62 = scmp.eq.s32.totalorder %s26, 7
      %p63 = por %p61, %p62
      %p65 = scmp.ne.s32.totalorder %s48, %s64
      %p66 = scmp.eq.s32.totalorder %s26, 0
      %p67 = por %p65, %p66
      %s69 = sadd.s32 %s68, 1
      %p72 = scmp.eq.s32.totalorder %s20, 7
      %p73 = scmp.ne.s32.totalorder %s68, %s70
      %p74 = scmp.eq.s32.totalorder %s20, 0
      %p75 = por %p73, %p74
      %p76 = scmp.ne.s32.totalorder %s68, %s70
      %p77 = scmp.eq.s32.totalorder %s25, 7
      %p78 = por %p76, %p77
      %p79 = scmp.ne.s32.totalorder %s70, %s71
      %p80 = scmp.eq.s32.totalorder %s25, 0
      %p81 = por %p79, %p80
      %p82 = scmp.ne.s32.totalorder %s70, %s71
      %p83 = scmp.eq.s32.totalorder %s26, 7
      %p84 = por %p82, %p83
      %p86 = scmp.ne.s32.totalorder %s71, %s85
      %p87 = scmp.eq.s32.totalorder %s26, 0
      %p88 = por %p86, %p87
      %s89 = ssub.s32 %s27, %s39
      %p90 = scmp.eq.s32.totalorder %s89, 0
      %s92 = sadd.s32 %s91, 1
      %s93 = scalar_select %p90, %s91, %s92
      %p96 = pneg %p90
      %p97 = scmp.eq.s32.totalorder %s20, 7
      %p98 = por %p96, %p97
      %p99 = scmp.ne.s32.totalorder %s91, %s94
      %p100 = scmp.eq.s32.totalorder %s20, 0
      %p101 = por %p99, %p100
      %p102 = scmp.ne.s32.totalorder %s91, %s94
      %p103 = scmp.eq.s32.totalorder %s25, 7
      %p104 = por %p102, %p103
      %p105 = scmp.ne.s32.totalorder %s94, %s95
      %p106 = scmp.eq.s32.totalorder %s25, 0
      %p107 = por %p105, %p106
      %p108 = scmp.ne.s32.totalorder %s94, %s95
      %p109 = scmp.eq.s32.totalorder %s26, 7
      %p110 = por %p108, %p109
      %p112 = scmp.ne.s32.totalorder %s95, %s111
      %p113 = scmp.eq.s32.totalorder %s26, 0
      %p114 = por %p112, %p113
      %s115 = ssub.s32 %s27, %s39
      %p116 = scmp.eq.s32.totalorder %s115, 0
      %s118 = sadd.s32 %s117, 1
      %s119 = scalar_select %p116, %s117, %s118
      %p122 = pneg %p116
      %p123 = scmp.eq.s32.totalorder %s20, 7
      %p124 = por %p122, %p123
      %p125 = scmp.ne.s32.totalorder %s117, %s120
      %p126 = scmp.eq.s32.totalorder %s20, 0
      %p127 = por %p125, %p126
      %p128 = scmp.ne.s32.totalorder %s117, %s120
      %p129 = scmp.eq.s32.totalorder %s25, 7
      %p130 = por %p128, %p129
      %p131 = scmp.ne.s32.totalorder %s120, %s121
      %p132 = scmp.eq.s32.totalorder %s25, 0
      %p133 = por %p131, %p132
      %p134 = scmp.ne.s32.totalorder %s120, %s121
      %p135 = scmp.eq.s32.totalorder %s26, 7
      %p136 = por %p134, %p135
      %p138 = scmp.ne.s32.totalorder %s121, %s137
      %p139 = scmp.eq.s32.totalorder %s26, 0
      %p140 = por %p138, %p139
      %s141 = ssub.s32 %s27, %s39
      %p142 = scmp.eq.s32.totalorder %s141, 0
      %s144 = sadd.s32 %s143, 1
      %s145 = scalar_select %p142, %s143, %s144
      %p148 = pneg %p142
      %p149 = scmp.eq.s32.totalorder %s20, 7
      %p150 = por %p148, %p149
      %p151 = scmp.ne.s32.totalorder %s143, %s146
      %p152 = scmp.eq.s32.totalorder %s20, 0
      %p153 = por %p151, %p152
      %p154 = scmp.ne.s32.totalorder %s143, %s146
      %p155 = scmp.eq.s32.totalorder %s25, 7
      %p156 = por %p154, %p155
      %p157 = scmp.ne.s32.totalorder %s146, %s147
      %p158 = scmp.eq.s32.totalorder %s25, 0
      %p159 = por %p157, %p158
      %p160 = scmp.ne.s32.totalorder %s146, %s147
      %p161 = scmp.eq.s32.totalorder %s26, 7
      %p162 = por %p160, %p161
      %p164 = scmp.ne.s32.totalorder %s147, %s163
      %p165 = scmp.eq.s32.totalorder %s26, 0
      %p166 = por %p164, %p165
      %s167 = ssub.s32 %s27, %s39
      %p168 = scmp.eq.s32.totalorder %s167, 0
      %s170 = sadd.s32 %s169, 1
      %s171 = scalar_select %p168, %s169, %s170
      %p174 = pneg %p168
      %p175 = scmp.eq.s32.totalorder %s20, 7
      %p176 = por %p174, %p175
      %p177 = scmp.ne.s32.totalorder %s169, %s172
      %p178 = scmp.eq.s32.totalorder %s20, 0
      %p179 = por %p177, %p178
      %p180 = scmp.ne.s32.totalorder %s169, %s172
      %p181 = scmp.eq.s32.totalorder %s25, 7
      %p182 = por %p180, %p181
      %p183 = scmp.ne.s32.totalorder %s172, %s173
      %p184 = scmp.eq.s32.totalorder %s25, 0
      %p185 = por %p183, %p184
      %p186 = scmp.ne.s32.totalorder %s172, %s173
      %p187 = scmp.eq.s32.totalorder %s26, 7
      %p188 = por %p186, %p187
      %p190 = scmp.ne.s32.totalorder %s173, %s189
      %p191 = scmp.eq.s32.totalorder %s26, 0
      %p192 = por %p190, %p191
      %s193 = ssub.s32 %s27, %s39
      %p194 = scmp.eq.s32.totalorder %s193, 0
      %s196 = sadd.s32 %s195, 1
      %s197 = scalar_select %p194, %s195, %s196
      %p200 = pneg %p194
      %p201 = scmp.eq.s32.totalorder %s20, 7
      %p202 = por %p200, %p201
      %p203 = scmp.ne.s32.totalorder %s195, %s198
      %p204 = scmp.eq.s32.totalorder %s20, 0
      %p205 = por %p203, %p204
      %p206 = scmp.ne.s32.totalorder %s195, %s198
      %p207 = scmp.eq.s32.totalorder %s25, 7
      %p208 = por %p206, %p207
      %p209 = scmp.ne.s32.totalorder %s198, %s199
      %p210 = scmp.eq.s32.totalorder %s25, 0
      %p211 = por %p209, %p210
      %p212 = scmp.ne.s32.totalorder %s198, %s199
      %p213 = scmp.eq.s32.totalorder %s26, 7
      %p214 = por %p212, %p213
      %p216 = scmp.ne.s32.totalorder %s199, %s215
      %p217 = scmp.eq.s32.totalorder %s26, 0
      %p218 = por %p216, %p217
      %s219 = ssub.s32 %s28, %s35
      %s220 = ssub.s32 %s27, %s39
      %s221 = sor.u32 %s219, %s220
      %p222 = scmp.eq.s32.totalorder %s221, 0
      %s224 = sadd.s32 %s223, 1
      %s225 = scalar_select %p222, %s223, %s224
      %p228 = pneg %p222
      %p229 = scmp.eq.s32.totalorder %s20, 7
      %p230 = por %p228, %p229
      %p231 = scmp.ne.s32.totalorder %s223, %s226
      %p232 = scmp.eq.s32.totalorder %s20, 0
      %p233 = por %p231, %p232
      %p234 = scmp.ne.s32.totalorder %s223, %s226
      %p235 = scmp.eq.s32.totalorder %s25, 7
      %p236 = por %p234, %p235
      %p237 = scmp.ne.s32.totalorder %s226, %s227
      %p238 = scmp.eq.s32.totalorder %s25, 0
      %p239 = por %p237, %p238
      %p240 = scmp.ne.s32.totalorder %s226, %s227
      %p241 = scmp.eq.s32.totalorder %s26, 7
      %p242 = por %p240, %p241
      %p244 = scmp.ne.s32.totalorder %s227, %s243
      %p245 = scmp.eq.s32.totalorder %s26, 0
      %p246 = por %p244, %p245
      %p247 = scmp.le.s32.totalorder 1, %s20
      %p248 = scmp.lt.s32.totalorder %s20, 9
      %p249 = pnand %p247, %p248
      %p250 = pneg %p249
      // Predicated region
      $region9: #{tpu_custom_call.1} parent=5 // pred_check
        _
      $region10: #{tpu_custom_call.1} parent=5 // pred_check_branch
        %252 = sbr.rel (%p249) target = $region12
      $region11: #{tpu_custom_call.1} parent=5 // pred_region
        %s253 = ssub.s32 %s20, 1
        // Predicated region
        $region13: #{tpu_custom_call.1} parent=11 // pred_check
          %p254 = pneg %p81
        $region14: #{tpu_custom_call.1} parent=11 // pred_check_branch
          %256 = sbr.rel (%p254) target = $region16
        $region15: #{tpu_custom_call.1} parent=11 // pred_region
          %s258 = ssub.s32 256, 256
          %259 = vsyncadd [#allocation6], %s258
          %s260 = sshll.u32 [#allocation5], 4
          %s261 = int_to_ptr.vmem [resolvable:$true] %s260
          %266 = dma.hbm_to_vmem [thread:$0]  %s1, 256, %s261, [#allocation6], 128, 128, 8
        $region16: #{tpu_custom_call.1} parent=11 // pred_fallthru
          _
      $region12: #{tpu_custom_call.1} parent=5 // pred_fallthru
        _
      %p267 = scmp.lt.s32.totalorder %s20, 8
      // Predicated region
      $region17: #{tpu_custom_call.1} parent=5 // pred_check
        %p268 = pneg %p267
      $region18: #{tpu_custom_call.1} parent=5 // pred_check_branch
        %270 = sbr.rel (%p268) target = $region20
      $region19: #{tpu_custom_call.1} parent=5 // pred_region
        // Predicated region
        $region21: #{tpu_custom_call.1} parent=19 // pred_check
          %p271 = pneg %p54
        $region22: #{tpu_custom_call.1} parent=19 // pred_check_branch
          %273 = sbr.rel (%p271) target = $region24
        $region23: #{tpu_custom_call.1} parent=19 // pred_region
          %s274 = sand.u32 %s20, 1
          %s275 = scalar_lea.sflag [#allocation3], %s274
          %s276 = sand.u32 %s44, 1
          %s277 = smul.addr %s276, 16
          %s278 = scalar_lea.vmem [#allocation2], %s277
          %s280 = ssub.s32 256, 256
          %281 = vsyncadd %s275, %s280
          %s282 = smul.addr %s27, 2
          %s283 = smul.addr %s28, 8
          %s284 = sadd.s32 %s282, %s283
          %s285 = smul.addr %s284, 128
          %s286 = scalar_lea.hbm %s0, %s285
          %s287 = sshll.u32 %s278, 4
          %s288 = int_to_ptr.vmem [resolvable:$true] %s287
          %293 = dma.hbm_to_vmem [thread:$0]  %s286, 256, %s288, %s275, 128, 128, 8
        $region24: #{tpu_custom_call.1} parent=19 // pred_fallthru
          _
        // Predicated region
        $region25: #{tpu_custom_call.1} parent=19 // pred_check
          %p294 = pneg %p101
        $region26: #{tpu_custom_call.1} parent=19 // pred_check_branch
          %296 = sbr.rel (%p294) target = $region28
        $region27: #{tpu_custom_call.1} parent=19 // pred_region
          %s297 = sand.u32 %s20, 1
          %s298 = scalar_lea.sflag [#allocation3], %s297
          %s299 = sand.u32 %s91, 1
          %s300 = smul.addr %s299, 192
          %s301 = scalar_lea.vmem [#allocation7], %s300
          %s303 = ssub.s32 3072, 3072
          %304 = vsyncadd %s298, %s303
          %s305 = smul.addr %s27, 48
          %s306 = smul.addr %s305, 64
          %s307 = scalar_lea.hbm %s2, %s306
          %s308 = sshll.u32 %s301, 4
          %s309 = int_to_ptr.vmem [resolvable:$true] %s308
          %314 = dma.hbm_to_vmem [thread:$0]  %s307, 3072, %s309, %s298, 192, 192, 12
        $region28: #{tpu_custom_call.1} parent=19 // pred_fallthru
          _
        // Predicated region
        $region29: #{tpu_custom_call.1} parent=19 // pred_check
          %p315 = pneg %p127
        $region30: #{tpu_custom_call.1} parent=19 // pred_check_branch
          %317 = sbr.rel (%p315) target = $region32
        $region31: #{tpu_custom_call.1} parent=19 // pred_region
          %s318 = sand.u32 %s20, 1
          %s319 = scalar_lea.sflag [#allocation3], %s318
          %s320 = sand.u32 %s117, 1
          %s321 = smul.addr %s320, 64
          %s322 = scalar_lea.vmem [#allocation8], %s321
          %s324 = ssub.s32 1024, 1024
          %325 = vsyncadd %s319, %s324
          %s326 = smul.addr %s27, 16
          %s327 = smul.addr %s326, 64
          %s328 = scalar_lea.hbm %s3, %s327
          %s329 = sshll.u32 %s322, 4
          %s330 = int_to_ptr.vmem [resolvable:$true] %s329
          %335 = dma.hbm_to_vmem [thread:$0]  %s328, 1024, %s330, %s319, 64, 64, 4
        $region32: #{tpu_custom_call.1} parent=19 // pred_fallthru
          _
        // Predicated region
        $region33: #{tpu_custom_call.1} parent=19 // pred_check
          %p336 = pneg %p153
        $region34: #{tpu_custom_call.1} parent=19 // pred_check_branch
          %338 = sbr.rel (%p336) target = $region36
        $region35: #{tpu_custom_call.1} parent=19 // pred_region
          %s339 = sand.u32 %s20, 1
          %s340 = scalar_lea.sflag [#allocation3], %s339
          %s341 = sand.u32 %s143, 1
          %s342 = smul.addr %s341, 128
          %s343 = scalar_lea.vmem [#allocation9], %s342
          %s345 = ssub.s32 2048, 2048
          %346 = vsyncadd %s340, %s345
          %s347 = smul.addr %s27, 32
          %s348 = smul.addr %s347, 64
          %s349 = scalar_lea.hbm %s4, %s348
          %s350 = sshll.u32 %s343, 4
          %s351 = int_to_ptr.vmem [resolvable:$true] %s350
          %356 = dma.hbm_to_vmem [thread:$0]  %s349, 2048, %s351, %s340, 128, 128, 8
        $region36: #{tpu_custom_call.1} parent=19 // pred_fallthru
          _
        // Predicated region
        $region37: #{tpu_custom_call.1} parent=19 // pred_check
          %p357 = pneg %p179
        $region38: #{tpu_custom_call.1} parent=19 // pred_check_branch
          %359 = sbr.rel (%p357) target = $region40
        $region39: #{tpu_custom_call.1} parent=19 // pred_region
          %s360 = sand.u32 %s20, 1
          %s361 = scalar_lea.sflag [#allocation3], %s360
          %s362 = sand.u32 %s169, 1
          %s363 = smul.addr %s362, 128
          %s364 = scalar_lea.vmem [#allocation10], %s363
          %s366 = ssub.s32 2048, 2048
          %367 = vsyncadd %s361, %s366
          %s368 = smul.addr %s27, 32
          %s369 = smul.addr %s368, 64
          %s370 = scalar_lea.hbm %s5, %s369
          %s371 = sshll.u32 %s364, 4
          %s372 = int_to_ptr.vmem [resolvable:$true] %s371
          %377 = dma.hbm_to_vmem [thread:$0]  %s370, 2048, %s372, %s361, 64, 64, 4
        $region40: #{tpu_custom_call.1} parent=19 // pred_fallthru
          _
        // Predicated region
        $region41: #{tpu_custom_call.1} parent=19 // pred_check
          %p378 = pneg %p205
        $region42: #{tpu_custom_call.1} parent=19 // pred_check_branch
          %380 = sbr.rel (%p378) target = $region44
        $region43: #{tpu_custom_call.1} parent=19 // pred_region
          %s381 = sand.u32 %s20, 1
          %s382 = scalar_lea.sflag [#allocation3], %s381
          %s383 = sand.u32 %s195, 1
          %s384 = smul.addr %s383, 24
          %s385 = scalar_lea.vmem [#allocation11], %s384
          %s387 = ssub.s32 384, 384
          %388 = vsyncadd %s382, %s387
          %s389 = smul.addr %s27, 3
          %s390 = smul.addr %s389, 128
          %s391 = scalar_lea.hbm %s6, %s390
          %s393 = sshll.u32 %s385, 4
          %s394 = int_to_ptr.vmem [resolvable:$true] %s393
          %396 = dma.hbm_to_vmem [thread:$0]  %s391, 384, %s394, %s382
        $region44: #{tpu_custom_call.1} parent=19 // pred_fallthru
          _
      $region20: #{tpu_custom_call.1} parent=5 // pred_fallthru
        _
      %p397 = scmp.le.s32.totalorder 1, %s20
      %p398 = scmp.lt.s32.totalorder %s20, 9
      %p399 = pnand %p397, %p398
      %p400 = pneg %p399
      // Predicated region
      $region45: #{tpu_custom_call.1} parent=5 // pred_check
        _
      $region46: #{tpu_custom_call.1} parent=5 // pred_check_branch
        %402 = sbr.rel (%p399) target = $region48
      $region47: #{tpu_custom_call.1} parent=5 // pred_region
        %s403 = ssub.s32 %s20, 1
        %s404 = sand.u32 %s25, 1
        %s405 = scalar_lea.sflag [#allocation3], %s404
        %s406 = sand.u32 %s47, 1
        %s407 = smul.addr %s406, 16
        %s408 = scalar_lea.vmem [#allocation2], %s407
        // Predicated region
        $region49: #{tpu_custom_call.1} parent=47 // pred_check
          %p409 = pneg %p60
        $region50: #{tpu_custom_call.1} parent=47 // pred_check_branch
          %411 = sbr.rel (%p409) target = $region52
        $region51: #{tpu_custom_call.1} parent=47 // pred_region
          %412 = dma.done %s405, 256
        $region52: #{tpu_custom_call.1} parent=47 // pred_fallthru
          _
        // Predicated region
        $region53: #{tpu_custom_call.1} parent=47 // pred_check
          %p413 = pneg %p81
        $region54: #{tpu_custom_call.1} parent=47 // pred_check_branch
          %415 = sbr.rel (%p413) target = $region56
        $region55: #{tpu_custom_call.1} parent=47 // pred_region
          %416 = dma.done [#allocation6], 256
        $region56: #{tpu_custom_call.1} parent=47 // pred_fallthru
          _
        %s417 = sand.u32 %s25, 1
        %s418 = scalar_lea.sflag [#allocation3], %s417
        %s419 = sand.u32 %s94, 1
        %s420 = smul.addr %s419, 192
        %s421 = scalar_lea.vmem [#allocation7], %s420
        // Predicated region
        $region57: #{tpu_custom_call.1} parent=47 // pred_check
          %p422 = pneg %p107
        $region58: #{tpu_custom_call.1} parent=47 // pred_check_branch
          %424 = sbr.rel (%p422) target = $region60
        $region59: #{tpu_custom_call.1} parent=47 // pred_region
          %425 = dma.done %s418, 3072
        $region60: #{tpu_custom_call.1} parent=47 // pred_fallthru
          _
        %s426 = sand.u32 %s25, 1
        %s427 = scalar_lea.sflag [#allocation3], %s426
        %s428 = sand.u32 %s120, 1
        %s429 = smul.addr %s428, 64
        %s430 = scalar_lea.vmem [#allocation8], %s429
        // Predicated region
        $region61: #{tpu_custom_call.1} parent=47 // pred_check
          %p431 = pneg %p133
        $region62: #{tpu_custom_call.1} parent=47 // pred_check_branch
          %433 = sbr.rel (%p431) target = $region64
        $region63: #{tpu_custom_call.1} parent=47 // pred_region
          %434 = dma.done %s427, 1024
        $region64: #{tpu_custom_call.1} parent=47 // pred_fallthru
          _
        %s435 = sand.u32 %s25, 1
        %s436 = scalar_lea.sflag [#allocation3], %s435
        %s437 = sand.u32 %s146, 1
        %s438 = smul.addr %s437, 128
        %s439 = scalar_lea.vmem [#allocation9], %s438
        // Predicated region
        $region65: #{tpu_custom_call.1} parent=47 // pred_check
          %p440 = pneg %p159
        $region66: #{tpu_custom_call.1} parent=47 // pred_check_branch
          %442 = sbr.rel (%p440) target = $region68
        $region67: #{tpu_custom_call.1} parent=47 // pred_region
          %443 = dma.done %s436, 2048
        $region68: #{tpu_custom_call.1} parent=47 // pred_fallthru
          _
        %s444 = sand.u32 %s25, 1
        %s445 = scalar_lea.sflag [#allocation3], %s444
        %s446 = sand.u32 %s172, 1
        %s447 = smul.addr %s446, 128
        %s448 = scalar_lea.vmem [#allocation10], %s447
        // Predicated region
        $region69: #{tpu_custom_call.1} parent=47 // pred_check
          %p449 = pneg %p185
        $region70: #{tpu_custom_call.1} parent=47 // pred_check_branch
          %451 = sbr.rel (%p449) target = $region72
        $region71: #{tpu_custom_call.1} parent=47 // pred_region
          %452 = dma.done %s445, 2048
        $region72: #{tpu_custom_call.1} parent=47 // pred_fallthru
          _
        %s453 = sand.u32 %s25, 1
        %s454 = scalar_lea.sflag [#allocation3], %s453
        %s455 = sand.u32 %s198, 1
        %s456 = smul.addr %s455, 24
        %s457 = scalar_lea.vmem [#allocation11], %s456
        // Predicated region
        $region73: #{tpu_custom_call.1} parent=47 // pred_check
          %p458 = pneg %p211
        $region74: #{tpu_custom_call.1} parent=47 // pred_check_branch
          %460 = sbr.rel (%p458) target = $region76
        $region75: #{tpu_custom_call.1} parent=47 // pred_region
          %461 = dma.done %s454, 384
        $region76: #{tpu_custom_call.1} parent=47 // pred_fallthru
          _
        %s462 = sand.u32 %s25, 1
        %s463 = scalar_lea.sflag [#allocation3], %s462
        %s464 = sand.u32 %s47, 1
        %s465 = smul.addr %s464, 16
        %s466 = scalar_lea.vmem [#allocation2], %s465
        %p467 = pneg %p60
        %p468 = pneg %p57
        %p469 = pneg %p81
        %p470 = pneg %p78
        %s471 = sand.u32 %s25, 1
        %s472 = scalar_lea.sflag [#allocation3], %s471
        %s473 = sand.u32 %s94, 1
        %s474 = smul.addr %s473, 192
        %s475 = scalar_lea.vmem [#allocation7], %s474
        %p476 = pneg %p107
        %p477 = pneg %p104
        %s478 = sand.u32 %s25, 1
        %s479 = scalar_lea.sflag [#allocation3], %s478
        %s480 = sand.u32 %s120, 1
        %s481 = smul.addr %s480, 64
        %s482 = scalar_lea.vmem [#allocation8], %s481
        %p483 = pneg %p133
        %p484 = pneg %p130
        %s485 = sand.u32 %s25, 1
        %s486 = scalar_lea.sflag [#allocation3], %s485
        %s487 = sand.u32 %s146, 1
        %s488 = smul.addr %s487, 128
        %s489 = scalar_lea.vmem [#allocation9], %s488
        %p490 = pneg %p159
        %p491 = pneg %p156
        %s492 = sand.u32 %s25, 1
        %s493 = scalar_lea.sflag [#allocation3], %s492
        %s494 = sand.u32 %s172, 1
        %s495 = smul.addr %s494, 128
        %s496 = scalar_lea.vmem [#allocation10], %s495
        %p497 = pneg %p185
        %p498 = pneg %p182
        %s499 = sand.u32 %s25, 1
        %s500 = scalar_lea.sflag [#allocation3], %s499
        %s501 = sand.u32 %s198, 1
        %s502 = smul.addr %s501, 24
        %s503 = scalar_lea.vmem [#allocation11], %s502
        %p504 = pneg %p211
        %p505 = pneg %p208
        %p506 = pneg %p239
        %p507 = pneg %p236
        %s508 = sand.u32 %s226, 1
        %s509 = scalar_lea.sflag [#allocation4], %s508
        %s510 = sand.u32 %s226, 1
        %s511 = smul.addr %s510, 16
        %s512 = scalar_lea.vmem [#allocation12], %s511
        %v513 = vld [vmem:[%s457] sm:$0xff]
        %v514 = vld [vmem:[%s457 + $0x8] sm:$0xff]
        %v515 = vld [vmem:[%s457 + $0x10] sm:$0xff]
        %v516 = vld [vmem:[%s408] sm:$0xff]
        %v517 = vld [vmem:[%s408 + $0x8] sm:$0xff]
        %v518 = vld [vmem:[#allocation5] sm:$0xff]
        %v519 = vld [vmem:[#allocation5 + $0x8] sm:$0xff]
        %v520 = vadd.f32 %v516, %v518
        %v521 = vadd.f32 %v517, %v519
        %v522 = vld [vmem:[%s421] sm:$0xff]
        %v523 = vld [vmem:[%s421 + $0x8] sm:$0xf]
        %v524 = vld [vmem:[%s421 + $0xc] sm:$0xff]
        %v525 = vld [vmem:[%s421 + $0x14] sm:$0xf]
        %v526 = vld [vmem:[%s421 + $0x18] sm:$0xff]
        %v527 = vld [vmem:[%s421 + $0x20] sm:$0xf]
        %v528 = vld [vmem:[%s421 + $0x24] sm:$0xff]
        %v529 = vld [vmem:[%s421 + $0x2c] sm:$0xf]
        %v530 = vld [vmem:[%s421 + $0x30] sm:$0xff]
        %v531 = vld [vmem:[%s421 + $0x38] sm:$0xf]
        %v532 = vld [vmem:[%s421 + $0x3c] sm:$0xff]
        %v533 = vld [vmem:[%s421 + $0x44] sm:$0xf]
        %v534 = vld [vmem:[%s421 + $0x48] sm:$0xff]
        %v535 = vld [vmem:[%s421 + $0x50] sm:$0xf]
        %v536 = vld [vmem:[%s421 + $0x54] sm:$0xff]
        %v537 = vld [vmem:[%s421 + $0x5c] sm:$0xf]
        %v538 = vld [vmem:[%s421 + $0x60] sm:$0xff]
        %v539 = vld [vmem:[%s421 + $0x68] sm:$0xf]
        %v540 = vld [vmem:[%s421 + $0x6c] sm:$0xff]
        %v541 = vld [vmem:[%s421 + $0x74] sm:$0xf]
        %v542 = vld [vmem:[%s421 + $0x78] sm:$0xff]
        %v543 = vld [vmem:[%s421 + $0x80] sm:$0xf]
        %v544 = vld [vmem:[%s421 + $0x84] sm:$0xff]
        %v545 = vld [vmem:[%s421 + $0x8c] sm:$0xf]
        %v546 = vld [vmem:[%s421 + $0x90] sm:$0xff]
        %v547 = vld [vmem:[%s421 + $0x98] sm:$0xf]
        %v548 = vld [vmem:[%s421 + $0x9c] sm:$0xff]
        %v549 = vld [vmem:[%s421 + $0xa4] sm:$0xf]
        %v550 = vld [vmem:[%s421 + $0xa8] sm:$0xff]
        %v551 = vld [vmem:[%s421 + $0xb0] sm:$0xf]
        %v552 = vld [vmem:[%s421 + $0xb4] sm:$0xff]
        %v553 = vld [vmem:[%s421 + $0xbc] sm:$0xf]
        %v554 = vunpack.c.l.bf16 %v522
        %v555 = vunpack.c.h.bf16 %v522
        %v556 = vunpack.c.l.bf16 %v523
        %v557 = vunpack.c.l.bf16 %v524
        %v558 = vunpack.c.h.bf16 %v524
        %v559 = vunpack.c.l.bf16 %v525
        %v560 = vunpack.c.l.bf16 %v526
        %v561 = vunpack.c.h.bf16 %v526
        %v562 = vunpack.c.l.bf16 %v527
        %v563 = vunpack.c.l.bf16 %v528
        %v564 = vunpack.c.h.bf16 %v528
        %v565 = vunpack.c.l.bf16 %v529
        %v566 = vunpack.c.l.bf16 %v530
        %v567 = vunpack.c.h.bf16 %v530
        %v568 = vunpack.c.l.bf16 %v531
        %v569 = vunpack.c.l.bf16 %v532
        %v570 = vunpack.c.h.bf16 %v532
        %v571 = vunpack.c.l.bf16 %v533
        %v572 = vunpack.c.l.bf16 %v534
        %v573 = vunpack.c.h.bf16 %v534
        %v574 = vunpack.c.l.bf16 %v535
        %v575 = vunpack.c.l.bf16 %v536
        %v576 = vunpack.c.h.bf16 %v536
        %v577 = vunpack.c.l.bf16 %v537
        %v578 = vunpack.c.l.bf16 %v538
        %v579 = vunpack.c.h.bf16 %v538
        %v580 = vunpack.c.l.bf16 %v539
        %v581 = vunpack.c.l.bf16 %v540
        %v582 = vunpack.c.h.bf16 %v540
        %v583 = vunpack.c.l.bf16 %v541
        %v584 = vunpack.c.l.bf16 %v542
        %v585 = vunpack.c.h.bf16 %v542
        %v586 = vunpack.c.l.bf16 %v543
        %v587 = vunpack.c.l.bf16 %v544
        %v588 = vunpack.c.h.bf16 %v544
        %v589 = vunpack.c.l.bf16 %v545
        %v590 = vunpack.c.l.bf16 %v546
        %v591 = vunpack.c.h.bf16 %v546
        %v592 = vunpack.c.l.bf16 %v547
        %v593 = vunpack.c.l.bf16 %v548
        %v594 = vunpack.c.h.bf16 %v548
        %v595 = vunpack.c.l.bf16 %v549
        %v596 = vunpack.c.l.bf16 %v550
        %v597 = vunpack.c.h.bf16 %v550
        %v598 = vunpack.c.l.bf16 %v551
        %v599 = vunpack.c.l.bf16 %v552
        %v600 = vunpack.c.h.bf16 %v552
        %v601 = vunpack.c.l.bf16 %v553
        %v602 = vlaneseq
        %v603 = vshrl.u32 %v602, 7
        %v604 = vsub.s32 0, %v603
        %v605 = vrot.slane %v513, %v604
        %v606 = vlaneseq
        %v607 = vshrl.u32 %v606, 7
        %v608 = vsub.s32 0, %v607
        %v609 = vrot.slane %v514, %v608
        %v610 = vlaneseq
        %v611 = vshrl.u32 %v610, 7
        %v612 = vsub.s32 0, %v611
        %v613 = vrot.slane %v515, %v612
        %614 = vmatprep.subr.mxu0 %v555
        %615 = vmatpush1.msra.mxu0 %v554
        %616 = vmatprep.subr.mxu0 %v558
        %617 = vmatpush1.msra.mxu0 %v557
        %618 = vmatprep.subr.mxu0 %v561
        %619 = vmatpush1.msra.mxu0 %v560
        %620 = vmatprep.subr.mxu0 %v564
        %621 = vmatpush1.msra.mxu0 %v563
        %622 = vmatprep.subr.mxu0 %v567
        %623 = vmatpush1.msra.mxu0 %v566
        %624 = vmatprep.subr.mxu0 %v570
        %625 = vmatpush1.msra.mxu0 %v569
        %626 = vmatprep.subr.mxu0 %v573
        %627 = vmatpush1.msra.mxu0 %v572
        %628 = vmatprep.subr.mxu0 %v576
        %629 = vmatpush1.msra.mxu0 %v575
        %630 = vmatprep.subr.mxu0 %v579
        %631 = vmatpush1.msra.mxu0 %v578
        %632 = vmatprep.subr.mxu0 %v582
        %633 = vmatpush1.msra.mxu0 %v581
        %634 = vmatprep.subr.mxu0 %v585
        %635 = vmatpush1.msra.mxu0 %v584
        %636 = vmatprep.subr.mxu0 %v588
        %637 = vmatpush1.msra.mxu0 %v587
        %638 = vmatprep.subr.mxu0 %v591
        %639 = vmatpush1.msra.mxu0 %v590
        %640 = vmatprep.subr.mxu0 %v594
        %641 = vmatpush1.msra.mxu0 %v593
        %642 = vmatprep.subr.mxu0 %v597
        %643 = vmatpush1.msra.mxu0 %v596
        %644 = vmatprep.subr.mxu0 %v600
        %645 = vmatpush1.msra.mxu0 %v599
        %646 = vmatprep.subr.mxu0 0.0
        %647 = vmatpush1.msra.mxu0 0.0
        %648 = vmatprep.subr.mxu0 0.0
        %649 = vmatpush1.msra.mxu0 0.0
        %650 = vmatprep.subr.mxu0 0.0
        %651 = vmatpush1.msra.mxu0 0.0
        %652 = vmatprep.subr.mxu0 0.0
        %653 = vmatpush1.msra.mxu0 0.0
        %654 = vmatprep.subr.mxu0 0.0
        %655 = vmatpush1.msra.mxu0 0.0
        %656 = vmatprep.subr.mxu0 0.0
        %657 = vmatpush1.msra.mxu0 0.0
        %658 = vmatprep.subr.mxu0 0.0
        %659 = vmatpush1.msra.mxu0 0.0
        %660 = vmatprep.subr.mxu0 0.0
        %661 = vmatpush1.msra.mxu0 0.0
        %662 = vmatprep.subr.mxu0 0.0
        %663 = vmatpush1.msra.mxu0 0.0
        %664 = vmatprep.subr.mxu0 0.0
        %665 = vmatpush1.msra.mxu0 0.0
        %666 = vmatprep.subr.mxu0 0.0
        %667 = vmatpush1.msra.mxu0 0.0
        %668 = vmatprep.subr.mxu0 0.0
        %669 = vmatpush1.msra.mxu0 0.0
        %670 = vmatprep.subr.mxu0 0.0
        %671 = vmatpush1.msra.mxu0 0.0
        %672 = vmatprep.subr.mxu0 0.0
        %673 = vmatpush1.msra.mxu0 0.0
        %674 = vmatprep.subr.mxu0 0.0
        %675 = vmatpush1.msra.mxu0 0.0
        %676 = vmatprep.subr.mxu0 0.0
        %677 = vmatpush1.msra.mxu0 0.0
        %678 = vmatprep.mubr.f32.mxu0 0.0
        %679 = vmatmul.mubr.f32.gmra.mrb[0].mxu0 %v520
        %v680 = vpop.f32.mrb[0].mxu0
        %v681 = vadd.f32 %v605, %v680
        %v682 = vpop.f32.mrb[0].mxu0
        %v683 = vadd.f32 %v609, %v682
        %684 = vmatprep.mubr.f32.mxu0 0.0
        %685 = vmatmul.mubr.f32.gmra.mrb[0].mxu0 %v521
        %v686 = vpop.f32.mrb[0].mxu0
        %v687 = vadd.f32 %v605, %v686
        %v688 = vpop.f32.mrb[0].mxu0
        %v689 = vadd.f32 %v609, %v688
        %690 = vdwg.mxu0
        %691 = vmatprep.subr.mxu0 0.0
        %692 = vmatpush1.msra.mxu0 %v556
        %693 = vmatprep.subr.mxu0 0.0
        %694 = vmatpush1.msra.mxu0 %v559
        %695 = vmatprep.subr.mxu0 0.0
        %696 = vmatpush1.msra.mxu0 %v562
        %697 = vmatprep.subr.mxu0 0.0
        %698 = vmatpush1.msra.mxu0 %v565
        %699 = vmatprep.subr.mxu0 0.0
        %700 = vmatpush1.msra.mxu0 %v568
        %701 = vmatprep.subr.mxu0 0.0
        %702 = vmatpush1.msra.mxu0 %v571
        %703 = vmatprep.subr.mxu0 0.0
        %704 = vmatpush1.msra.mxu0 %v574
        %705 = vmatprep.subr.mxu0 0.0
        %706 = vmatpush1.msra.mxu0 %v577
        %707 = vmatprep.subr.mxu0 0.0
        %708 = vmatpush1.msra.mxu0 %v580
        %709 = vmatprep.subr.mxu0 0.0
        %710 = vmatpush1.msra.mxu0 %v583
        %711 = vmatprep.subr.mxu0 0.0
        %712 = vmatpush1.msra.mxu0 %v586
        %713 = vmatprep.subr.mxu0 0.0
        %714 = vmatpush1.msra.mxu0 %v589
        %715 = vmatprep.subr.mxu0 0.0
        %716 = vmatpush1.msra.mxu0 %v592
        %717 = vmatprep.subr.mxu0 0.0
        %718 = vmatpush1.msra.mxu0 %v595
        %719 = vmatprep.subr.mxu0 0.0
        %720 = vmatpush1.msra.mxu0 %v598
        %721 = vmatprep.subr.mxu0 0.0
        %722 = vmatpush1.msra.mxu0 %v601
        %723 = vmatprep.subr.mxu0 0.0
        %724 = vmatpush1.msra.mxu0 0.0
        %725 = vmatprep.subr.mxu0 0.0
        %726 = vmatpush1.msra.mxu0 0.0
        %727 = vmatprep.subr.mxu0 0.0
        %728 = vmatpush1.msra.mxu0 0.0
        %729 = vmatprep.subr.mxu0 0.0
        %730 = vmatpush1.msra.mxu0 0.0
        %731 = vmatprep.subr.mxu0 0.0
        %732 = vmatpush1.msra.mxu0 0.0
        %733 = vmatprep.subr.mxu0 0.0
        %734 = vmatpush1.msra.mxu0 0.0
        %735 = vmatprep.subr.mxu0 0.0
        %736 = vmatpush1.msra.mxu0 0.0
        %737 = vmatprep.subr.mxu0 0.0
        %738 = vmatpush1.msra.mxu0 0.0
        %739 = vmatprep.subr.mxu0 0.0
        %740 = vmatpush1.msra.mxu0 0.0
        %741 = vmatprep.subr.mxu0 0.0
        %742 = vmatpush1.msra.mxu0 0.0
        %743 = vmatprep.subr.mxu0 0.0
        %744 = vmatpush1.msra.mxu0 0.0
        %745 = vmatprep.subr.mxu0 0.0
        %746 = vmatpush1.msra.mxu0 0.0
        %747 = vmatprep.subr.mxu0 0.0
        %748 = vmatpush1.msra.mxu0 0.0
        %749 = vmatprep.subr.mxu0 0.0
        %750 = vmatpush1.msra.mxu0 0.0
        %751 = vmatprep.subr.mxu0 0.0
        %752 = vmatpush1.msra.mxu0 0.0
        %753 = vmatprep.subr.mxu0 0.0
        %754 = vmatpush1.msra.mxu0 0.0
        %755 = vmatprep.mubr.f32.mxu0 0.0
        %756 = vmatmul.mubr.f32.gmra.mrb[0].mxu0 %v520
        %v757 = vpop.f32.mrb[0].mxu0
        %v758 = vadd.f32 %v613, %v757
        %v759 = vpop.f32.mrb[0].mxu0
        %760 = vmatprep.mubr.f32.mxu0 0.0
        %761 = vmatmul.mubr.f32.gmra.mrb[0].mxu0 %v521
        %v762 = vpop.f32.mrb[0].mxu0
        %v763 = vadd.f32 %v613, %v762
        %v764 = vpop.f32.mrb[0].mxu0
        %765 = vdwg.mxu0
        %vm766 = vcmask 523264
        %v768 = vsel %vm766, %v681, 0
        %v771 = vsel %vm766, %v687, 0
        %v774 = vsel %vm766, %v683, 0
        %v777 = vsel %vm766, %v689, 0
        %779 = vmatprep.subr.mxu0 0.0
        %780 = vmatpush1.xpose.msra.mxu0 %v774
        %781 = vmatprep.subr.mxu0 0.0
        %782 = vmatpush1.xpose.msra.mxu0 %v777
        %783 = vmatprep.subr.mxu0 0.0
        %784 = vmatpush1.xpose.msra.mxu0 0.0
        %785 = vmatprep.subr.mxu0 0.0
        %786 = vmatpush1.xpose.msra.mxu0 0.0
        %787 = vmatprep.subr.mxu0 0.0
        %788 = vmatpush1.xpose.msra.mxu0 0.0
        %789 = vmatprep.subr.mxu0 0.0
        %790 = vmatpush1.xpose.msra.mxu0 0.0
        %791 = vmatprep.subr.mxu0 0.0
        %792 = vmatpush1.xpose.msra.mxu0 0.0
        %793 = vmatprep.subr.mxu0 0.0
        %794 = vmatpush1.xpose.msra.mxu0 0.0
        %795 = vmatprep.subr.mxu0 0.0
        %796 = vmatpush1.xpose.msra.mxu0 0.0
        %797 = vmatprep.subr.mxu0 0.0
        %798 = vmatpush1.xpose.msra.mxu0 0.0
        %799 = vmatprep.subr.mxu0 0.0
        %800 = vmatpush1.xpose.msra.mxu0 0.0
        %801 = vmatprep.subr.mxu0 0.0
        %802 = vmatpush1.xpose.msra.mxu0 0.0
        %803 = vmatprep.subr.mxu0 0.0
        %804 = vmatpush1.xpose.msra.mxu0 0.0
        %805 = vmatprep.subr.mxu0 0.0
        %806 = vmatpush1.xpose.msra.mxu0 0.0
        %807 = vmatprep.subr.mxu0 0.0
        %808 = vmatpush1.xpose.msra.mxu0 0.0
        %809 = vmatprep.subr.mxu0 0.0
        %810 = vmatpush1.xpose.msra.mxu0 0.0
        %811 = vmatprep.subr.mxu0 0.0
        %812 = vmatpush1.xpose.msra.mxu0 0.0
        %813 = vmatprep.subr.mxu0 0.0
        %814 = vmatpush1.xpose.msra.mxu0 0.0
        %815 = vmatprep.subr.mxu0 0.0
        %816 = vmatpush1.xpose.msra.mxu0 0.0
        %817 = vmatprep.subr.mxu0 0.0
        %818 = vmatpush1.xpose.msra.mxu0 0.0
        %819 = vmatprep.subr.mxu0 0.0
        %820 = vmatpush1.xpose.msra.mxu0 0.0
        %821 = vmatprep.subr.mxu0 0.0
        %822 = vmatpush1.xpose.msra.mxu0 0.0
        %823 = vmatprep.subr.mxu0 0.0
        %824 = vmatpush1.xpose.msra.mxu0 0.0
        %825 = vmatprep.subr.mxu0 0.0
        %826 = vmatpush1.xpose.msra.mxu0 0.0
        %827 = vmatprep.subr.mxu0 0.0
        %828 = vmatpush1.xpose.msra.mxu0 0.0
        %829 = vmatprep.subr.mxu0 0.0
        %830 = vmatpush1.xpose.msra.mxu0 0.0
        %831 = vmatprep.subr.mxu0 0.0
        %832 = vmatpush1.xpose.msra.mxu0 0.0
        %833 = vmatprep.subr.mxu0 0.0
        %834 = vmatpush1.xpose.msra.mxu0 0.0
        %835 = vmatprep.subr.mxu0 0.0
        %836 = vmatpush1.xpose.msra.mxu0 0.0
        %837 = vmatprep.subr.mxu0 0.0
        %838 = vmatpush1.xpose.msra.mxu0 0.0
        %839 = vmatprep.subr.mxu0 0.0
        %840 = vmatpush1.xpose.msra.mxu0 0.0
        %841 = vmatprep.subr.mxu0 0.0
        %842 = vmatpush1.xpose.msra.mxu0 0.0
        %843 = vmatprep.mubr.f32.mxu0 0.0
        %844 = vmatmul.mubr.f32.gmra.mrb[0].mxu0 %v768
        %v845 = vpop.f32.mrb[0].mxu0
        %v846 = vadd.f32 0.0, %v845
        %v847 = vpop.f32.mrb[0].mxu0
        %848 = vmatprep.mubr.f32.mxu0 0.0
        %849 = vmatmul.mubr.f32.gmra.mrb[0].mxu0 %v771
        %v850 = vpop.f32.mrb[0].mxu0
        %v851 = vadd.f32 0.0, %v850
        %v852 = vpop.f32.mrb[0].mxu0
        %853 = vdwg.mxu0
        %v854 = vmul.f32 %v846, 0.125
        %v855 = vmul.f32 %v851, 0.125
        %vm856 = vcmask 130048
        %v857 = vsel %vm856, %v854, -inf
        %858 = vmax.xlane.f32.xlu0 %v857
        %v859 = vpop.xlane.xlu0 %858
        %v860 = vsel %vm856, %v855, -inf
        %861 = vmax.xlane.f32.xlu0 %v860
        %v862 = vpop.xlane.xlu0 %861
        %v863 = vsub.f32 %v854, %v859
        %v864 = vsub.f32 %v855, %v862
        %v865 = vmul.f32 %v863, 1.442695
        %v866 = vpow.pop %v865
        %v867 = vmul.f32 %v864, 1.442695
        %v868 = vpow.pop %v867
        %v869 = vsel %vm856, %v866, 0.0
        %870 = vadd.xlane.f32.xlu0 %v869
        %v871 = vpop.xlane.xlu0 %870
        %v872 = vsel %vm856, %v868, 0.0
        %873 = vadd.xlane.f32.xlu0 %v872
        %v874 = vpop.xlane.xlu0 %873
        %v875 = vrcp.pop %v871
        %v876 = vrcp.pop %v874
        %v877 = vmul.f32 %v871, %v875
        %v878 = vmul.f32 %v874, %v876
        %v879 = vsub.f32 2.0, %v877
        %v880 = vsub.f32 2.0, %v878
        %v881 = vmul.f32 %v875, %v879
        %v882 = vmul.f32 %v876, %v880
        %v883 = vmul.f32 %v866, %v881
        %v884 = vmul.f32 %v868, %v882
        %v886 = vsel %vm856, %v883, 0
        %v889 = vsel %vm856, %v884, 0
        %891 = vmatprep.subr.mxu0 0.0
        %892 = vmatpush1.msra.mxu0 %v758
        %893 = vmatprep.subr.mxu0 0.0
        %894 = vmatpush1.msra.mxu0 %v763
        %895 = vmatprep.subr.mxu0 0.0
        %896 = vmatpush1.msra.mxu0 0.0
        %897 = vmatprep.subr.mxu0 0.0
        %898 = vmatpush1.msra.mxu0 0.0
        %899 = vmatprep.subr.mxu0 0.0
        %900 = vmatpush1.msra.mxu0 0.0
        %901 = vmatprep.subr.mxu0 0.0
        %902 = vmatpush1.msra.mxu0 0.0
        %903 = vmatprep.subr.mxu0 0.0
        %904 = vmatpush1.msra.mxu0 0.0
        %905 = vmatprep.subr.mxu0 0.0
        %906 = vmatpush1.msra.mxu0 0.0
        %907 = vmatprep.subr.mxu0 0.0
        %908 = vmatpush1.msra.mxu0 0.0
        %909 = vmatprep.subr.mxu0 0.0
        %910 = vmatpush1.msra.mxu0 0.0
        %911 = vmatprep.subr.mxu0 0.0
        %912 = vmatpush1.msra.mxu0 0.0
        %913 = vmatprep.subr.mxu0 0.0
        %914 = vmatpush1.msra.mxu0 0.0
        %915 = vmatprep.subr.mxu0 0.0
        %916 = vmatpush1.msra.mxu0 0.0
        %917 = vmatprep.subr.mxu0 0.0
        %918 = vmatpush1.msra.mxu0 0.0
        %919 = vmatprep.subr.mxu0 0.0
        %920 = vmatpush1.msra.mxu0 0.0
        %921 = vmatprep.subr.mxu0 0.0
        %922 = vmatpush1.msra.mxu0 0.0
        %923 = vmatprep.subr.mxu0 0.0
        %924 = vmatpush1.msra.mxu0 0.0
        %925 = vmatprep.subr.mxu0 0.0
        %926 = vmatpush1.msra.mxu0 0.0
        %927 = vmatprep.subr.mxu0 0.0
        %928 = vmatpush1.msra.mxu0 0.0
        %929 = vmatprep.subr.mxu0 0.0
        %930 = vmatpush1.msra.mxu0 0.0
        %931 = vmatprep.subr.mxu0 0.0
        %932 = vmatpush1.msra.mxu0 0.0
        %933 = vmatprep.subr.mxu0 0.0
        %934 = vmatpush1.msra.mxu0 0.0
        %935 = vmatprep.subr.mxu0 0.0
        %936 = vmatpush1.msra.mxu0 0.0
        %937 = vmatprep.subr.mxu0 0.0
        %938 = vmatpush1.msra.mxu0 0.0
        %939 = vmatprep.subr.mxu0 0.0
        %940 = vmatpush1.msra.mxu0 0.0
        %941 = vmatprep.subr.mxu0 0.0
        %942 = vmatpush1.msra.mxu0 0.0
        %943 = vmatprep.subr.mxu0 0.0
        %944 = vmatpush1.msra.mxu0 0.0
        %945 = vmatprep.subr.mxu0 0.0
        %946 = vmatpush1.msra.mxu0 0.0
        %947 = vmatprep.subr.mxu0 0.0
        %948 = vmatpush1.msra.mxu0 0.0
        %949 = vmatprep.subr.mxu0 0.0
        %950 = vmatpush1.msra.mxu0 0.0
        %951 = vmatprep.subr.mxu0 0.0
        %952 = vmatpush1.msra.mxu0 0.0
        %953 = vmatprep.subr.mxu0 0.0
        %954 = vmatpush1.msra.mxu0 0.0
        %955 = vmatprep.mubr.f32.mxu0 0.0
        %956 = vmatmul.mubr.f32.gmra.mrb[0].mxu0 %v886
        %v957 = vpop.f32.mrb[0].mxu0
        %v958 = vadd.f32 0.0, %v957
        %v959 = vpop.f32.mrb[0].mxu0
        %960 = vmatprep.mubr.f32.mxu0 0.0
        %961 = vmatmul.mubr.f32.gmra.mrb[0].mxu0 %v889
        %v962 = vpop.f32.mrb[0].mxu0
        %v963 = vadd.f32 0.0, %v962
        %v964 = vpop.f32.mrb[0].mxu0
        %965 = vdwg.mxu0
        %966 = vrot.lane.b32.xlu0 %v681, 64
        %v967 = vpop.permute.xlu0 %966
        %968 = vrot.lane.b32.xlu0 %v687, 64
        %v969 = vpop.permute.xlu0 %968
        %970 = vrot.lane.b32.xlu0 %v683, 64
        %v971 = vpop.permute.xlu0 %970
        %972 = vrot.lane.b32.xlu0 %v689, 64
        %v973 = vpop.permute.xlu0 %972
        %v974 = vsel %vm766, %v967, 0
        %v976 = vsel %vm766, %v969, 0
        %v978 = vsel %vm766, %v971, 0
        %v980 = vsel %vm766, %v973, 0
        %982 = vmatprep.subr.mxu0 0.0
        %983 = vmatpush1.xpose.msra.mxu0 %v978
        %984 = vmatprep.subr.mxu0 0.0
        %985 = vmatpush1.xpose.msra.mxu0 %v980
        %986 = vmatprep.subr.mxu0 0.0
        %987 = vmatpush1.xpose.msra.mxu0 0.0
        %988 = vmatprep.subr.mxu0 0.0
        %989 = vmatpush1.xpose.msra.mxu0 0.0
        %990 = vmatprep.subr.mxu0 0.0
        %991 = vmatpush1.xpose.msra.mxu0 0.0
        %992 = vmatprep.subr.mxu0 0.0
        %993 = vmatpush1.xpose.msra.mxu0 0.0
        %994 = vmatprep.subr.mxu0 0.0
        %995 = vmatpush1.xpose.msra.mxu0 0.0
        %996 = vmatprep.subr.mxu0 0.0
        %997 = vmatpush1.xpose.msra.mxu0 0.0
        %998 = vmatprep.subr.mxu0 0.0
        %999 = vmatpush1.xpose.msra.mxu0 0.0
        %1000 = vmatprep.subr.mxu0 0.0
        %1001 = vmatpush1.xpose.msra.mxu0 0.0
        %1002 = vmatprep.subr.mxu0 0.0
        %1003 = vmatpush1.xpose.msra.mxu0 0.0
        %1004 = vmatprep.subr.mxu0 0.0
        %1005 = vmatpush1.xpose.msra.mxu0 0.0
        %1006 = vmatprep.subr.mxu0 0.0
        %1007 = vmatpush1.xpose.msra.mxu0 0.0
        %1008 = vmatprep.subr.mxu0 0.0
        %1009 = vmatpush1.xpose.msra.mxu0 0.0
        %1010 = vmatprep.subr.mxu0 0.0
        %1011 = vmatpush1.xpose.msra.mxu0 0.0
        %1012 = vmatprep.subr.mxu0 0.0
        %1013 = vmatpush1.xpose.msra.mxu0 0.0
        %1014 = vmatprep.subr.mxu0 0.0
        %1015 = vmatpush1.xpose.msra.mxu0 0.0
        %1016 = vmatprep.subr.mxu0 0.0
        %1017 = vmatpush1.xpose.msra.mxu0 0.0
        %1018 = vmatprep.subr.mxu0 0.0
        %1019 = vmatpush1.xpose.msra.mxu0 0.0
        %1020 = vmatprep.subr.mxu0 0.0
        %1021 = vmatpush1.xpose.msra.mxu0 0.0
        %1022 = vmatprep.subr.mxu0 0.0
        %1023 = vmatpush1.xpose.msra.mxu0 0.0
        %1024 = vmatprep.subr.mxu0 0.0
        %1025 = vmatpush1.xpose.msra.mxu0 0.0
        %1026 = vmatprep.subr.mxu0 0.0
        %1027 = vmatpush1.xpose.msra.mxu0 0.0
        %1028 = vmatprep.subr.mxu0 0.0
        %1029 = vmatpush1.xpose.msra.mxu0 0.0
        %1030 = vmatprep.subr.mxu0 0.0
        %1031 = vmatpush1.xpose.msra.mxu0 0.0
        %1032 = vmatprep.subr.mxu0 0.0
        %1033 = vmatpush1.xpose.msra.mxu0 0.0
        %1034 = vmatprep.subr.mxu0 0.0
        %1035 = vmatpush1.xpose.msra.mxu0 0.0
        %1036 = vmatprep.subr.mxu0 0.0
        %1037 = vmatpush1.xpose.msra.mxu0 0.0
        %1038 = vmatprep.subr.mxu0 0.0
        %1039 = vmatpush1.xpose.msra.mxu0 0.0
        %1040 = vmatprep.subr.mxu0 0.0
        %1041 = vmatpush1.xpose.msra.mxu0 0.0
        %1042 = vmatprep.subr.mxu0 0.0
        %1043 = vmatpush1.xpose.msra.mxu0 0.0
        %1044 = vmatprep.subr.mxu0 0.0
        %1045 = vmatpush1.xpose.msra.mxu0 0.0
        %1046 = vmatprep.mubr.f32.mxu0 0.0
        %1047 = vmatmul.mubr.f32.gmra.mrb[0].mxu0 %v974
        %v1048 = vpop.f32.mrb[0].mxu0
        %v1049 = vadd.f32 0.0, %v1048
        %v1050 = vpop.f32.mrb[0].mxu0
        %1051 = vmatprep.mubr.f32.mxu0 0.0
        %1052 = vmatmul.mubr.f32.gmra.mrb[0].mxu0 %v976
        %v1053 = vpop.f32.mrb[0].mxu0
        %v1054 = vadd.f32 0.0, %v1053
        %v1055 = vpop.f32.mrb[0].mxu0
        %1056 = vdwg.mxu0
        %v1057 = vmul.f32 %v1049, 0.125
        %v1058 = vmul.f32 %v1054, 0.125
        %v1059 = vsel %vm856, %v1057, -inf
        %1060 = vmax.xlane.f32.xlu0 %v1059
        %v1061 = vpop.xlane.xlu0 %1060
        %v1062 = vsel %vm856, %v1058, -inf
        %1063 = vmax.xlane.f32.xlu0 %v1062
        %v1064 = vpop.xlane.xlu0 %1063
        %v1065 = vsub.f32 %v1057, %v1061
        %v1066 = vsub.f32 %v1058, %v1064
        %v1067 = vmul.f32 %v1065, 1.442695
        %v1068 = vpow.pop %v1067
        %v1069 = vmul.f32 %v1066, 1.442695
        %v1070 = vpow.pop %v1069
        %v1071 = vsel %vm856, %v1068, 0.0
        %1072 = vadd.xlane.f32.xlu0 %v1071
        %v1073 = vpop.xlane.xlu0 %1072
        %v1074 = vsel %vm856, %v1070, 0.0
        %1075 = vadd.xlane.f32.xlu0 %v1074
        %v1076 = vpop.xlane.xlu0 %1075
        %v1077 = vrcp.pop %v1073
        %v1078 = vrcp.pop %v1076
        %v1079 = vmul.f32 %v1073, %v1077
        %v1080 = vmul.f32 %v1076, %v1078
        %v1081 = vsub.f32 2.0, %v1079
        %v1082 = vsub.f32 2.0, %v1080
        %v1083 = vmul.f32 %v1077, %v1081
        %v1084 = vmul.f32 %v1078, %v1082
        %v1085 = vmul.f32 %v1068, %v1083
        %v1086 = vmul.f32 %v1070, %v1084
        %1089 = vrot.lane.b32.xlu0 %v758, 64
        %v1090 = vpop.permute.xlu0 %1089
        %1091 = vrot.lane.b32.xlu0 %v763, 64
        %v1092 = vpop.permute.xlu0 %1091
        %v1096 = vsel %vm856, %v1085, 0
        %v1099 = vsel %vm856, %v1086, 0
        %1101 = vmatprep.subr.mxu0 0.0
        %1102 = vmatpush1.msra.mxu0 %v1090
        %1103 = vmatprep.subr.mxu0 0.0
        %1104 = vmatpush1.msra.mxu0 %v1092
        %1105 = vmatprep.subr.mxu0 0.0
        %1106 = vmatpush1.msra.mxu0 0.0
        %1107 = vmatprep.subr.mxu0 0.0
        %1108 = vmatpush1.msra.mxu0 0.0
        %1109 = vmatprep.subr.mxu0 0.0
        %1110 = vmatpush1.msra.mxu0 0.0
        %1111 = vmatprep.subr.mxu0 0.0
        %1112 = vmatpush1.msra.mxu0 0.0
        %1113 = vmatprep.subr.mxu0 0.0
        %1114 = vmatpush1.msra.mxu0 0.0
        %1115 = vmatprep.subr.mxu0 0.0
        %1116 = vmatpush1.msra.mxu0 0.0
        %1117 = vmatprep.subr.mxu0 0.0
        %1118 = vmatpush1.msra.mxu0 0.0
        %1119 = vmatprep.subr.mxu0 0.0
        %1120 = vmatpush1.msra.mxu0 0.0
        %1121 = vmatprep.subr.mxu0 0.0
        %1122 = vmatpush1.msra.mxu0 0.0
        %1123 = vmatprep.subr.mxu0 0.0
        %1124 = vmatpush1.msra.mxu0 0.0
        %1125 = vmatprep.subr.mxu0 0.0
        %1126 = vmatpush1.msra.mxu0 0.0
        %1127 = vmatprep.subr.mxu0 0.0
        %1128 = vmatpush1.msra.mxu0 0.0
        %1129 = vmatprep.subr.mxu0 0.0
        %1130 = vmatpush1.msra.mxu0 0.0
        %1131 = vmatprep.subr.mxu0 0.0
        %1132 = vmatpush1.msra.mxu0 0.0
        %1133 = vmatprep.subr.mxu0 0.0
        %1134 = vmatpush1.msra.mxu0 0.0
        %1135 = vmatprep.subr.mxu0 0.0
        %1136 = vmatpush1.msra.mxu0 0.0
        %1137 = vmatprep.subr.mxu0 0.0
        %1138 = vmatpush1.msra.mxu0 0.0
        %1139 = vmatprep.subr.mxu0 0.0
        %1140 = vmatpush1.msra.mxu0 0.0
        %1141 = vmatprep.subr.mxu0 0.0
        %1142 = vmatpush1.msra.mxu0 0.0
        %1143 = vmatprep.subr.mxu0 0.0
        %1144 = vmatpush1.msra.mxu0 0.0
        %1145 = vmatprep.subr.mxu0 0.0
        %1146 = vmatpush1.msra.mxu0 0.0
        %1147 = vmatprep.subr.mxu0 0.0
        %1148 = vmatpush1.msra.mxu0 0.0
        %1149 = vmatprep.subr.mxu0 0.0
        %1150 = vmatpush1.msra.mxu0 0.0
        %1151 = vmatprep.subr.mxu0 0.0
        %1152 = vmatpush1.msra.mxu0 0.0
        %1153 = vmatprep.subr.mxu0 0.0
        %1154 = vmatpush1.msra.mxu0 0.0
        %1155 = vmatprep.subr.mxu0 0.0
        %1156 = vmatpush1.msra.mxu0 0.0
        %1157 = vmatprep.subr.mxu0 0.0
        %1158 = vmatpush1.msra.mxu0 0.0
        %1159 = vmatprep.subr.mxu0 0.0
        %1160 = vmatpush1.msra.mxu0 0.0
        %1161 = vmatprep.subr.mxu0 0.0
        %1162 = vmatpush1.msra.mxu0 0.0
        %1163 = vmatprep.subr.mxu0 0.0
        %1164 = vmatpush1.msra.mxu0 0.0
        %1165 = vmatprep.mubr.f32.mxu0 0.0
        %1166 = vmatmul.mubr.f32.gmra.mrb[0].mxu0 %v1096
        %v1167 = vpop.f32.mrb[0].mxu0
        %v1168 = vadd.f32 0.0, %v1167
        %v1169 = vpop.f32.mrb[0].mxu0
        %1170 = vmatprep.mubr.f32.mxu0 0.0
        %1171 = vmatmul.mubr.f32.gmra.mrb[0].mxu0 %v1099
        %v1172 = vpop.f32.mrb[0].mxu0
        %v1173 = vadd.f32 0.0, %v1172
        %v1174 = vpop.f32.mrb[0].mxu0
        %1175 = vdwg.mxu0
        %1178 = vrot.lane.b32.xlu0 %v1168, 64
        %v1179 = vpop.permute.xlu0 %1178
        %1180 = vrot.lane.b32.xlu0 %v1173, 64
        %v1181 = vpop.permute.xlu0 %1180
        %v1184 = vsel %vm766, %v958, %v1179
        %v1185 = vsel %vm766, %v963, %v1181
        %v1186 = vld [vmem:[%s430] sm:$0xf]
        %v1187 = vld [vmem:[%s430 + $0x4] sm:$0xf]
        %v1188 = vld [vmem:[%s430 + $0x8] sm:$0xf]
        %v1189 = vld [vmem:[%s430 + $0xc] sm:$0xf]
        %v1190 = vld [vmem:[%s430 + $0x10] sm:$0xf]
        %v1191 = vld [vmem:[%s430 + $0x14] sm:$0xf]
        %v1192 = vld [vmem:[%s430 + $0x18] sm:$0xf]
        %v1193 = vld [vmem:[%s430 + $0x1c] sm:$0xf]
        %v1194 = vld [vmem:[%s430 + $0x20] sm:$0xf]
        %v1195 = vld [vmem:[%s430 + $0x24] sm:$0xf]
        %v1196 = vld [vmem:[%s430 + $0x28] sm:$0xf]
        %v1197 = vld [vmem:[%s430 + $0x2c] sm:$0xf]
        %v1198 = vld [vmem:[%s430 + $0x30] sm:$0xf]
        %v1199 = vld [vmem:[%s430 + $0x34] sm:$0xf]
        %v1200 = vld [vmem:[%s430 + $0x38] sm:$0xf]
        %v1201 = vld [vmem:[%s430 + $0x3c] sm:$0xf]
        %v1202 = vunpack.c.l.bf16 %v1186
        %v1203 = vunpack.c.l.bf16 %v1187
        %v1204 = vunpack.c.l.bf16 %v1188
        %v1205 = vunpack.c.l.bf16 %v1189
        %v1206 = vunpack.c.l.bf16 %v1190
        %v1207 = vunpack.c.l.bf16 %v1191
        %v1208 = vunpack.c.l.bf16 %v1192
        %v1209 = vunpack.c.l.bf16 %v1193
        %v1210 = vunpack.c.l.bf16 %v1194
        %v1211 = vunpack.c.l.bf16 %v1195
        %v1212 = vunpack.c.l.bf16 %v1196
        %v1213 = vunpack.c.l.bf16 %v1197
        %v1214 = vunpack.c.l.bf16 %v1198
        %v1215 = vunpack.c.l.bf16 %v1199
        %v1216 = vunpack.c.l.bf16 %v1200
        %v1217 = vunpack.c.l.bf16 %v1201
        %v1218 = vlaneseq
        %v1219 = vshrl.u32 %v1218, 7
        %v1220 = vsub.s32 1, %v1219
        %v1221 = vrot.slane %v513, %v1220
        %1222 = vmatprep.subr.mxu0 0.0
        %1223 = vmatpush1.msra.mxu0 %v1202
        %1224 = vmatprep.subr.mxu0 0.0
        %1225 = vmatpush1.msra.mxu0 %v1203
        %1226 = vmatprep.subr.mxu0 0.0
        %1227 = vmatpush1.msra.mxu0 %v1204
        %1228 = vmatprep.subr.mxu0 0.0
        %1229 = vmatpush1.msra.mxu0 %v1205
        %1230 = vmatprep.subr.mxu0 0.0
        %1231 = vmatpush1.msra.mxu0 %v1206
        %1232 = vmatprep.subr.mxu0 0.0
        %1233 = vmatpush1.msra.mxu0 %v1207
        %1234 = vmatprep.subr.mxu0 0.0
        %1235 = vmatpush1.msra.mxu0 %v1208
        %1236 = vmatprep.subr.mxu0 0.0
        %1237 = vmatpush1.msra.mxu0 %v1209
        %1238 = vmatprep.subr.mxu0 0.0
        %1239 = vmatpush1.msra.mxu0 %v1210
        %1240 = vmatprep.subr.mxu0 0.0
        %1241 = vmatpush1.msra.mxu0 %v1211
        %1242 = vmatprep.subr.mxu0 0.0
        %1243 = vmatpush1.msra.mxu0 %v1212
        %1244 = vmatprep.subr.mxu0 0.0
        %1245 = vmatpush1.msra.mxu0 %v1213
        %1246 = vmatprep.subr.mxu0 0.0
        %1247 = vmatpush1.msra.mxu0 %v1214
        %1248 = vmatprep.subr.mxu0 0.0
        %1249 = vmatpush1.msra.mxu0 %v1215
        %1250 = vmatprep.subr.mxu0 0.0
        %1251 = vmatpush1.msra.mxu0 %v1216
        %1252 = vmatprep.subr.mxu0 0.0
        %1253 = vmatpush1.msra.mxu0 %v1217
        %1254 = vmatprep.subr.mxu0 0.0
        %1255 = vmatpush1.msra.mxu0 0.0
        %1256 = vmatprep.subr.mxu0 0.0
        %1257 = vmatpush1.msra.mxu0 0.0
        %1258 = vmatprep.subr.mxu0 0.0
        %1259 = vmatpush1.msra.mxu0 0.0
        %1260 = vmatprep.subr.mxu0 0.0
        %1261 = vmatpush1.msra.mxu0 0.0
        %1262 = vmatprep.subr.mxu0 0.0
        %1263 = vmatpush1.msra.mxu0 0.0
        %1264 = vmatprep.subr.mxu0 0.0
        %1265 = vmatpush1.msra.mxu0 0.0
        %1266 = vmatprep.subr.mxu0 0.0
        %1267 = vmatpush1.msra.mxu0 0.0
        %1268 = vmatprep.subr.mxu0 0.0
        %1269 = vmatpush1.msra.mxu0 0.0
        %1270 = vmatprep.subr.mxu0 0.0
        %1271 = vmatpush1.msra.mxu0 0.0
        %1272 = vmatprep.subr.mxu0 0.0
        %1273 = vmatpush1.msra.mxu0 0.0
        %1274 = vmatprep.subr.mxu0 0.0
        %1275 = vmatpush1.msra.mxu0 0.0
        %1276 = vmatprep.subr.mxu0 0.0
        %1277 = vmatpush1.msra.mxu0 0.0
        %1278 = vmatprep.subr.mxu0 0.0
        %1279 = vmatpush1.msra.mxu0 0.0
        %1280 = vmatprep.subr.mxu0 0.0
        %1281 = vmatpush1.msra.mxu0 0.0
        %1282 = vmatprep.subr.mxu0 0.0
        %1283 = vmatpush1.msra.mxu0 0.0
        %1284 = vmatprep.subr.mxu0 0.0
        %1285 = vmatpush1.msra.mxu0 0.0
        %1286 = vmatprep.mubr.f32.mxu0 0.0
        %1287 = vmatmul.mubr.f32.gmra.mrb[0].mxu0 %v1184
        %v1288 = vpop.f32.mrb[0].mxu0
        %v1289 = vadd.f32 %v1221, %v1288
        %v1290 = vpop.f32.mrb[0].mxu0
        %1291 = vmatprep.mubr.f32.mxu0 0.0
        %1292 = vmatmul.mubr.f32.gmra.mrb[0].mxu0 %v1185
        %v1293 = vpop.f32.mrb[0].mxu0
        %v1294 = vadd.f32 %v1221, %v1293
        %v1295 = vpop.f32.mrb[0].mxu0
        %1296 = vdwg.mxu0
        %v1297 = vadd.f32 %v520, %v1289
        %v1298 = vadd.f32 %v521, %v1294
        %1299 = vadd.xlane.f32.xlu0 %v1297
        %v1300 = vpop.xlane.xlu0 %1299
        %1301 = vadd.xlane.f32.xlu0 %v1298
        %v1302 = vpop.xlane.xlu0 %1301
        %v1303 = vrcp.pop 128.0
        %v1304 = vmul.f32 %v1300, %v1303
        %v1305 = vmul.f32 %v1302, %v1303
        %v1306 = vsub.f32 %v1297, %v1304
        %v1307 = vsub.f32 %v1298, %v1305
        %v1308 = vmul.f32 %v1306, %v1306
        %v1309 = vmul.f32 %v1307, %v1307
        %1310 = vadd.xlane.f32.xlu0 %v1308
        %v1311 = vpop.xlane.xlu0 %1310
        %1312 = vadd.xlane.f32.xlu0 %v1309
        %v1313 = vpop.xlane.xlu0 %1312
        %v1314 = vmul.f32 %v1311, %v1303
        %v1315 = vmul.f32 %v1313, %v1303
        %v1316 = vadd.f32 %v1314, 1e-05
        %v1317 = vadd.f32 %v1315, 1e-05
        %v1318 = vrsqrt.pop %v1316
        %v1319 = vrsqrt.pop %v1317
        %v1320 = vmul.f32 %v1306, %v1318
        %v1321 = vmul.f32 %v1307, %v1319
        %v1322 = vlaneseq
        %v1323 = vshrl.u32 %v1322, 7
        %v1324 = vsub.s32 2, %v1323
        %v1325 = vrot.slane %v513, %v1324
        %v1326 = vmul.f32 %v1320, %v1325
        %v1327 = vmul.f32 %v1321, %v1325
        %v1328 = vlaneseq
        %v1329 = vshrl.u32 %v1328, 7
        %v1330 = vsub.s32 3, %v1329
        %v1331 = vrot.slane %v513, %v1330
        %v1332 = vadd.f32 %v1326, %v1331
        %v1333 = vadd.f32 %v1327, %v1331
        %v1334 = vld [vmem:[%s439] sm:$0xff]
        %v1335 = vld [vmem:[%s439 + $0x8] sm:$0xff]
        %v1336 = vld [vmem:[%s439 + $0x10] sm:$0xff]
        %v1337 = vld [vmem:[%s439 + $0x18] sm:$0xff]
        %v1338 = vld [vmem:[%s439 + $0x20] sm:$0xff]
        %v1339 = vld [vmem:[%s439 + $0x28] sm:$0xff]
        %v1340 = vld [vmem:[%s439 + $0x30] sm:$0xff]
        %v1341 = vld [vmem:[%s439 + $0x38] sm:$0xff]
        %v1342 = vld [vmem:[%s439 + $0x40] sm:$0xff]
        %v1343 = vld [vmem:[%s439 + $0x48] sm:$0xff]
        %v1344 = vld [vmem:[%s439 + $0x50] sm:$0xff]
        %v1345 = vld [vmem:[%s439 + $0x58] sm:$0xff]
        %v1346 = vld [vmem:[%s439 + $0x60] sm:$0xff]
        %v1347 = vld [vmem:[%s439 + $0x68] sm:$0xff]
        %v1348 = vld [vmem:[%s439 + $0x70] sm:$0xff]
        %v1349 = vld [vmem:[%s439 + $0x78] sm:$0xff]
        %v1350 = vunpack.c.l.bf16 %v1334
        %v1351 = vunpack.c.h.bf16 %v1334
        %v1352 = vunpack.c.l.bf16 %v1335
        %v1353 = vunpack.c.h.bf16 %v1335
        %v1354 = vunpack.c.l.bf16 %v1336
        %v1355 = vunpack.c.h.bf16 %v1336
        %v1356 = vunpack.c.l.bf16 %v1337
        %v1357 = vunpack.c.h.bf16 %v1337
        %v1358 = vunpack.c.l.bf16 %v1338
        %v1359 = vunpack.c.h.bf16 %v1338
        %v1360 = vunpack.c.l.bf16 %v1339
        %v1361 = vunpack.c.h.bf16 %v1339
        %v1362 = vunpack.c.l.bf16 %v1340
        %v1363 = vunpack.c.h.bf16 %v1340
        %v1364 = vunpack.c.l.bf16 %v1341
        %v1365 = vunpack.c.h.bf16 %v1341
        %v1366 = vunpack.c.l.bf16 %v1342
        %v1367 = vunpack.c.h.bf16 %v1342
        %v1368 = vunpack.c.l.bf16 %v1343
        %v1369 = vunpack.c.h.bf16 %v1343
        %v1370 = vunpack.c.l.bf16 %v1344
        %v1371 = vunpack.c.h.bf16 %v1344
        %v1372 = vunpack.c.l.bf16 %v1345
        %v1373 = vunpack.c.h.bf16 %v1345
        %v1374 = vunpack.c.l.bf16 %v1346
        %v1375 = vunpack.c.h.bf16 %v1346
        %v1376 = vunpack.c.l.bf16 %v1347
        %v1377 = vunpack.c.h.bf16 %v1347
        %v1378 = vunpack.c.l.bf16 %v1348
        %v1379 = vunpack.c.h.bf16 %v1348
        %v1380 = vunpack.c.l.bf16 %v1349
        %v1381 = vunpack.c.h.bf16 %v1349
        %v1382 = vlaneseq
        %v1383 = vshrl.u32 %v1382, 7
        %v1384 = vsub.s32 4, %v1383
        %v1385 = vrot.slane %v513, %v1384
        %v1386 = vlaneseq
        %v1387 = vshrl.u32 %v1386, 7
        %v1388 = vsub.s32 4, %v1387
        %v1389 = vrot.slane %v514, %v1388
        %1390 = vmatprep.subr.mxu0 %v1351
        %1391 = vmatpush1.msra.mxu0 %v1350
        %1392 = vmatprep.subr.mxu0 %v1353
        %1393 = vmatpush1.msra.mxu0 %v1352
        %1394 = vmatprep.subr.mxu0 %v1355
        %1395 = vmatpush1.msra.mxu0 %v1354
        %1396 = vmatprep.subr.mxu0 %v1357
        %1397 = vmatpush1.msra.mxu0 %v1356
        %1398 = vmatprep.subr.mxu0 %v1359
        %1399 = vmatpush1.msra.mxu0 %v1358
        %1400 = vmatprep.subr.mxu0 %v1361
        %1401 = vmatpush1.msra.mxu0 %v1360
        %1402 = vmatprep.subr.mxu0 %v1363
        %1403 = vmatpush1.msra.mxu0 %v1362
        %1404 = vmatprep.subr.mxu0 %v1365
        %1405 = vmatpush1.msra.mxu0 %v1364
        %1406 = vmatprep.subr.mxu0 %v1367
        %1407 = vmatpush1.msra.mxu0 %v1366
        %1408 = vmatprep.subr.mxu0 %v1369
        %1409 = vmatpush1.msra.mxu0 %v1368
        %1410 = vmatprep.subr.mxu0 %v1371
        %1411 = vmatpush1.msra.mxu0 %v1370
        %1412 = vmatprep.subr.mxu0 %v1373
        %1413 = vmatpush1.msra.mxu0 %v1372
        %1414 = vmatprep.subr.mxu0 %v1375
        %1415 = vmatpush1.msra.mxu0 %v1374
        %1416 = vmatprep.subr.mxu0 %v1377
        %1417 = vmatpush1.msra.mxu0 %v1376
        %1418 = vmatprep.subr.mxu0 %v1379
        %1419 = vmatpush1.msra.mxu0 %v1378
        %1420 = vmatprep.subr.mxu0 %v1381
        %1421 = vmatpush1.msra.mxu0 %v1380
        %1422 = vmatprep.subr.mxu0 0.0
        %1423 = vmatpush1.msra.mxu0 0.0
        %1424 = vmatprep.subr.mxu0 0.0
        %1425 = vmatpush1.msra.mxu0 0.0
        %1426 = vmatprep.subr.mxu0 0.0
        %1427 = vmatpush1.msra.mxu0 0.0
        %1428 = vmatprep.subr.mxu0 0.0
        %1429 = vmatpush1.msra.mxu0 0.0
        %1430 = vmatprep.subr.mxu0 0.0
        %1431 = vmatpush1.msra.mxu0 0.0
        %1432 = vmatprep.subr.mxu0 0.0
        %1433 = vmatpush1.msra.mxu0 0.0
        %1434 = vmatprep.subr.mxu0 0.0
        %1435 = vmatpush1.msra.mxu0 0.0
        %1436 = vmatprep.subr.mxu0 0.0
        %1437 = vmatpush1.msra.mxu0 0.0
        %1438 = vmatprep.subr.mxu0 0.0
        %1439 = vmatpush1.msra.mxu0 0.0
        %1440 = vmatprep.subr.mxu0 0.0
        %1441 = vmatpush1.msra.mxu0 0.0
        %1442 = vmatprep.subr.mxu0 0.0
        %1443 = vmatpush1.msra.mxu0 0.0
        %1444 = vmatprep.subr.mxu0 0.0
        %1445 = vmatpush1.msra.mxu0 0.0
        %1446 = vmatprep.subr.mxu0 0.0
        %1447 = vmatpush1.msra.mxu0 0.0
        %1448 = vmatprep.subr.mxu0 0.0
        %1449 = vmatpush1.msra.mxu0 0.0
        %1450 = vmatprep.subr.mxu0 0.0
        %1451 = vmatpush1.msra.mxu0 0.0
        %1452 = vmatprep.subr.mxu0 0.0
        %1453 = vmatpush1.msra.mxu0 0.0
        %1454 = vmatprep.mubr.f32.mxu0 0.0
        %1455 = vmatmul.mubr.f32.gmra.mrb[0].mxu0 %v1332
        %v1456 = vpop.f32.mrb[0].mxu0
        %v1457 = vadd.f32 %v1385, %v1456
        %v1458 = vpop.f32.mrb[0].mxu0
        %v1459 = vadd.f32 %v1389, %v1458
        %1460 = vmatprep.mubr.f32.mxu0 0.0
        %1461 = vmatmul.mubr.f32.gmra.mrb[0].mxu0 %v1333
        %v1462 = vpop.f32.mrb[0].mxu0
        %v1463 = vadd.f32 %v1385, %v1462
        %v1464 = vpop.f32.mrb[0].mxu0
        %v1465 = vadd.f32 %v1389, %v1464
        %1466 = vdwg.mxu0
        %v1467 = vmax.f32 %v1457, 0.0
        %v1468 = vmax.f32 %v1459, 0.0
        %v1469 = vmax.f32 %v1463, 0.0
        %v1470 = vmax.f32 %v1465, 0.0
        %v1471 = vld [vmem:[%s448] sm:$0xf]
        %v1472 = vld [vmem:[%s448 + $0x4] sm:$0xf]
        %v1473 = vld [vmem:[%s448 + $0x8] sm:$0xf]
        %v1474 = vld [vmem:[%s448 + $0xc] sm:$0xf]
        %v1475 = vld [vmem:[%s448 + $0x10] sm:$0xf]
        %v1476 = vld [vmem:[%s448 + $0x14] sm:$0xf]
        %v1477 = vld [vmem:[%s448 + $0x18] sm:$0xf]
        %v1478 = vld [vmem:[%s448 + $0x1c] sm:$0xf]
        %v1479 = vld [vmem:[%s448 + $0x20] sm:$0xf]
        %v1480 = vld [vmem:[%s448 + $0x24] sm:$0xf]
        %v1481 = vld [vmem:[%s448 + $0x28] sm:$0xf]
        %v1482 = vld [vmem:[%s448 + $0x2c] sm:$0xf]
        %v1483 = vld [vmem:[%s448 + $0x30] sm:$0xf]
        %v1484 = vld [vmem:[%s448 + $0x34] sm:$0xf]
        %v1485 = vld [vmem:[%s448 + $0x38] sm:$0xf]
        %v1486 = vld [vmem:[%s448 + $0x3c] sm:$0xf]
        %v1487 = vld [vmem:[%s448 + $0x40] sm:$0xf]
        %v1488 = vld [vmem:[%s448 + $0x44] sm:$0xf]
        %v1489 = vld [vmem:[%s448 + $0x48] sm:$0xf]
        %v1490 = vld [vmem:[%s448 + $0x4c] sm:$0xf]
        %v1491 = vld [vmem:[%s448 + $0x50] sm:$0xf]
        %v1492 = vld [vmem:[%s448 + $0x54] sm:$0xf]
        %v1493 = vld [vmem:[%s448 + $0x58] sm:$0xf]
        %v1494 = vld [vmem:[%s448 + $0x5c] sm:$0xf]
        %v1495 = vld [vmem:[%s448 + $0x60] sm:$0xf]
        %v1496 = vld [vmem:[%s448 + $0x64] sm:$0xf]
        %v1497 = vld [vmem:[%s448 + $0x68] sm:$0xf]
        %v1498 = vld [vmem:[%s448 + $0x6c] sm:$0xf]
        %v1499 = vld [vmem:[%s448 + $0x70] sm:$0xf]
        %v1500 = vld [vmem:[%s448 + $0x74] sm:$0xf]
        %v1501 = vld [vmem:[%s448 + $0x78] sm:$0xf]
        %v1502 = vld [vmem:[%s448 + $0x7c] sm:$0xf]
        %v1503 = vunpack.c.l.bf16 %v1471
        %v1504 = vunpack.c.l.bf16 %v1472
        %v1505 = vunpack.c.l.bf16 %v1473
        %v1506 = vunpack.c.l.bf16 %v1474
        %v1507 = vunpack.c.l.bf16 %v1475
        %v1508 = vunpack.c.l.bf16 %v1476
        %v1509 = vunpack.c.l.bf16 %v1477
        %v1510 = vunpack.c.l.bf16 %v1478
        %v1511 = vunpack.c.l.bf16 %v1479
        %v1512 = vunpack.c.l.bf16 %v1480
        %v1513 = vunpack.c.l.bf16 %v1481
        %v1514 = vunpack.c.l.bf16 %v1482
        %v1515 = vunpack.c.l.bf16 %v1483
        %v1516 = vunpack.c.l.bf16 %v1484
        %v1517 = vunpack.c.l.bf16 %v1485
        %v1518 = vunpack.c.l.bf16 %v1486
        %v1519 = vunpack.c.l.bf16 %v1487
        %v1520 = vunpack.c.l.bf16 %v1488
        %v1521 = vunpack.c.l.bf16 %v1489
        %v1522 = vunpack.c.l.bf16 %v1490
        %v1523 = vunpack.c.l.bf16 %v1491
        %v1524 = vunpack.c.l.bf16 %v1492
        %v1525 = vunpack.c.l.bf16 %v1493
        %v1526 = vunpack.c.l.bf16 %v1494
        %v1527 = vunpack.c.l.bf16 %v1495
        %v1528 = vunpack.c.l.bf16 %v1496
        %v1529 = vunpack.c.l.bf16 %v1497
        %v1530 = vunpack.c.l.bf16 %v1498
        %v1531 = vunpack.c.l.bf16 %v1499
        %v1532 = vunpack.c.l.bf16 %v1500
        %v1533 = vunpack.c.l.bf16 %v1501
        %v1534 = vunpack.c.l.bf16 %v1502
        %v1535 = vlaneseq
        %v1536 = vshrl.u32 %v1535, 7
        %v1537 = vsub.s32 5, %v1536
        %v1538 = vrot.slane %v513, %v1537
        %1539 = vmatprep.subr.mxu0 0.0
        %1540 = vmatpush1.msra.mxu0 %v1503
        %1541 = vmatprep.subr.mxu0 0.0
        %1542 = vmatpush1.msra.mxu0 %v1504
        %1543 = vmatprep.subr.mxu0 0.0
        %1544 = vmatpush1.msra.mxu0 %v1505
        %1545 = vmatprep.subr.mxu0 0.0
        %1546 = vmatpush1.msra.mxu0 %v1506
        %1547 = vmatprep.subr.mxu0 0.0
        %1548 = vmatpush1.msra.mxu0 %v1507
        %1549 = vmatprep.subr.mxu0 0.0
        %1550 = vmatpush1.msra.mxu0 %v1508
        %1551 = vmatprep.subr.mxu0 0.0
        %1552 = vmatpush1.msra.mxu0 %v1509
        %1553 = vmatprep.subr.mxu0 0.0
        %1554 = vmatpush1.msra.mxu0 %v1510
        %1555 = vmatprep.subr.mxu0 0.0
        %1556 = vmatpush1.msra.mxu0 %v1511
        %1557 = vmatprep.subr.mxu0 0.0
        %1558 = vmatpush1.msra.mxu0 %v1512
        %1559 = vmatprep.subr.mxu0 0.0
        %1560 = vmatpush1.msra.mxu0 %v1513
        %1561 = vmatprep.subr.mxu0 0.0
        %1562 = vmatpush1.msra.mxu0 %v1514
        %1563 = vmatprep.subr.mxu0 0.0
        %1564 = vmatpush1.msra.mxu0 %v1515
        %1565 = vmatprep.subr.mxu0 0.0
        %1566 = vmatpush1.msra.mxu0 %v1516
        %1567 = vmatprep.subr.mxu0 0.0
        %1568 = vmatpush1.msra.mxu0 %v1517
        %1569 = vmatprep.subr.mxu0 0.0
        %1570 = vmatpush1.msra.mxu0 %v1518
        %1571 = vmatprep.subr.mxu0 0.0
        %1572 = vmatpush1.msra.mxu0 %v1519
        %1573 = vmatprep.subr.mxu0 0.0
        %1574 = vmatpush1.msra.mxu0 %v1520
        %1575 = vmatprep.subr.mxu0 0.0
        %1576 = vmatpush1.msra.mxu0 %v1521
        %1577 = vmatprep.subr.mxu0 0.0
        %1578 = vmatpush1.msra.mxu0 %v1522
        %1579 = vmatprep.subr.mxu0 0.0
        %1580 = vmatpush1.msra.mxu0 %v1523
        %1581 = vmatprep.subr.mxu0 0.0
        %1582 = vmatpush1.msra.mxu0 %v1524
        %1583 = vmatprep.subr.mxu0 0.0
        %1584 = vmatpush1.msra.mxu0 %v1525
        %1585 = vmatprep.subr.mxu0 0.0
        %1586 = vmatpush1.msra.mxu0 %v1526
        %1587 = vmatprep.subr.mxu0 0.0
        %1588 = vmatpush1.msra.mxu0 %v1527
        %1589 = vmatprep.subr.mxu0 0.0
        %1590 = vmatpush1.msra.mxu0 %v1528
        %1591 = vmatprep.subr.mxu0 0.0
        %1592 = vmatpush1.msra.mxu0 %v1529
        %1593 = vmatprep.subr.mxu0 0.0
        %1594 = vmatpush1.msra.mxu0 %v1530
        %1595 = vmatprep.subr.mxu0 0.0
        %1596 = vmatpush1.msra.mxu0 %v1531
        %1597 = vmatprep.subr.mxu0 0.0
        %1598 = vmatpush1.msra.mxu0 %v1532
        %1599 = vmatprep.subr.mxu0 0.0
        %1600 = vmatpush1.msra.mxu0 %v1533
        %1601 = vmatprep.subr.mxu0 0.0
        %1602 = vmatpush1.msra.mxu0 %v1534
        %1603 = vmatprep.mubr.f32.mxu0 %v1468
        %1604 = vmatmul.mubr.f32.gmra.mrb[0].mxu0 %v1467
        %v1605 = vpop.f32.mrb[0].mxu0
        %v1606 = vadd.f32 %v1538, %v1605
        %v1607 = vpop.f32.mrb[0].mxu0
        %1608 = vmatprep.mubr.f32.mxu0 %v1470
        %1609 = vmatmul.mubr.f32.gmra.mrb[0].mxu0 %v1469
        %v1610 = vpop.f32.mrb[0].mxu0
        %v1611 = vadd.f32 %v1538, %v1610
        %v1612 = vpop.f32.mrb[0].mxu0
        %1613 = vdwg.mxu0
        %v1614 = vadd.f32 %v1332, %v1606
        %v1615 = vadd.f32 %v1333, %v1611
        %1616 = vadd.xlane.f32.xlu0 %v1614
        %v1617 = vpop.xlane.xlu0 %1616
        %1618 = vadd.xlane.f32.xlu0 %v1615
        %v1619 = vpop.xlane.xlu0 %1618
        %v1620 = vmul.f32 %v1617, %v1303
        %v1621 = vmul.f32 %v1619, %v1303
        %v1622 = vsub.f32 %v1614, %v1620
        %v1623 = vsub.f32 %v1615, %v1621
        %v1624 = vmul.f32 %v1622, %v1622
        %v1625 = vmul.f32 %v1623, %v1623
        %1626 = vadd.xlane.f32.xlu0 %v1624
        %v1627 = vpop.xlane.xlu0 %1626
        %1628 = vadd.xlane.f32.xlu0 %v1625
        %v1629 = vpop.xlane.xlu0 %1628
        %v1630 = vmul.f32 %v1627, %v1303
        %v1631 = vmul.f32 %v1629, %v1303
        %v1632 = vadd.f32 %v1630, 1e-05
        %v1633 = vadd.f32 %v1631, 1e-05
        %v1634 = vrsqrt.pop %v1632
        %v1635 = vrsqrt.pop %v1633
        %v1636 = vmul.f32 %v1622, %v1634
        %v1637 = vmul.f32 %v1623, %v1635
        %v1638 = vlaneseq
        %v1639 = vshrl.u32 %v1638, 7
        %v1640 = vsub.s32 6, %v1639
        %v1641 = vrot.slane %v513, %v1640
        %v1642 = vmul.f32 %v1636, %v1641
        %v1643 = vmul.f32 %v1637, %v1641
        %v1644 = vlaneseq
        %v1645 = vshrl.u32 %v1644, 7
        %v1646 = vsub.s32 7, %v1645
        %v1647 = vrot.slane %v513, %v1646
        %v1648 = vadd.f32 %v1642, %v1647
        %v1649 = vadd.f32 %v1643, %v1647
        %1650 = vst [vmem:[%s512] sm:$0xff] %v1648
        %1651 = vst [vmem:[%s512 + $0x8] sm:$0xff] %v1649
        %s1652 = sand.u32 %s226, 1
        %s1653 = scalar_lea.sflag [#allocation4], %s1652
        %s1654 = sand.u32 %s226, 1
        %s1655 = smul.addr %s1654, 16
        %s1656 = scalar_lea.vmem [#allocation12], %s1655
        // Predicated region
        $region77: #{tpu_custom_call.1} parent=47 // pred_check
          %p1657 = pneg %p236
        $region78: #{tpu_custom_call.1} parent=47 // pred_check_branch
          %1659 = sbr.rel (%p1657) target = $region80
        $region79: #{tpu_custom_call.1} parent=47 // pred_region
          %s1661 = ssub.s32 256, 256
          %1662 = vsyncadd %s1653, %s1661
          %s1663 = smul.addr %s29, 2
          %s1664 = smul.addr %s30, 8
          %s1665 = sadd.s32 %s1663, %s1664
          %s1666 = smul.addr %s1665, 128
          %s1667 = scalar_lea.hbm %s7, %s1666
          %s1668 = sshll.u32 %s1656, 4
          %s1669 = int_to_ptr.vmem [resolvable:$true] %s1668
          %1674 = dma.vmem_to_hbm [thread:$0]  %s1669, 256, %s1667, %s1653, 128, 128, 8
        $region80: #{tpu_custom_call.1} parent=47 // pred_fallthru
          _
      $region48: #{tpu_custom_call.1} parent=5 // pred_fallthru
        _
      %p1675 = scmp.le.s32.totalorder 2, %s20
      // Predicated region
      $region81: #{tpu_custom_call.1} parent=5 // pred_check
        %p1676 = pneg %p1675
      $region82: #{tpu_custom_call.1} parent=5 // pred_check_branch
        %1678 = sbr.rel (%p1676) target = $region84
      $region83: #{tpu_custom_call.1} parent=5 // pred_region
        %s1679 = ssub.s32 %s20, 2
        // Predicated region
        $region85: #{tpu_custom_call.1} parent=83 // pred_check
          %p1680 = pneg %p242
        $region86: #{tpu_custom_call.1} parent=83 // pred_check_branch
          %1682 = sbr.rel (%p1680) target = $region88
        $region87: #{tpu_custom_call.1} parent=83 // pred_region
          %s1683 = sand.u32 %s227, 1
          %s1684 = scalar_lea.sflag [#allocation4], %s1683
          %s1685 = sand.u32 %s227, 1
          %s1686 = smul.addr %s1685, 16
          %s1687 = scalar_lea.vmem [#allocation12], %s1686
          %1688 = dma.done %s1684, 256
        $region88: #{tpu_custom_call.1} parent=83 // pred_fallthru
          _
      $region84: #{tpu_custom_call.1} parent=5 // pred_fallthru
        _
    $region6: #{tpu_custom_call.1} parent=1 // loop_footer
      %s24 = sadd.s32 1, %s20
    $region7: #{tpu_custom_call.1} parent=1 // loop_footer_branch
      %19 = sbr.rel target = $region3
    $region8: #{tpu_custom_call.1} parent=1 // loop_exit
      _
    %1689 = vsyncpa [#allocation3], 1
    %s1690 = scalar_lea.sflag [#allocation3], 1
    %1691 = vsyncpa %s1690, 1
    %1692 = vsyncpa [#allocation6], 1
    %1693 = vsyncpa [#allocation4], 1
    %s1694 = scalar_lea.sflag [#allocation4], 1
    %1695 = vsyncpa %s1694, 1

</llo_original>
